<compile_context>
chip_gen: v6e
topology: v6e:2x2x1
jax: 0.10.0
libtpu: 0.0.40
codegen_flags: <defaults>
</compile_context>

<pallas_src>
import numpy as np
import jax
import jax.numpy as jnp
from jax.experimental import pallas as pl
from jax.experimental.pallas import tpu as pltpu

LANE = 128      # output-channel / K padding granularity
TM_MAX = 512    # M tile

D_LIST = (16, 36, 56)   # expert feature widths (net1, net2, net3)
S = 12                  # shrink width
M_LAYERS = 4            # number of 3x3 mapping convs
UPSCALE = 4
OUT_NC = 3
D_MAX = max(D_LIST)


def _round_up(x, m):
    return (x + m - 1) // m * m


def _pad_to(x, shape):
    pads = tuple((0, t - s) for s, t in zip(x.shape, shape))
    if all(p == (0, 0) for p in pads):
        return x
    return jnp.pad(x, pads)


# -----------------------------------------------------------------------------
# Fused Pallas kernel.  Per (expert, M-tile) grid point:
#     O = act(A @ W + bias),  act(z) = where(z >= 0, z, alpha * z)
# alpha is a per-output-channel slope (1 => identity, 0.1 => LeakyReLU,
# learned vector => PReLU).  A/W are bf16, accumulation is f32 on the MXU.
# -----------------------------------------------------------------------------
def _fused_matmul_kernel(a_ref, w_ref, b_ref, al_ref, o_ref):
    z = jnp.dot(a_ref[...], w_ref[...], preferred_element_type=jnp.float32)
    z = z + b_ref[...]
    o_ref[...] = jnp.where(z >= 0.0, z, z * al_ref[...]).astype(o_ref.dtype)


def batched_matmul_bias_act(a, w, bias, alpha, out_dtype=jnp.bfloat16):
    """a: [Ea, M, K] with Ea in {1, E}; w: [E, K, N]; bias/alpha: [E, N].

    Returns [E, M, Np] (Np = N rounded up to 128).  Padded output columns are
    exactly zero because the padded weight/bias columns are zero.
    """
    Ea, M, K = a.shape
    E, K2, N = w.shape
    assert K == K2 and Ea in (1, E)

    Kp = _round_up(K, LANE)
    Np = _round_up(N, LANE)
    TM = min(TM_MAX, _round_up(M, 8))
    Mp = _round_up(M, TM)

    a_p = _pad_to(a, (Ea, Mp, Kp)).astype(jnp.bfloat16)
    w_p = _pad_to(w, (E, Kp, Np)).astype(jnp.bfloat16)
    b_p = _pad_to(bias.reshape(E, 1, N).astype(jnp.float32), (E, 1, Np))
    al_p = _pad_to(alpha.reshape(E, 1, N).astype(jnp.float32), (E, 1, Np))

    # The head layer's im2col is shared by all experts -> Ea == 1.
    a_idx = (lambda e, i: (0, i, 0)) if Ea == 1 else (lambda e, i: (e, i, 0))

    out = pl.pallas_call(
        _fused_matmul_kernel,
        out_shape=jax.ShapeDtypeStruct((E, Mp, Np), out_dtype),
        grid_spec=pltpu.PrefetchScalarGridSpec(
            num_scalar_prefetch=0,
            grid=(E, Mp // TM),
            in_specs=[
                pl.BlockSpec((None, TM, Kp), a_idx),
                pl.BlockSpec((None, Kp, Np), lambda e, i: (e, 0, 0)),
                pl.BlockSpec((None, 1, Np), lambda e, i: (e, 0, 0)),
                pl.BlockSpec((None, 1, Np), lambda e, i: (e, 0, 0)),
            ],
            out_specs=pl.BlockSpec((None, TM, Np), lambda e, i: (e, i, 0)),
        ),
        compiler_params=pltpu.CompilerParams(
            dimension_semantics=("parallel", "parallel")),
    )(a_p, w_p, b_p, al_p)
    return out[:, :M, :]


# -----------------------------------------------------------------------------
# im2col (NHWC) + weight layout helpers.
# -----------------------------------------------------------------------------
def im2col_nhwc(x, k, padding, stride=1):
    """x: [B, H, W, C] -> [B, Ho, Wo, k*k*C]; columns ordered (kh, kw, c)."""
    B, H, W, C = x.shape
    xp = jnp.pad(x, ((0, 0), (padding, padding), (padding, padding), (0, 0)))
    Ho = (H + 2 * padding - k) // stride + 1
    Wo = (W + 2 * padding - k) // stride + 1
    taps = []
    for ki in range(k):
        for kj in range(k):
            taps.append(xp[:, ki:ki + stride * (Ho - 1) + 1:stride,
                           kj:kj + stride * (Wo - 1) + 1:stride, :])
    return jnp.concatenate(taps, axis=-1)


def conv_weight_matrix(w):
    """PyTorch conv weight [Cout, Cin, kh, kw] -> matmul weight [kh*kw*Cin, Cout]."""
    Cout, Cin, kh, kw = w.shape
    return w.transpose(2, 3, 1, 0).reshape(kh * kw * Cin, Cout)


def tail_subpixel_weight(w_t, d_slice, upscale=UPSCALE, ksize=9, pad=3):
    """ConvTranspose2d weight [d, out_nc, 9, 9] (stride 4, pad 3, out_pad 1)
    -> equivalent 3x3 conv matmul weight [9*d_slice, out_nc*16] whose output
    channel (co*16 + ph*4 + pw) is the (ph, pw) sub-pixel phase of channel co.

    Derivation: oh = ih*stride - pad + kh; with oh = 4*b + ph, ih = b + r
    (r in {-1,0,1}) => kh = ph + pad - 4*r (invalid taps are zero).
    """
    d, onc = w_t.shape[0], w_t.shape[1]
    # pad input channels to d_slice and add one zero tap at index `ksize`
    wp = jnp.pad(w_t, ((0, d_slice - d), (0, 0), (0, 1), (0, 1)))
    idx = np.array([[ph + pad - upscale * r for r in (-1, 0, 1)]
                    for ph in range(upscale)])
    idx = np.where((idx >= 0) & (idx < ksize), idx, ksize)       # ksize -> zero tap
    g = wp[:, :, idx[:, :, None, None], idx[None, None, :, :]]  # [ci,co,ph,rh,pw,rw]
    eff = g.transpose(1, 2, 4, 0, 3, 5).reshape(onc * upscale * upscale,
                                                d_slice, 3, 3)   # [cout,ci,3,3]
    return eff.transpose(2, 3, 1, 0).reshape(9 * d_slice, onc * upscale * upscale)


# -----------------------------------------------------------------------------
# Deterministic parameter construction (synthetic, no checkpoint load).
# -----------------------------------------------------------------------------
def _init_conv(key, cout, cin, k, scale=1.0):
    wk, bk = jax.random.split(key)
    fan_in = cin * k * k
    w = jax.random.normal(wk, (cout, cin, k, k), jnp.float32) * (scale / jnp.sqrt(fan_in))
    b = jax.random.normal(bk, (cout,), jnp.float32) * 0.01
    return w, b


def init_classifier(key):
    ks = jax.random.split(key, 6)
    p = {}
    p['c0_w'], p['c0_b'] = _init_conv(ks[0], 128, 3, 4, scale=0.1)
    p['c1_w'], p['c1_b'] = _init_conv(ks[1], 128, 128, 1, scale=0.1)
    p['c2_w'], p['c2_b'] = _init_conv(ks[2], 128, 128, 1, scale=0.1)
    p['c3_w'], p['c3_b'] = _init_conv(ks[3], 128, 128, 1, scale=0.1)
    p['c4_w'], p['c4_b'] = _init_conv(ks[4], 32, 128, 1, scale=0.1)
    wk, bk = jax.random.split(ks[5])
    p['fc_w'] = jax.random.normal(wk, (3, 32), jnp.float32) / jnp.sqrt(32.0)  # [out, in]
    p['fc_b'] = jax.random.normal(bk, (3,), jnp.float32) * 0.01
    return p


def init_fsrcnn(key, in_nc, d, s, m):
    ks = jax.random.split(key, 4 + m)
    p = {}
    p['head_w'], p['head_b'] = _init_conv(ks[0], d, in_nc, 5)
    p['head_a'] = jnp.full((d,), 0.25, jnp.float32)            # PReLU(d)
    p['shrink_w'], p['shrink_b'] = _init_conv(ks[1], s, d, 1)
    p['shrink_a'] = jnp.full((s,), 0.25, jnp.float32)          # PReLU(s)
    p['map_w'], p['map_b'] = [], []
    for i in range(m):
        w, b = _init_conv(ks[2 + i], s, s, 3)
        p['map_w'].append(w)
        p['map_b'].append(b)
    p['map_a'] = jnp.full((s,), 0.25, jnp.float32)             # single PReLU(s) after last map conv
    p['expand_w'], p['expand_b'] = _init_conv(ks[2 + m], d, s, 1)
    p['expand_a'] = jnp.full((d,), 0.25, jnp.float32)          # PReLU(d)
    wk, bk = jax.random.split(ks[3 + m])
    p['tail_w'] = jax.random.normal(wk, (d, in_nc, 9, 9), jnp.float32) / jnp.sqrt(d * 81.0)
    p['tail_b'] = jax.random.normal(bk, (in_nc,), jnp.float32) * 0.01
    return p


def init_params(key):
    kc, k1, k2, k3 = jax.random.split(key, 4)
    return {
        'cls': init_classifier(kc),
        'net1': init_fsrcnn(k1, 3, 16, 12, 4),
        'net2': init_fsrcnn(k2, 3, 36, 12, 4),
        'net3': init_fsrcnn(k3, 3, 56, 12, 4),
    }


# -----------------------------------------------------------------------------
# Forward passes.
# -----------------------------------------------------------------------------
def classifier_forward(x_nhwc, p):
    """Tiny routing network kept in plain XLA (Pallas launch overhead would
    dominate its ~128-row matmuls)."""
    N = x_nhwc.shape[0]
    a = im2col_nhwc(x_nhwc.astype(jnp.float32), 4, padding=0, stride=4)  # [N,8,8,48]
    Ho, Wo = a.shape[1], a.shape[2]
    z = a.reshape(N * Ho * Wo, -1) @ conv_weight_matrix(p['c0_w']) + p['c0_b']
    z = jnp.where(z >= 0, z, 0.1 * z)                                    # LeakyReLU(0.1)
    for k in ('c1', 'c2', 'c3'):
        z = z @ p[k + '_w'].reshape(128, 128).T + p[k + '_b']
        z = jnp.where(z >= 0, z, 0.1 * z)
    z = z @ p['c4_w'].reshape(32, 128).T + p['c4_b']                     # no activation
    z = z.reshape(N, Ho * Wo, 32).mean(axis=1)                           # AvgPool2d(8) -> view(-1,32)
    return z @ p['fc_w'].T + p['fc_b']                                   # [N, 3]


def experts_forward(x_nhwc, nets):
    """Run net1/net2/net3 together; every layer is one batched Pallas call."""
    N, H, W, _ = x_nhwc.shape
    M = N * H * W

    # ---- head: 5x5 pad 2, in_nc -> d_e, PReLU(d) ----------------------------
    a = im2col_nhwc(x_nhwc, 5, padding=2).reshape(1, M, -1)               # K = 75
    w = jnp.stack([_pad_to(conv_weight_matrix(p['head_w']), (75, LANE)) for p in nets])
    b = jnp.stack([_pad_to(p['head_b'], (LANE,)) for p in nets])
    al = jnp.stack([_pad_to(p['head_a'], (LANE,)) for p in nets])
    fea = batched_matmul_bias_act(a, w, b, al)                            # [3, M, 128]

    # ---- shrink: 1x1 d -> s, PReLU(s) ---------------------------------------
    w = jnp.stack([_pad_to(p['shrink_w'].reshape(S, -1).T, (LANE, S)) for p in nets])
    b = jnp.stack([p['shrink_b'] for p in nets])
    al = jnp.stack([p['shrink_a'] for p in nets])
    fea = batched_matmul_bias_act(fea, w, b, al)                          # [3, M, 128]

    # ---- mapping: 4 x (3x3 pad 1, s -> s); PReLU(s) only after the last -----
    for layer in range(M_LAYERS):
        xs = fea[:, :, :S].reshape(3 * N, H, W, S)
        a = im2col_nhwc(xs, 3, padding=1).reshape(3, M, 9 * S)            # K = 108
        w = jnp.stack([conv_weight_matrix(p['map_w'][layer]) for p in nets])
        b = jnp.stack([p['map_b'][layer] for p in nets])
        if layer == M_LAYERS - 1:
            al = jnp.stack([p['map_a'] for p in nets])                    # PReLU(s)
        else:
            al = jnp.ones((3, S), jnp.float32)                            # identity
        fea = batched_matmul_bias_act(a, w, b, al)                        # [3, M, 128]

    # ---- expand: 1x1 s -> d, PReLU(d) ---------------------------------------
    w = jnp.stack([_pad_to(p['expand_w'].reshape(-1, S).T, (LANE, LANE)) for p in nets])
    b = jnp.stack([_pad_to(p['expand_b'], (LANE,)) for p in nets])
    al = jnp.stack([_pad_to(p['expand_a'], (LANE,)) for p in nets])
    fea = batched_matmul_bias_act(fea, w, b, al)                          # [3, M, 128]

    # ---- tail: ConvTranspose2d(d, 3, 9, stride 4, pad 3, out_pad 1) ---------
    # decomposed into a 3x3 conv with 3*16 sub-pixel channels + pixel shuffle.
    xs = fea[:, :, :D_MAX].reshape(3 * N, H, W, D_MAX)
    a = im2col_nhwc(xs, 3, padding=1).reshape(3, M, 9 * D_MAX)            # K = 504
    w = jnp.stack([tail_subpixel_weight(p['tail_w'], D_MAX) for p in nets])
    b = jnp.stack([jnp.repeat(p['tail_b'], UPSCALE * UPSCALE) for p in nets])
    al = jnp.ones((3, OUT_NC * UPSCALE * UPSCALE), jnp.float32)           # no activation
    out = batched_matmul_bias_act(a, w, b, al, out_dtype=jnp.float32)
    out = out[:, :, :OUT_NC * UPSCALE * UPSCALE]
    out = out.reshape(3, N, H, W, OUT_NC, UPSCALE, UPSCALE)
    out = out.transpose(0, 1, 4, 2, 5, 3, 6).reshape(
        3, N, OUT_NC, H * UPSCALE, W * UPSCALE)
    return out                                                            # [3, N, 3, 4H, 4W]


def classsr_forward(x, params):
    """x: [N, 3, 32, 32] NCHW. Returns (gr_x [N, 3, 128, 128], counts [3])."""
    x_nhwc = jnp.transpose(x, (0, 2, 3, 1))

    weights = classifier_forward(x_nhwc, params['cls'])                   # [N, 3]
    idx = jnp.argmax(weights, axis=1)                                     # top-1 routing
    onehot = (idx[:, None] == jnp.arange(3)[None, :]).astype(jnp.float32)

    # TODO(synk): BRT ScatterRouter/GatherRouter produce dynamically-sized
    # per-expert batches; with static TPU shapes we run every expert on the
    # full batch (batched into one pallas_call per layer) and mask-combine,
    # which reproduces gr_x exactly; counts reports per-expert row counts.
    y = experts_forward(x_nhwc, [params['net1'], params['net2'], params['net3']])

    gr = jnp.einsum('ne,enchw->nchw', onehot, y)
    counts = jnp.sum(onehot, axis=0).astype(jnp.int32)
    return gr, counts


if __name__ == "__main__":
    key = jax.random.PRNGKey(0)
    pkey, xkey = jax.random.split(key)
    params = init_params(pkey)

    # Input spatial must be 32x32: Conv(k4,s4) -> 8x8, AvgPool2d(8) -> 1x1 -> view(-1, 32).
    x = jax.random.normal(xkey, (2, 3, 32, 32), jnp.float32)

    fwd = jax.jit(classsr_forward)
    gr_x, counts = fwd(x, params)
    jax.block_until_ready((gr_x, counts))

    assert gr_x.shape == (2, 3, 128, 128), gr_x.shape
    assert gr_x.dtype == jnp.float32
    assert int(jnp.sum(counts)) == x.shape[0]
    print("KERNEL_OK")
</pallas_src>

<mosaic_0001>
module attributes {stable_mosaic.version = 11 : i64} {
  func.func @_fused_matmul_kernel(%arg0: i32, %arg1: i32, %arg2: memref<1x512x128xbf16, #tpu.memory_space<vmem>>, %arg3: memref<1x128x128xbf16, #tpu.memory_space<vmem>>, %arg4: memref<1x1x128xf32, #tpu.memory_space<vmem>>, %arg5: memref<1x1x128xf32, #tpu.memory_space<vmem>>, %arg6: memref<1x512x128xbf16, #tpu.memory_space<vmem>>) attributes {dimension_semantics = [#tpu.dimension_semantics<parallel>, #tpu.dimension_semantics<parallel>], iteration_bounds = array<i64: 3, 4>, scalar_prefetch = 0 : i64, scratch_operands = 0 : i64, tpu.core_type = #tpu.core_type<tc>, window_params = [{transform_indices = @transform_0, window_bounds = array<i64: 1, 512, 128>}, {transform_indices = @transform_1, window_bounds = array<i64: 1, 128, 128>}, {transform_indices = @transform_2, window_bounds = array<i64: 1, 1, 128>}, {transform_indices = @transform_3, window_bounds = array<i64: 1, 1, 128>}, {transform_indices = @transform_4, window_bounds = array<i64: 1, 512, 128>}]} {
    %c0 = arith.constant 0 : index
    %c0_0 = arith.constant 0 : index
    %c0_1 = arith.constant 0 : index
    %0 = vector.load %arg2[%c0, %c0_0, %c0_1] : memref<1x512x128xbf16, #tpu.memory_space<vmem>>, vector<1x512x128xbf16>
    %1 = vector.shape_cast %0 : vector<1x512x128xbf16> to vector<512x128xbf16>
    %c0_2 = arith.constant 0 : index
    %c0_3 = arith.constant 0 : index
    %c0_4 = arith.constant 0 : index
    %2 = vector.load %arg3[%c0_2, %c0_3, %c0_4] : memref<1x128x128xbf16, #tpu.memory_space<vmem>>, vector<1x128x128xbf16>
    %3 = vector.shape_cast %2 : vector<1x128x128xbf16> to vector<128x128xbf16>
    %cst = arith.constant dense<0.000000e+00> : vector<512x128xf32>
    %4 = tpu.matmul %1, %3, %cst {dimension_numbers = #tpu.dot_dimension_numbers<[1], [0], [0], [1], [0, 0, 1, 1], [], []>} : vector<512x128xbf16>, vector<128x128xbf16>, vector<512x128xf32> -> vector<512x128xf32>
    %c0_5 = arith.constant 0 : index
    %c0_6 = arith.constant 0 : index
    %c0_7 = arith.constant 0 : index
    %5 = vector.load %arg4[%c0_5, %c0_6, %c0_7] : memref<1x1x128xf32, #tpu.memory_space<vmem>>, vector<1x1x128xf32>
    %6 = vector.shape_cast %5 : vector<1x1x128xf32> to vector<1x128xf32>
    %7 = vector.broadcast %6 : vector<1x128xf32> to vector<512x128xf32>
    %8 = arith.addf %4, %7 : vector<512x128xf32>
    %cst_8 = arith.constant 0.000000e+00 : f32
    %9 = vector.broadcast %cst_8 : f32 to vector<512x128xf32>
    %10 = arith.cmpf oge, %8, %9 : vector<512x128xf32>
    %c0_9 = arith.constant 0 : index
    %c0_10 = arith.constant 0 : index
    %c0_11 = arith.constant 0 : index
    %11 = vector.load %arg5[%c0_9, %c0_10, %c0_11] : memref<1x1x128xf32, #tpu.memory_space<vmem>>, vector<1x1x128xf32>
    %12 = vector.shape_cast %11 : vector<1x1x128xf32> to vector<1x128xf32>
    %13 = vector.broadcast %12 : vector<1x128xf32> to vector<512x128xf32>
    %14 = arith.mulf %8, %13 : vector<512x128xf32>
    %15 = arith.select %10, %8, %14 : vector<512x128xi1>, vector<512x128xf32>
    %16 = arith.truncf %15 : vector<512x128xf32> to vector<512x128xbf16>
    %c0_12 = arith.constant 0 : index
    %c0_13 = arith.constant 0 : index
    %c0_14 = arith.constant 0 : index
    %17 = vector.load %arg6[%c0_12, %c0_13, %c0_14] : memref<1x512x128xbf16, #tpu.memory_space<vmem>>, vector<1x512x128xbf16>
    %18 = vector.shape_cast %17 : vector<1x512x128xbf16> to vector<512x128xbf16>
    %19 = vector.shape_cast %16 : vector<512x128xbf16> to vector<1x512x128xbf16>
    tpu.vector_store %arg6[%c0_12, %c0_13, %c0_14], %19 {strides = array<i32>} : memref<1x512x128xbf16, #tpu.memory_space<vmem>>, vector<1x512x128xbf16>,
    return
  }
  func.func @transform_0(%arg0: i32, %arg1: i32) -> (i32, i32, i32) {
    %c0_i32 = arith.constant 0 : i32
    %c0_i32_0 = arith.constant 0 : i32
    %c0_i32_1 = arith.constant 0 : i32
    return %c0_i32, %arg1, %c0_i32_0 : i32, i32, i32
  }
  func.func @transform_1(%arg0: i32, %arg1: i32) -> (i32, i32, i32) {
    %c0_i32 = arith.constant 0 : i32
    %c0_i32_0 = arith.constant 0 : i32
    %c0_i32_1 = arith.constant 0 : i32
    return %arg0, %c0_i32, %c0_i32_0 : i32, i32, i32
  }
  func.func @transform_2(%arg0: i32, %arg1: i32) -> (i32, i32, i32) {
    %c0_i32 = arith.constant 0 : i32
    %c0_i32_0 = arith.constant 0 : i32
    %c0_i32_1 = arith.constant 0 : i32
    return %arg0, %c0_i32, %c0_i32_0 : i32, i32, i32
  }
  func.func @transform_3(%arg0: i32, %arg1: i32) -> (i32, i32, i32) {
    %c0_i32 = arith.constant 0 : i32
    %c0_i32_0 = arith.constant 0 : i32
    %c0_i32_1 = arith.constant 0 : i32
    return %arg0, %c0_i32, %c0_i32_0 : i32, i32, i32
  }
  func.func @transform_4(%arg0: i32, %arg1: i32) -> (i32, i32, i32) {
    %c0_i32 = arith.constant 0 : i32
    %c0_i32_0 = arith.constant 0 : i32
    return %arg0, %arg1, %c0_i32 : i32, i32, i32
  }
}

module attributes {stable_mosaic.version = 11 : i64} {
  func.func @_fused_matmul_kernel(%arg0: i32, %arg1: i32, %arg2: memref<1x512x128xbf16, #tpu.memory_space<vmem>>, %arg3: memref<1x128x128xbf16, #tpu.memory_space<vmem>>, %arg4: memref<1x1x128xf32, #tpu.memory_space<vmem>>, %arg5: memref<1x1x128xf32, #tpu.memory_space<vmem>>, %arg6: memref<1x512x128xbf16, #tpu.memory_space<vmem>>) attributes {dimension_semantics = [#tpu.dimension_semantics<parallel>, #tpu.dimension_semantics<parallel>], iteration_bounds = array<i64: 3, 4>, scalar_prefetch = 0 : i64, scratch_operands = 0 : i64, tpu.core_type = #tpu.core_type<tc>, window_params = [{transform_indices = @transform_0, window_bounds = array<i64: 1, 512, 128>}, {transform_indices = @transform_1, window_bounds = array<i64: 1, 128, 128>}, {transform_indices = @transform_2, window_bounds = array<i64: 1, 1, 128>}, {transform_indices = @transform_3, window_bounds = array<i64: 1, 1, 128>}, {transform_indices = @transform_4, window_bounds = array<i64: 1, 512, 128>}]} {
    %c0 = arith.constant 0 : index
    %c0_0 = arith.constant 0 : index
    %c0_1 = arith.constant 0 : index
    %0 = vector.load %arg2[%c0, %c0_0, %c0_1] : memref<1x512x128xbf16, #tpu.memory_space<vmem>>, vector<1x512x128xbf16>
    %1 = vector.shape_cast %0 : vector<1x512x128xbf16> to vector<512x128xbf16>
    %c0_2 = arith.constant 0 : index
    %c0_3 = arith.constant 0 : index
    %c0_4 = arith.constant 0 : index
    %2 = vector.load %arg3[%c0_2, %c0_3, %c0_4] : memref<1x128x128xbf16, #tpu.memory_space<vmem>>, vector<1x128x128xbf16>
    %3 = vector.shape_cast %2 : vector<1x128x128xbf16> to vector<128x128xbf16>
    %cst = arith.constant dense<0.000000e+00> : vector<512x128xf32>
    %4 = tpu.matmul %1, %3, %cst {dimension_numbers = #tpu.dot_dimension_numbers<[1], [0], [0], [1], [0, 0, 1, 1], [], []>} : vector<512x128xbf16>, vector<128x128xbf16>, vector<512x128xf32> -> vector<512x128xf32>
    %c0_5 = arith.constant 0 : index
    %c0_6 = arith.constant 0 : index
    %c0_7 = arith.constant 0 : index
    %5 = vector.load %arg4[%c0_5, %c0_6, %c0_7] : memref<1x1x128xf32, #tpu.memory_space<vmem>>, vector<1x1x128xf32>
    %6 = vector.shape_cast %5 : vector<1x1x128xf32> to vector<1x128xf32>
    %7 = vector.broadcast %6 : vector<1x128xf32> to vector<512x128xf32>
    %8 = arith.addf %4, %7 : vector<512x128xf32>
    %cst_8 = arith.constant 0.000000e+00 : f32
    %9 = vector.broadcast %cst_8 : f32 to vector<512x128xf32>
    %10 = arith.cmpf oge, %8, %9 : vector<512x128xf32>
    %c0_9 = arith.constant 0 : index
    %c0_10 = arith.constant 0 : index
    %c0_11 = arith.constant 0 : index
    %11 = vector.load %arg5[%c0_9, %c0_10, %c0_11] : memref<1x1x128xf32, #tpu.memory_space<vmem>>, vector<1x1x128xf32>
    %12 = vector.shape_cast %11 : vector<1x1x128xf32> to vector<1x128xf32>
    %13 = vector.broadcast %12 : vector<1x128xf32> to vector<512x128xf32>
    %14 = arith.mulf %8, %13 : vector<512x128xf32>
    %15 = arith.select %10, %8, %14 : vector<512x128xi1>, vector<512x128xf32>
    %16 = arith.truncf %15 : vector<512x128xf32> to vector<512x128xbf16>
    %c0_12 = arith.constant 0 : index
    %c0_13 = arith.constant 0 : index
    %c0_14 = arith.constant 0 : index
    %17 = vector.load %arg6[%c0_12, %c0_13, %c0_14] : memref<1x512x128xbf16, #tpu.memory_space<vmem>>, vector<1x512x128xbf16>
    %18 = vector.shape_cast %17 : vector<1x512x128xbf16> to vector<512x128xbf16>
    %19 = vector.shape_cast %16 : vector<512x128xbf16> to vector<1x512x128xbf16>
    tpu.vector_store %arg6[%c0_12, %c0_13, %c0_14], %19 {strides = array<i32>} : memref<1x512x128xbf16, #tpu.memory_space<vmem>>, vector<1x512x128xbf16>,
    return
  }
  func.func @transform_0(%arg0: i32, %arg1: i32) -> (i32, i32, i32) {
    %c0_i32 = arith.constant 0 : i32
    %c0_i32_0 = arith.constant 0 : i32
    return %arg0, %arg1, %c0_i32 : i32, i32, i32
  }
  func.func @transform_1(%arg0: i32, %arg1: i32) -> (i32, i32, i32) {
    %c0_i32 = arith.constant 0 : i32
    %c0_i32_0 = arith.constant 0 : i32
    %c0_i32_1 = arith.constant 0 : i32
    return %arg0, %c0_i32, %c0_i32_0 : i32, i32, i32
  }
  func.func @transform_2(%arg0: i32, %arg1: i32) -> (i32, i32, i32) {
    %c0_i32 = arith.constant 0 : i32
    %c0_i32_0 = arith.constant 0 : i32
    %c0_i32_1 = arith.constant 0 : i32
    return %arg0, %c0_i32, %c0_i32_0 : i32, i32, i32
  }
  func.func @transform_3(%arg0: i32, %arg1: i32) -> (i32, i32, i32) {
    %c0_i32 = arith.constant 0 : i32
    %c0_i32_0 = arith.constant 0 : i32
    %c0_i32_1 = arith.constant 0 : i32
    return %arg0, %c0_i32, %c0_i32_0 : i32, i32, i32
  }
  func.func @transform_4(%arg0: i32, %arg1: i32) -> (i32, i32, i32) {
    %c0_i32 = arith.constant 0 : i32
    %c0_i32_0 = arith.constant 0 : i32
    return %arg0, %arg1, %c0_i32 : i32, i32, i32
  }
}

module attributes {stable_mosaic.version = 11 : i64} {
  func.func @_fused_matmul_kernel(%arg0: i32, %arg1: i32, %arg2: memref<1x512x512xbf16, #tpu.memory_space<vmem>>, %arg3: memref<1x512x128xbf16, #tpu.memory_space<vmem>>, %arg4: memref<1x1x128xf32, #tpu.memory_space<vmem>>, %arg5: memref<1x1x128xf32, #tpu.memory_space<vmem>>, %arg6: memref<1x512x128xf32, #tpu.memory_space<vmem>>) attributes {dimension_semantics = [#tpu.dimension_semantics<parallel>, #tpu.dimension_semantics<parallel>], iteration_bounds = array<i64: 3, 4>, scalar_prefetch = 0 : i64, scratch_operands = 0 : i64, tpu.core_type = #tpu.core_type<tc>, window_params = [{transform_indices = @transform_0, window_bounds = array<i64: 1, 512, 512>}, {transform_indices = @transform_1, window_bounds = array<i64: 1, 512, 128>}, {transform_indices = @transform_2, window_bounds = array<i64: 1, 1, 128>}, {transform_indices = @transform_3, window_bounds = array<i64: 1, 1, 128>}, {transform_indices = @transform_4, window_bounds = array<i64: 1, 512, 128>}]} {
    %c0 = arith.constant 0 : index
    %c0_0 = arith.constant 0 : index
    %c0_1 = arith.constant 0 : index
    %0 = vector.load %arg2[%c0, %c0_0, %c0_1] : memref<1x512x512xbf16, #tpu.memory_space<vmem>>, vector<1x512x512xbf16>
    %1 = vector.shape_cast %0 : vector<1x512x512xbf16> to vector<512x512xbf16>
    %c0_2 = arith.constant 0 : index
    %c0_3 = arith.constant 0 : index
    %c0_4 = arith.constant 0 : index
    %2 = vector.load %arg3[%c0_2, %c0_3, %c0_4] : memref<1x512x128xbf16, #tpu.memory_space<vmem>>, vector<1x512x128xbf16>
    %3 = vector.shape_cast %2 : vector<1x512x128xbf16> to vector<512x128xbf16>
    %cst = arith.constant dense<0.000000e+00> : vector<512x128xf32>
    %4 = tpu.matmul %1, %3, %cst {dimension_numbers = #tpu.dot_dimension_numbers<[1], [0], [0], [1], [0, 0, 1, 1], [], []>} : vector<512x512xbf16>, vector<512x128xbf16>, vector<512x128xf32> -> vector<512x128xf32>
    %c0_5 = arith.constant 0 : index
    %c0_6 = arith.constant 0 : index
    %c0_7 = arith.constant 0 : index
    %5 = vector.load %arg4[%c0_5, %c0_6, %c0_7] : memref<1x1x128xf32, #tpu.memory_space<vmem>>, vector<1x1x128xf32>
    %6 = vector.shape_cast %5 : vector<1x1x128xf32> to vector<1x128xf32>
    %7 = vector.broadcast %6 : vector<1x128xf32> to vector<512x128xf32>
    %8 = arith.addf %4, %7 : vector<512x128xf32>
    %cst_8 = arith.constant 0.000000e+00 : f32
    %9 = vector.broadcast %cst_8 : f32 to vector<512x128xf32>
    %10 = arith.cmpf oge, %8, %9 : vector<512x128xf32>
    %c0_9 = arith.constant 0 : index
    %c0_10 = arith.constant 0 : index
    %c0_11 = arith.constant 0 : index
    %11 = vector.load %arg5[%c0_9, %c0_10, %c0_11] : memref<1x1x128xf32, #tpu.memory_space<vmem>>, vector<1x1x128xf32>
    %12 = vector.shape_cast %11 : vector<1x1x128xf32> to vector<1x128xf32>
    %13 = vector.broadcast %12 : vector<1x128xf32> to vector<512x128xf32>
    %14 = arith.mulf %8, %13 : vector<512x128xf32>
    %15 = arith.select %10, %8, %14 : vector<512x128xi1>, vector<512x128xf32>
    %c0_12 = arith.constant 0 : index
    %c0_13 = arith.constant 0 : index
    %c0_14 = arith.constant 0 : index
    %16 = vector.load %arg6[%c0_12, %c0_13, %c0_14] : memref<1x512x128xf32, #tpu.memory_space<vmem>>, vector<1x512x128xf32>
    %17 = vector.shape_cast %16 : vector<1x512x128xf32> to vector<512x128xf32>
    %18 = vector.shape_cast %15 : vector<512x128xf32> to vector<1x512x128xf32>
    tpu.vector_store %arg6[%c0_12, %c0_13, %c0_14], %18 {strides = array<i32>} : memref<1x512x128xf32, #tpu.memory_space<vmem>>, vector<1x512x128xf32>,
    return
  }
  func.func @transform_0(%arg0: i32, %arg1: i32) -> (i32, i32, i32) {
    %c0_i32 = arith.constant 0 : i32
    %c0_i32_0 = arith.constant 0 : i32
    return %arg0, %arg1, %c0_i32 : i32, i32, i32
  }
  func.func @transform_1(%arg0: i32, %arg1: i32) -> (i32, i32, i32) {
    %c0_i32 = arith.constant 0 : i32
    %c0_i32_0 = arith.constant 0 : i32
    %c0_i32_1 = arith.constant 0 : i32
    return %arg0, %c0_i32, %c0_i32_0 : i32, i32, i32
  }
  func.func @transform_2(%arg0: i32, %arg1: i32) -> (i32, i32, i32) {
    %c0_i32 = arith.constant 0 : i32
    %c0_i32_0 = arith.constant 0 : i32
    %c0_i32_1 = arith.constant 0 : i32
    return %arg0, %c0_i32, %c0_i32_0 : i32, i32, i32
  }
  func.func @transform_3(%arg0: i32, %arg1: i32) -> (i32, i32, i32) {
    %c0_i32 = arith.constant 0 : i32
    %c0_i32_0 = arith.constant 0 : i32
    %c0_i32_1 = arith.constant 0 : i32
    return %arg0, %c0_i32, %c0_i32_0 : i32, i32, i32
  }
  func.func @transform_4(%arg0: i32, %arg1: i32) -> (i32, i32, i32) {
    %c0_i32 = arith.constant 0 : i32
    %c0_i32_0 = arith.constant 0 : i32
    return %arg0, %arg1, %c0_i32 : i32, i32, i32
  }
}

</mosaic_0001>

<llo_original>
// kernel: classsr_forward.8
$region0: #{classsr_forward.8}
  #allocation0 [shape = 'u32[]', space=smem, size = 0x4, offset = 0x4, fixed_abs, tag = 'smem constant byte address 0x4 - core index']
  #allocation1 [shape = 'u32[144,128]{1,0:T(1,128)}', space=vmem, size = 0x12000, scoped, tag = 'internal scratch']
  %s0 = inlined_call_operand.vmem [shape: bf16[1,2048,128], index: 0, kind: input, shape index: {}]
  %s1 = inlined_call_operand.vmem [shape: bf16[3,128,128], index: 1, kind: input, shape index: {}]
  %s2 = inlined_call_operand.vmem [shape: f32[3,1,128], index: 2, kind: input, shape index: {}]
  %s3 = inlined_call_operand.vmem [shape: f32[3,1,128], index: 3, kind: input, shape index: {}]
  %s4 = inlined_call_operand.vmem [shape: bf16[3,2048,128], index: 4, kind: output, shape index: {}]
  %s5 = sld [smem:[#allocation0]]
  $region49: #{classsr_forward.8} parent=0
    _
  %s7 = ssub.s32 1, %s5
  %s8 = scalar_select 0, %s7, %s5
  loop: start=0, step=1, limit=14
  $region2: #{classsr_forward.8} parent=0 // loop_pre_header
    _
  $region3: #{classsr_forward.8} parent=0 // loop_header
    %s10 = sphi 0, %s14
    %p11 = scmp.ge.s32.totalorder %s10, 14
    %s17 = sphi 0, %s29
    %s18 = sphi 0, %s25
    %s19 = sphi 0, %s17
    %s20 = sphi 0, %s18
    %s21 = sphi 0, %s19
    %s22 = sphi 0, %s20
    %s32 = sphi 0, %s34
    %s35 = sphi 0, %s32
    %s36 = sphi 0, %s35
    %s52 = sphi 0, %s36
    %s58 = sphi 0, %s60
    %s61 = sphi 0, %s58
    %s62 = sphi 0, %s61
    %s78 = sphi 0, %s62
    %s84 = sphi 0, %s86
    %s87 = sphi 0, %s84
    %s88 = sphi 0, %s87
    %s104 = sphi 0, %s88
    %s110 = sphi 0, %s112
    %s113 = sphi 0, %s110
    %s114 = sphi 0, %s113
    %s130 = sphi 0, %s114
    %s138 = sphi 0, %s140
    %s141 = sphi 0, %s138
    %s142 = sphi 0, %s141
    %s158 = sphi 0, %s142
  $region4: #{classsr_forward.8} parent=0 // loop_header_branch
    %13 = sbr.rel (%p11) target = $region8
  $region5: #{classsr_forward.8} parent=0 // loop_body
    %s15 = ssub.s32 %s10, 1
    %s16 = ssub.s32 %s10, 2
    %s23 = sadd.s32 1, %s18
    %p24 = scmp.ge.s32.totalorder %s23, 4
    %s25 = scalar_select %p24, 0, %s23
    %s26 = sadd.s32 1, %s17
    %s27 = scalar_select %p24, %s26, %s17
    %p28 = scmp.ge.s32.totalorder %s27, 3
    %s29 = scalar_select %p28, 0, %s27
    %s30 = ssub.s32 %s18, %s25
    %p31 = scmp.eq.s32.totalorder %s30, 0
    %s33 = sadd.s32 %s32, 1
    %s34 = scalar_select %p31, %s32, %s33
    %p37 = pneg %p31
    %p38 = scmp.eq.s32.totalorder %s10, 11
    %p39 = por %p37, %p38
    %p40 = scmp.ne.s32.totalorder %s32, %s35
    %p41 = scmp.eq.s32.totalorder %s10, 0
    %p42 = por %p40, %p41
    %p43 = scmp.ne.s32.totalorder %s32, %s35
    %p44 = scmp.eq.s32.totalorder %s15, 11
    %p45 = por %p43, %p44
    %p46 = scmp.ne.s32.totalorder %s35, %s36
    %p47 = scmp.eq.s32.totalorder %s15, 0
    %p48 = por %p46, %p47
    %p49 = scmp.ne.s32.totalorder %s35, %s36
    %p50 = scmp.eq.s32.totalorder %s16, 11
    %p51 = por %p49, %p50
    %p53 = scmp.ne.s32.totalorder %s36, %s52
    %p54 = scmp.eq.s32.totalorder %s16, 0
    %p55 = por %p53, %p54
    %s56 = ssub.s32 %s17, %s29
    %p57 = scmp.eq.s32.totalorder %s56, 0
    %s59 = sadd.s32 %s58, 1
    %s60 = scalar_select %p57, %s58, %s59
    %p63 = pneg %p57
    %p64 = scmp.eq.s32.totalorder %s10, 11
    %p65 = por %p63, %p64
    %p66 = scmp.ne.s32.totalorder %s58, %s61
    %p67 = scmp.eq.s32.totalorder %s10, 0
    %p68 = por %p66, %p67
    %p69 = scmp.ne.s32.totalorder %s58, %s61
    %p70 = scmp.eq.s32.totalorder %s15, 11
    %p71 = por %p69, %p70
    %p72 = scmp.ne.s32.totalorder %s61, %s62
    %p73 = scmp.eq.s32.totalorder %s15, 0
    %p74 = por %p72, %p73
    %p75 = scmp.ne.s32.totalorder %s61, %s62
    %p76 = scmp.eq.s32.totalorder %s16, 11
    %p77 = por %p75, %p76
    %p79 = scmp.ne.s32.totalorder %s62, %s78
    %p80 = scmp.eq.s32.totalorder %s16, 0
    %p81 = por %p79, %p80
    %s82 = ssub.s32 %s17, %s29
    %p83 = scmp.eq.s32.totalorder %s82, 0
    %s85 = sadd.s32 %s84, 1
    %s86 = scalar_select %p83, %s84, %s85
    %p89 = pneg %p83
    %p90 = scmp.eq.s32.totalorder %s10, 11
    %p91 = por %p89, %p90
    %p92 = scmp.ne.s32.totalorder %s84, %s87
    %p93 = scmp.eq.s32.totalorder %s10, 0
    %p94 = por %p92, %p93
    %p95 = scmp.ne.s32.totalorder %s84, %s87
    %p96 = scmp.eq.s32.totalorder %s15, 11
    %p97 = por %p95, %p96
    %p98 = scmp.ne.s32.totalorder %s87, %s88
    %p99 = scmp.eq.s32.totalorder %s15, 0
    %p100 = por %p98, %p99
    %p101 = scmp.ne.s32.totalorder %s87, %s88
    %p102 = scmp.eq.s32.totalorder %s16, 11
    %p103 = por %p101, %p102
    %p105 = scmp.ne.s32.totalorder %s88, %s104
    %p106 = scmp.eq.s32.totalorder %s16, 0
    %p107 = por %p105, %p106
    %s108 = ssub.s32 %s17, %s29
    %p109 = scmp.eq.s32.totalorder %s108, 0
    %s111 = sadd.s32 %s110, 1
    %s112 = scalar_select %p109, %s110, %s111
    %p115 = pneg %p109
    %p116 = scmp.eq.s32.totalorder %s10, 11
    %p117 = por %p115, %p116
    %p118 = scmp.ne.s32.totalorder %s110, %s113
    %p119 = scmp.eq.s32.totalorder %s10, 0
    %p120 = por %p118, %p119
    %p121 = scmp.ne.s32.totalorder %s110, %s113
    %p122 = scmp.eq.s32.totalorder %s15, 11
    %p123 = por %p121, %p122
    %p124 = scmp.ne.s32.totalorder %s113, %s114
    %p125 = scmp.eq.s32.totalorder %s15, 0
    %p126 = por %p124, %p125
    %p127 = scmp.ne.s32.totalorder %s113, %s114
    %p128 = scmp.eq.s32.totalorder %s16, 11
    %p129 = por %p127, %p128
    %p131 = scmp.ne.s32.totalorder %s114, %s130
    %p132 = scmp.eq.s32.totalorder %s16, 0
    %p133 = por %p131, %p132
    %s134 = ssub.s32 %s17, %s29
    %s135 = ssub.s32 %s18, %s25
    %s136 = sor.u32 %s134, %s135
    %p137 = scmp.eq.s32.totalorder %s136, 0
    %s139 = sadd.s32 %s138, 1
    %s140 = scalar_select %p137, %s138, %s139
    %p143 = pneg %p137
    %p144 = scmp.eq.s32.totalorder %s10, 11
    %p145 = por %p143, %p144
    %p146 = scmp.ne.s32.totalorder %s138, %s141
    %p147 = scmp.eq.s32.totalorder %s10, 0
    %p148 = por %p146, %p147
    %p149 = scmp.ne.s32.totalorder %s138, %s141
    %p150 = scmp.eq.s32.totalorder %s15, 11
    %p151 = por %p149, %p150
    %p152 = scmp.ne.s32.totalorder %s141, %s142
    %p153 = scmp.eq.s32.totalorder %s15, 0
    %p154 = por %p152, %p153
    %p155 = scmp.ne.s32.totalorder %s141, %s142
    %p156 = scmp.eq.s32.totalorder %s16, 11
    %p157 = por %p155, %p156
    %p159 = scmp.ne.s32.totalorder %s142, %s158
    %p160 = scmp.eq.s32.totalorder %s16, 0
    %p161 = por %p159, %p160
    %p162 = scmp.le.s32.totalorder 1, %s10
    %p163 = scmp.lt.s32.totalorder %s10, 13
    %p164 = pnand %p162, %p163
    %p165 = pneg %p164
    // Predicated region
    $region9: #{classsr_forward.8} parent=5 // pred_check
      _
    $region10: #{classsr_forward.8} parent=5 // pred_check_branch
      %167 = sbr.rel (%p164) target = $region12
    $region11: #{classsr_forward.8} parent=5 // pred_region
      %s168 = ssub.s32 %s10, 1
    $region12: #{classsr_forward.8} parent=5 // pred_fallthru
      _
    %p169 = scmp.lt.s32.totalorder %s10, 12
    // Predicated region
    $region13: #{classsr_forward.8} parent=5 // pred_check
      %p170 = pneg %p169
    $region14: #{classsr_forward.8} parent=5 // pred_check_branch
      %172 = sbr.rel (%p170) target = $region16
    $region15: #{classsr_forward.8} parent=5 // pred_region
      // Predicated region
      $region17: #{classsr_forward.8} parent=15 // pred_check
        %p173 = pneg %p42
      $region18: #{classsr_forward.8} parent=15 // pred_check_branch
        %175 = sbr.rel (%p173) target = $region20
      $region19: #{classsr_forward.8} parent=15 // pred_region
        %s176 = smul.u32 64, %s18
        %p177 = scmp.lt.s32.totalorder %s176, 255
        %s178 = scalar_select %p177, %s176, 255
        %s179 = smul.addr %s178, 4
        %s180 = scalar_lea.vmem %s0, %s179
        %s181 = smul.u32 64, %s18
      $region20: #{classsr_forward.8} parent=15 // pred_fallthru
        _
      // Predicated region
      $region21: #{classsr_forward.8} parent=15 // pred_check
        %p182 = pneg %p68
      $region22: #{classsr_forward.8} parent=15 // pred_check_branch
        %184 = sbr.rel (%p182) target = $region24
      $region23: #{classsr_forward.8} parent=15 // pred_region
        %p185 = scmp.lt.s32.totalorder %s17, 2
        %s186 = scalar_select %p185, %s17, 2
        %s187 = smul.addr %s186, 16
        %s188 = smul.addr %s187, 4
        %s189 = scalar_lea.vmem %s1, %s188
      $region24: #{classsr_forward.8} parent=15 // pred_fallthru
        _
      // Predicated region
      $region25: #{classsr_forward.8} parent=15 // pred_check
        %p190 = pneg %p94
      $region26: #{classsr_forward.8} parent=15 // pred_check_branch
        %192 = sbr.rel (%p190) target = $region28
      $region27: #{classsr_forward.8} parent=15 // pred_region
        %p193 = scmp.lt.s32.totalorder %s17, 2
        %s194 = scalar_select %p193, %s17, 2
        %s195 = scalar_lea.vmem %s2, %s194
      $region28: #{classsr_forward.8} parent=15 // pred_fallthru
        _
      // Predicated region
      $region29: #{classsr_forward.8} parent=15 // pred_check
        %p196 = pneg %p120
      $region30: #{classsr_forward.8} parent=15 // pred_check_branch
        %198 = sbr.rel (%p196) target = $region32
      $region31: #{classsr_forward.8} parent=15 // pred_region
        %p199 = scmp.lt.s32.totalorder %s17, 2
        %s200 = scalar_select %p199, %s17, 2
        %s201 = scalar_lea.vmem %s3, %s200
      $region32: #{classsr_forward.8} parent=15 // pred_fallthru
        _
    $region16: #{classsr_forward.8} parent=5 // pred_fallthru
      _
    %p202 = scmp.le.s32.totalorder 1, %s10
    %p203 = scmp.lt.s32.totalorder %s10, 13
    %p204 = pnand %p202, %p203
    %p205 = pneg %p204
    // Predicated region
    $region33: #{classsr_forward.8} parent=5 // pred_check
      _
    $region34: #{classsr_forward.8} parent=5 // pred_check_branch
      %207 = sbr.rel (%p204) target = $region36
    $region35: #{classsr_forward.8} parent=5 // pred_region
      %s208 = ssub.s32 %s10, 1
      %s209 = smul.u32 64, %s20
      %p210 = scmp.lt.s32.totalorder %s209, 255
      %s211 = scalar_select %p210, %s209, 255
      %s212 = smul.addr %s211, 4
      %s213 = scalar_lea.vmem %s0, %s212
      %p214 = pneg %p48
      %p215 = pneg %p45
      %p216 = scmp.lt.s32.totalorder %s19, 2
      %s217 = scalar_select %p216, %s19, 2
      %s218 = smul.addr %s217, 16
      %s219 = smul.addr %s218, 4
      %s220 = scalar_lea.vmem %s1, %s219
      %p221 = pneg %p74
      %p222 = pneg %p71
      %p223 = scmp.lt.s32.totalorder %s19, 2
      %s224 = scalar_select %p223, %s19, 2
      %s225 = scalar_lea.vmem %s2, %s224
      %p226 = pneg %p100
      %p227 = pneg %p97
      %p228 = scmp.lt.s32.totalorder %s19, 2
      %s229 = scalar_select %p228, %s19, 2
      %s230 = scalar_lea.vmem %s3, %s229
      %p231 = pneg %p126
      %p232 = pneg %p123
      %p233 = pneg %p154
      %p234 = pneg %p151
      %s235 = smul.u32 64, %s20
      %p236 = scmp.lt.s32.totalorder %s19, 2
      %s237 = scalar_select %p236, %s19, 2
      %p238 = scmp.lt.s32.totalorder %s235, 255
      %s239 = scalar_select %p238, %s235, 255
      %s240 = smul.addr %s237, 256
      %s241 = sadd.s32 %s239, %s240
      %s242 = smul.addr %s241, 4
      %s243 = scalar_lea.vmem %s4, %s242
      %s244 = smul.u32 64, %s20
      %p245 = scmp.lt.s32.totalorder %s244, 255
      %s246 = scalar_select %p245, %s244, 255
      %s247 = smul.addr %s246, 4
      %s248 = scalar_lea.vmem %s0, %s247
      %s249 = smul.u32 64, %s20
      %p250 = scmp.lt.s32.totalorder %s19, 2
      %s251 = scalar_select %p250, %s19, 2
      %s252 = smul.addr %s251, 16
      %s253 = smul.addr %s252, 4
      %s254 = scalar_lea.vmem %s1, %s253
      %p255 = scmp.lt.s32.totalorder %s19, 2
      %s256 = scalar_select %p255, %s19, 2
      %s257 = scalar_lea.vmem %s2, %s256
      %p258 = scmp.lt.s32.totalorder %s19, 2
      %s259 = scalar_select %p258, %s19, 2
      %s260 = scalar_lea.vmem %s3, %s259
      %s261 = smul.u32 64, %s20
      %p262 = scmp.lt.s32.totalorder %s19, 2
      %s263 = scalar_select %p262, %s19, 2
      %p264 = scmp.lt.s32.totalorder %s261, 255
      %s265 = scalar_select %p264, %s261, 255
      %s266 = smul.addr %s263, 256
      %s267 = sadd.s32 %s265, %s266
      %s268 = smul.addr %s267, 4
      %s269 = scalar_lea.vmem %s4, %s268
      %s270 = smul.u32 64, %s20
      %v272 = vld [vmem:[%s248] sm:$0xf]
      %v273 = vld [vmem:[%s248 + $0x4] sm:$0xf]
      %v274 = vld [vmem:[%s248 + $0x8] sm:$0xf]
      %v275 = vld [vmem:[%s248 + $0xc] sm:$0xf]
      %v276 = vld [vmem:[%s248 + $0x10] sm:$0xf]
      %v277 = vld [vmem:[%s248 + $0x14] sm:$0xf]
      %v278 = vld [vmem:[%s248 + $0x18] sm:$0xf]
      %v279 = vld [vmem:[%s248 + $0x1c] sm:$0xf]
      %v280 = vld [vmem:[%s248 + $0x20] sm:$0xf]
      %v281 = vld [vmem:[%s248 + $0x24] sm:$0xf]
      %v282 = vld [vmem:[%s248 + $0x28] sm:$0xf]
      %v283 = vld [vmem:[%s248 + $0x2c] sm:$0xf]
      %v284 = vld [vmem:[%s248 + $0x30] sm:$0xf]
      %v285 = vld [vmem:[%s248 + $0x34] sm:$0xf]
      %v286 = vld [vmem:[%s248 + $0x38] sm:$0xf]
      %v287 = vld [vmem:[%s248 + $0x3c] sm:$0xf]
      %v288 = vld [vmem:[%s248 + $0x40] sm:$0xf]
      %v289 = vld [vmem:[%s248 + $0x44] sm:$0xf]
      %v290 = vld [vmem:[%s248 + $0x48] sm:$0xf]
      %v291 = vld [vmem:[%s248 + $0x4c] sm:$0xf]
      %v292 = vld [vmem:[%s248 + $0x50] sm:$0xf]
      %v293 = vld [vmem:[%s248 + $0x54] sm:$0xf]
      %v294 = vld [vmem:[%s248 + $0x58] sm:$0xf]
      %v295 = vld [vmem:[%s248 + $0x5c] sm:$0xf]
      %v296 = vld [vmem:[%s248 + $0x60] sm:$0xf]
      %v297 = vld [vmem:[%s248 + $0x64] sm:$0xf]
      %v298 = vld [vmem:[%s248 + $0x68] sm:$0xf]
      %v299 = vld [vmem:[%s248 + $0x6c] sm:$0xf]
      %v300 = vld [vmem:[%s248 + $0x70] sm:$0xf]
      %v301 = vld [vmem:[%s248 + $0x74] sm:$0xf]
      %v302 = vld [vmem:[%s248 + $0x78] sm:$0xf]
      %v303 = vld [vmem:[%s248 + $0x7c] sm:$0xf]
      %v304 = vld [vmem:[%s248 + $0x80] sm:$0xf]
      %v305 = vld [vmem:[%s248 + $0x84] sm:$0xf]
      %v306 = vld [vmem:[%s248 + $0x88] sm:$0xf]
      %v307 = vld [vmem:[%s248 + $0x8c] sm:$0xf]
      %v308 = vld [vmem:[%s248 + $0x90] sm:$0xf]
      %v309 = vld [vmem:[%s248 + $0x94] sm:$0xf]
      %v310 = vld [vmem:[%s248 + $0x98] sm:$0xf]
      %v311 = vld [vmem:[%s248 + $0x9c] sm:$0xf]
      %v312 = vld [vmem:[%s248 + $0xa0] sm:$0xf]
      %v313 = vld [vmem:[%s248 + $0xa4] sm:$0xf]
      %v314 = vld [vmem:[%s248 + $0xa8] sm:$0xf]
      %v315 = vld [vmem:[%s248 + $0xac] sm:$0xf]
      %v316 = vld [vmem:[%s248 + $0xb0] sm:$0xf]
      %v317 = vld [vmem:[%s248 + $0xb4] sm:$0xf]
      %v318 = vld [vmem:[%s248 + $0xb8] sm:$0xf]
      %v319 = vld [vmem:[%s248 + $0xbc] sm:$0xf]
      %v320 = vld [vmem:[%s248 + $0xc0] sm:$0xf]
      %v321 = vld [vmem:[%s248 + $0xc4] sm:$0xf]
      %v322 = vld [vmem:[%s248 + $0xc8] sm:$0xf]
      %v323 = vld [vmem:[%s248 + $0xcc] sm:$0xf]
      %v324 = vld [vmem:[%s248 + $0xd0] sm:$0xf]
      %v325 = vld [vmem:[%s248 + $0xd4] sm:$0xf]
      %v326 = vld [vmem:[%s248 + $0xd8] sm:$0xf]
      %v327 = vld [vmem:[%s248 + $0xdc] sm:$0xf]
      %v328 = vld [vmem:[%s248 + $0xe0] sm:$0xf]
      %v329 = vld [vmem:[%s248 + $0xe4] sm:$0xf]
      %v330 = vld [vmem:[%s248 + $0xe8] sm:$0xf]
      %v331 = vld [vmem:[%s248 + $0xec] sm:$0xf]
      %v332 = vld [vmem:[%s248 + $0xf0] sm:$0xf]
      %v333 = vld [vmem:[%s248 + $0xf4] sm:$0xf]
      %v334 = vld [vmem:[%s248 + $0xf8] sm:$0xf]
      %v335 = vld [vmem:[%s248 + $0xfc] sm:$0xf]
      %v336 = vld [vmem:[%s254] sm:$0xf]
      %v337 = vld [vmem:[%s254 + $0x4] sm:$0xf]
      %v338 = vld [vmem:[%s254 + $0x8] sm:$0xf]
      %v339 = vld [vmem:[%s254 + $0xc] sm:$0xf]
      %v340 = vld [vmem:[%s254 + $0x10] sm:$0xf]
      %v341 = vld [vmem:[%s254 + $0x14] sm:$0xf]
      %v342 = vld [vmem:[%s254 + $0x18] sm:$0xf]
      %v343 = vld [vmem:[%s254 + $0x1c] sm:$0xf]
      %v344 = vld [vmem:[%s254 + $0x20] sm:$0xf]
      %v345 = vld [vmem:[%s254 + $0x24] sm:$0xf]
      %v346 = vld [vmem:[%s254 + $0x28] sm:$0xf]
      %v347 = vld [vmem:[%s254 + $0x2c] sm:$0xf]
      %v348 = vld [vmem:[%s254 + $0x30] sm:$0xf]
      %v349 = vld [vmem:[%s254 + $0x34] sm:$0xf]
      %v350 = vld [vmem:[%s254 + $0x38] sm:$0xf]
      %v351 = vld [vmem:[%s254 + $0x3c] sm:$0xf]
      %v352 = vld [vmem:[%s257] sm:$0x1]
      %v354 = vlaneseq
      %v355 = vshrl.u32 %v354, 7
      %v356 = vsub.s32 0, %v355
      %v357 = vrot.slane %v352, %v356
      %v423 = vunpack.c.l.b16 %v272
      %v424 = vunpack.c.l.b16 %v273
      %v425 = vunpack.c.l.b16 %v274
      %v426 = vunpack.c.l.b16 %v275
      %v427 = vunpack.c.l.b16 %v276
      %v428 = vunpack.c.l.b16 %v277
      %v429 = vunpack.c.l.b16 %v278
      %v430 = vunpack.c.l.b16 %v279
      %v431 = vunpack.c.l.b16 %v280
      %v432 = vunpack.c.l.b16 %v281
      %v433 = vunpack.c.l.b16 %v282
      %v434 = vunpack.c.l.b16 %v283
      %v435 = vunpack.c.l.b16 %v284
      %v436 = vunpack.c.l.b16 %v285
      %v437 = vunpack.c.l.b16 %v286
      %v438 = vunpack.c.l.b16 %v287
      %v439 = vunpack.c.l.b16 %v288
      %v440 = vunpack.c.l.b16 %v289
      %v441 = vunpack.c.l.b16 %v290
      %v442 = vunpack.c.l.b16 %v291
      %v443 = vunpack.c.l.b16 %v292
      %v444 = vunpack.c.l.b16 %v293
      %v445 = vunpack.c.l.b16 %v294
      %v446 = vunpack.c.l.b16 %v295
      %v447 = vunpack.c.l.b16 %v296
      %v448 = vunpack.c.l.b16 %v297
      %v449 = vunpack.c.l.b16 %v298
      %v450 = vunpack.c.l.b16 %v299
      %v451 = vunpack.c.l.b16 %v300
      %v452 = vunpack.c.l.b16 %v301
      %v453 = vunpack.c.l.b16 %v302
      %v454 = vunpack.c.l.b16 %v303
      %v455 = vunpack.c.l.b16 %v304
      %v456 = vunpack.c.l.b16 %v305
      %v457 = vunpack.c.l.b16 %v306
      %v458 = vunpack.c.l.b16 %v307
      %v459 = vunpack.c.l.b16 %v308
      %v460 = vunpack.c.l.b16 %v309
      %v461 = vunpack.c.l.b16 %v310
      %v462 = vunpack.c.l.b16 %v311
      %v463 = vunpack.c.l.b16 %v312
      %v464 = vunpack.c.l.b16 %v313
      %v465 = vunpack.c.l.b16 %v314
      %v466 = vunpack.c.l.b16 %v315
      %v467 = vunpack.c.l.b16 %v316
      %v468 = vunpack.c.l.b16 %v317
      %v469 = vunpack.c.l.b16 %v318
      %v470 = vunpack.c.l.b16 %v319
      %v471 = vunpack.c.l.b16 %v320
      %v472 = vunpack.c.l.b16 %v321
      %v473 = vunpack.c.l.b16 %v322
      %v474 = vunpack.c.l.b16 %v323
      %v475 = vunpack.c.l.b16 %v324
      %v476 = vunpack.c.l.b16 %v325
      %v477 = vunpack.c.l.b16 %v326
      %v478 = vunpack.c.l.b16 %v327
      %v479 = vunpack.c.l.b16 %v328
      %v480 = vunpack.c.l.b16 %v329
      %v481 = vunpack.c.l.b16 %v330
      %v482 = vunpack.c.l.b16 %v331
      %v483 = vunpack.c.l.b16 %v332
      %v484 = vunpack.c.l.b16 %v333
      %v485 = vunpack.c.l.b16 %v334
      %v486 = vunpack.c.l.b16 %v335
      %v487 = vpack.c.b16 %v424, %v423
      %v488 = vpack.c.b16 %v426, %v425
      %v489 = vpack.c.b16 %v428, %v427
      %v490 = vpack.c.b16 %v430, %v429
      %v491 = vpack.c.b16 %v432, %v431
      %v492 = vpack.c.b16 %v434, %v433
      %v493 = vpack.c.b16 %v436, %v435
      %v494 = vpack.c.b16 %v438, %v437
      %v495 = vpack.c.b16 %v440, %v439
      %v496 = vpack.c.b16 %v442, %v441
      %v497 = vpack.c.b16 %v444, %v443
      %v498 = vpack.c.b16 %v446, %v445
      %v499 = vpack.c.b16 %v448, %v447
      %v500 = vpack.c.b16 %v450, %v449
      %v501 = vpack.c.b16 %v452, %v451
      %v502 = vpack.c.b16 %v454, %v453
      %v503 = vpack.c.b16 %v456, %v455
      %v504 = vpack.c.b16 %v458, %v457
      %v505 = vpack.c.b16 %v460, %v459
      %v506 = vpack.c.b16 %v462, %v461
      %v507 = vpack.c.b16 %v464, %v463
      %v508 = vpack.c.b16 %v466, %v465
      %v509 = vpack.c.b16 %v468, %v467
      %v510 = vpack.c.b16 %v470, %v469
      %v511 = vpack.c.b16 %v472, %v471
      %v512 = vpack.c.b16 %v474, %v473
      %v513 = vpack.c.b16 %v476, %v475
      %v514 = vpack.c.b16 %v478, %v477
      %v515 = vpack.c.b16 %v480, %v479
      %v516 = vpack.c.b16 %v482, %v481
      %v517 = vpack.c.b16 %v484, %v483
      %v518 = vpack.c.b16 %v486, %v485
      %v567 = vunpack.c.l.b16 %v336
      %v568 = vunpack.c.l.b16 %v337
      %v569 = vunpack.c.l.b16 %v338
      %v570 = vunpack.c.l.b16 %v339
      %v571 = vunpack.c.l.b16 %v340
      %v572 = vunpack.c.l.b16 %v341
      %v573 = vunpack.c.l.b16 %v342
      %v574 = vunpack.c.l.b16 %v343
      %v575 = vunpack.c.l.b16 %v344
      %v576 = vunpack.c.l.b16 %v345
      %v577 = vunpack.c.l.b16 %v346
      %v578 = vunpack.c.l.b16 %v347
      %v579 = vunpack.c.l.b16 %v348
      %v580 = vunpack.c.l.b16 %v349
      %v581 = vunpack.c.l.b16 %v350
      %v582 = vunpack.c.l.b16 %v351
      %v583 = vpack.c.b16 %v568, %v567
      %v584 = vpack.c.b16 %v570, %v569
      %v585 = vpack.c.b16 %v572, %v571
      %v586 = vpack.c.b16 %v574, %v573
      %v587 = vpack.c.b16 %v576, %v575
      %v588 = vpack.c.b16 %v578, %v577
      %v589 = vpack.c.b16 %v580, %v579
      %v590 = vpack.c.b16 %v582, %v581
      %599 = vmatprep.subr.bf16.mxu0 0
      %600 = vmatpush1.bf16.msra.mxu0 %v590
      %601 = vmatprep.subr.bf16.mxu0 0
      %602 = vmatpush1.bf16.msra.mxu0 %v589
      %603 = vmatprep.subr.bf16.mxu0 0
      %604 = vmatpush1.bf16.msra.mxu0 %v588
      %605 = vmatprep.subr.bf16.mxu0 0
      %606 = vmatpush1.bf16.msra.mxu0 %v587
      %607 = vmatprep.subr.bf16.mxu0 0
      %608 = vmatpush1.bf16.msra.mxu0 %v586
      %609 = vmatprep.subr.bf16.mxu0 0
      %610 = vmatpush1.bf16.msra.mxu0 %v585
      %611 = vmatprep.subr.bf16.mxu0 0
      %612 = vmatpush1.bf16.msra.mxu0 %v584
      %613 = vmatprep.subr.bf16.mxu0 0
      %614 = vmatpush1.bf16.msra.mxu0 %v583
      %615 = vmatprep.subr.bf16.mxu0 0
      %616 = vmatpush2.bf16.msra.mxu0 0
      %617 = vmatprep.subr.bf16.mxu0 0
      %618 = vmatpush2.bf16.msra.mxu0 0
      %619 = vmatprep.subr.bf16.mxu0 0
      %620 = vmatpush2.bf16.msra.mxu0 0
      %621 = vmatprep.subr.bf16.mxu0 0
      %622 = vmatpush2.bf16.msra.mxu0 0
      %623 = vmatprep.subr.bf16.mxu0 0
      %624 = vmatpush2.bf16.msra.mxu0 0
      %625 = vmatprep.subr.bf16.mxu0 0
      %626 = vmatpush2.bf16.msra.mxu0 0
      %627 = vmatprep.subr.bf16.mxu0 0
      %628 = vmatpush2.bf16.msra.mxu0 0
      %629 = vmatprep.subr.bf16.mxu0 0
      %630 = vmatpush2.bf16.msra.mxu0 0
      %631 = vmatprep.mubr.bf16.mxu0 0
      %632 = vmatmul.mubr.bf16.gmra.mxu0 %v487
      %v633 = vpop.f32.mrf.mxu0
      %v634 = vadd.f32 %v357, %v633
      %v635 = vpop.f32.mrf.mxu0
      %v636 = vpop.f32.mrf.mxu0
      %v637 = vadd.f32 %v357, %v636
      %v638 = vpop.f32.mrf.mxu0
      %639 = vmatprep.mubr.bf16.mxu0 0
      %640 = vmatmul.mubr.bf16.gmra.mxu0 %v488
      %v641 = vpop.f32.mrf.mxu0
      %v642 = vadd.f32 %v357, %v641
      %v643 = vpop.f32.mrf.mxu0
      %v644 = vpop.f32.mrf.mxu0
      %v645 = vadd.f32 %v357, %v644
      %v646 = vpop.f32.mrf.mxu0
      %647 = vmatprep.mubr.bf16.mxu0 0
      %648 = vmatmul.mubr.bf16.gmra.mxu0 %v489
      %v649 = vpop.f32.mrf.mxu0
      %v650 = vadd.f32 %v357, %v649
      %v651 = vpop.f32.mrf.mxu0
      %v652 = vpop.f32.mrf.mxu0
      %v653 = vadd.f32 %v357, %v652
      %v654 = vpop.f32.mrf.mxu0
      %655 = vmatprep.mubr.bf16.mxu0 0
      %656 = vmatmul.mubr.bf16.gmra.mxu0 %v490
      %v657 = vpop.f32.mrf.mxu0
      %v658 = vadd.f32 %v357, %v657
      %v659 = vpop.f32.mrf.mxu0
      %v660 = vpop.f32.mrf.mxu0
      %v661 = vadd.f32 %v357, %v660
      %v662 = vpop.f32.mrf.mxu0
      %663 = vmatprep.mubr.bf16.mxu0 0
      %664 = vmatmul.mubr.bf16.gmra.mxu0 %v491
      %v665 = vpop.f32.mrf.mxu0
      %v666 = vadd.f32 %v357, %v665
      %v667 = vpop.f32.mrf.mxu0
      %v668 = vpop.f32.mrf.mxu0
      %v669 = vadd.f32 %v357, %v668
      %v670 = vpop.f32.mrf.mxu0
      %671 = vmatprep.mubr.bf16.mxu0 0
      %672 = vmatmul.mubr.bf16.gmra.mxu0 %v492
      %v673 = vpop.f32.mrf.mxu0
      %v674 = vadd.f32 %v357, %v673
      %v675 = vpop.f32.mrf.mxu0
      %v676 = vpop.f32.mrf.mxu0
      %v677 = vadd.f32 %v357, %v676
      %v678 = vpop.f32.mrf.mxu0
      %679 = vmatprep.mubr.bf16.mxu0 0
      %680 = vmatmul.mubr.bf16.gmra.mxu0 %v493
      %v681 = vpop.f32.mrf.mxu0
      %v682 = vadd.f32 %v357, %v681
      %v683 = vpop.f32.mrf.mxu0
      %v684 = vpop.f32.mrf.mxu0
      %v685 = vadd.f32 %v357, %v684
      %v686 = vpop.f32.mrf.mxu0
      %687 = vmatprep.mubr.bf16.mxu0 0
      %688 = vmatmul.mubr.bf16.gmra.mxu0 %v494
      %v689 = vpop.f32.mrf.mxu0
      %v690 = vadd.f32 %v357, %v689
      %v691 = vpop.f32.mrf.mxu0
      %v692 = vpop.f32.mrf.mxu0
      %v693 = vadd.f32 %v357, %v692
      %v694 = vpop.f32.mrf.mxu0
      %695 = vmatprep.mubr.bf16.mxu0 0
      %696 = vmatmul.mubr.bf16.gmra.mxu0 %v495
      %v697 = vpop.f32.mrf.mxu0
      %v698 = vadd.f32 %v357, %v697
      %v699 = vpop.f32.mrf.mxu0
      %v700 = vpop.f32.mrf.mxu0
      %v701 = vadd.f32 %v357, %v700
      %v702 = vpop.f32.mrf.mxu0
      %703 = vmatprep.mubr.bf16.mxu0 0
      %704 = vmatmul.mubr.bf16.gmra.mxu0 %v496
      %v705 = vpop.f32.mrf.mxu0
      %v706 = vadd.f32 %v357, %v705
      %v707 = vpop.f32.mrf.mxu0
      %v708 = vpop.f32.mrf.mxu0
      %v709 = vadd.f32 %v357, %v708
      %v710 = vpop.f32.mrf.mxu0
      %711 = vmatprep.mubr.bf16.mxu0 0
      %712 = vmatmul.mubr.bf16.gmra.mxu0 %v497
      %v713 = vpop.f32.mrf.mxu0
      %v714 = vadd.f32 %v357, %v713
      %v715 = vpop.f32.mrf.mxu0
      %v716 = vpop.f32.mrf.mxu0
      %v717 = vadd.f32 %v357, %v716
      %v718 = vpop.f32.mrf.mxu0
      %719 = vmatprep.mubr.bf16.mxu0 0
      %720 = vmatmul.mubr.bf16.gmra.mxu0 %v498
      %v721 = vpop.f32.mrf.mxu0
      %v722 = vadd.f32 %v357, %v721
      %v723 = vpop.f32.mrf.mxu0
      %v724 = vpop.f32.mrf.mxu0
      %v725 = vadd.f32 %v357, %v724
      %v726 = vpop.f32.mrf.mxu0
      %727 = vmatprep.mubr.bf16.mxu0 0
      %728 = vmatmul.mubr.bf16.gmra.mxu0 %v499
      %v729 = vpop.f32.mrf.mxu0
      %v730 = vadd.f32 %v357, %v729
      %v731 = vpop.f32.mrf.mxu0
      %v732 = vpop.f32.mrf.mxu0
      %v733 = vadd.f32 %v357, %v732
      %v734 = vpop.f32.mrf.mxu0
      %735 = vmatprep.mubr.bf16.mxu0 0
      %736 = vmatmul.mubr.bf16.gmra.mxu0 %v500
      %v737 = vpop.f32.mrf.mxu0
      %v738 = vadd.f32 %v357, %v737
      %v739 = vpop.f32.mrf.mxu0
      %v740 = vpop.f32.mrf.mxu0
      %v741 = vadd.f32 %v357, %v740
      %v742 = vpop.f32.mrf.mxu0
      %743 = vmatprep.mubr.bf16.mxu0 0
      %744 = vmatmul.mubr.bf16.gmra.mxu0 %v501
      %v745 = vpop.f32.mrf.mxu0
      %v746 = vadd.f32 %v357, %v745
      %v747 = vpop.f32.mrf.mxu0
      %v748 = vpop.f32.mrf.mxu0
      %v749 = vadd.f32 %v357, %v748
      %v750 = vpop.f32.mrf.mxu0
      %751 = vmatprep.mubr.bf16.mxu0 0
      %752 = vmatmul.mubr.bf16.gmra.mxu0 %v502
      %v753 = vpop.f32.mrf.mxu0
      %v754 = vadd.f32 %v357, %v753
      %v755 = vpop.f32.mrf.mxu0
      %v756 = vpop.f32.mrf.mxu0
      %v757 = vadd.f32 %v357, %v756
      %v758 = vpop.f32.mrf.mxu0
      %759 = vmatprep.mubr.bf16.mxu0 0
      %760 = vmatmul.mubr.bf16.gmra.mxu0 %v503
      %v761 = vpop.f32.mrf.mxu0
      %v762 = vadd.f32 %v357, %v761
      %v763 = vpop.f32.mrf.mxu0
      %v764 = vpop.f32.mrf.mxu0
      %v765 = vadd.f32 %v357, %v764
      %v766 = vpop.f32.mrf.mxu0
      %767 = vmatprep.mubr.bf16.mxu0 0
      %768 = vmatmul.mubr.bf16.gmra.mxu0 %v504
      %v769 = vpop.f32.mrf.mxu0
      %v770 = vadd.f32 %v357, %v769
      %v771 = vpop.f32.mrf.mxu0
      %v772 = vpop.f32.mrf.mxu0
      %v773 = vadd.f32 %v357, %v772
      %v774 = vpop.f32.mrf.mxu0
      %775 = vmatprep.mubr.bf16.mxu0 0
      %776 = vmatmul.mubr.bf16.gmra.mxu0 %v505
      %v777 = vpop.f32.mrf.mxu0
      %v778 = vadd.f32 %v357, %v777
      %v779 = vpop.f32.mrf.mxu0
      %v780 = vpop.f32.mrf.mxu0
      %v781 = vadd.f32 %v357, %v780
      %v782 = vpop.f32.mrf.mxu0
      %783 = vmatprep.mubr.bf16.mxu0 0
      %784 = vmatmul.mubr.bf16.gmra.mxu0 %v506
      %v785 = vpop.f32.mrf.mxu0
      %v786 = vadd.f32 %v357, %v785
      %v787 = vpop.f32.mrf.mxu0
      %v788 = vpop.f32.mrf.mxu0
      %v789 = vadd.f32 %v357, %v788
      %v790 = vpop.f32.mrf.mxu0
      %791 = vmatprep.mubr.bf16.mxu0 0
      %792 = vmatmul.mubr.bf16.gmra.mxu0 %v507
      %v793 = vpop.f32.mrf.mxu0
      %v794 = vadd.f32 %v357, %v793
      %v795 = vpop.f32.mrf.mxu0
      %v796 = vpop.f32.mrf.mxu0
      %v797 = vadd.f32 %v357, %v796
      %v798 = vpop.f32.mrf.mxu0
      %799 = vmatprep.mubr.bf16.mxu0 0
      %800 = vmatmul.mubr.bf16.gmra.mxu0 %v508
      %v801 = vpop.f32.mrf.mxu0
      %v802 = vadd.f32 %v357, %v801
      %v803 = vpop.f32.mrf.mxu0
      %v804 = vpop.f32.mrf.mxu0
      %v805 = vadd.f32 %v357, %v804
      %v806 = vpop.f32.mrf.mxu0
      %807 = vmatprep.mubr.bf16.mxu0 0
      %808 = vmatmul.mubr.bf16.gmra.mxu0 %v509
      %v809 = vpop.f32.mrf.mxu0
      %v810 = vadd.f32 %v357, %v809
      %v811 = vpop.f32.mrf.mxu0
      %v812 = vpop.f32.mrf.mxu0
      %v813 = vadd.f32 %v357, %v812
      %v814 = vpop.f32.mrf.mxu0
      %815 = vmatprep.mubr.bf16.mxu0 0
      %816 = vmatmul.mubr.bf16.gmra.mxu0 %v510
      %v817 = vpop.f32.mrf.mxu0
      %v818 = vadd.f32 %v357, %v817
      %v819 = vpop.f32.mrf.mxu0
      %v820 = vpop.f32.mrf.mxu0
      %v821 = vadd.f32 %v357, %v820
      %v822 = vpop.f32.mrf.mxu0
      %823 = vmatprep.mubr.bf16.mxu0 0
      %824 = vmatmul.mubr.bf16.gmra.mxu0 %v511
      %v825 = vpop.f32.mrf.mxu0
      %v826 = vadd.f32 %v357, %v825
      %v827 = vpop.f32.mrf.mxu0
      %v828 = vpop.f32.mrf.mxu0
      %v829 = vadd.f32 %v357, %v828
      %v830 = vpop.f32.mrf.mxu0
      %831 = vmatprep.mubr.bf16.mxu0 0
      %832 = vmatmul.mubr.bf16.gmra.mxu0 %v512
      %v833 = vpop.f32.mrf.mxu0
      %v834 = vadd.f32 %v357, %v833
      %v835 = vpop.f32.mrf.mxu0
      %v836 = vpop.f32.mrf.mxu0
      %v837 = vadd.f32 %v357, %v836
      %v838 = vpop.f32.mrf.mxu0
      %839 = vmatprep.mubr.bf16.mxu0 0
      %840 = vmatmul.mubr.bf16.gmra.mxu0 %v513
      %v841 = vpop.f32.mrf.mxu0
      %v842 = vadd.f32 %v357, %v841
      %v843 = vpop.f32.mrf.mxu0
      %v844 = vpop.f32.mrf.mxu0
      %v845 = vadd.f32 %v357, %v844
      %v846 = vpop.f32.mrf.mxu0
      %847 = vmatprep.mubr.bf16.mxu0 0
      %848 = vmatmul.mubr.bf16.gmra.mxu0 %v514
      %v849 = vpop.f32.mrf.mxu0
      %v850 = vadd.f32 %v357, %v849
      %v851 = vpop.f32.mrf.mxu0
      %v852 = vpop.f32.mrf.mxu0
      %v853 = vadd.f32 %v357, %v852
      %v854 = vpop.f32.mrf.mxu0
      %855 = vmatprep.mubr.bf16.mxu0 0
      %856 = vmatmul.mubr.bf16.gmra.mxu0 %v515
      %v857 = vpop.f32.mrf.mxu0
      %v858 = vadd.f32 %v357, %v857
      %v859 = vpop.f32.mrf.mxu0
      %v860 = vpop.f32.mrf.mxu0
      %v861 = vadd.f32 %v357, %v860
      %v862 = vpop.f32.mrf.mxu0
      %863 = vmatprep.mubr.bf16.mxu0 0
      %864 = vmatmul.mubr.bf16.gmra.mxu0 %v516
      %v865 = vpop.f32.mrf.mxu0
      %v866 = vadd.f32 %v357, %v865
      %v867 = vpop.f32.mrf.mxu0
      %v868 = vpop.f32.mrf.mxu0
      %v869 = vadd.f32 %v357, %v868
      %v870 = vpop.f32.mrf.mxu0
      %871 = vmatprep.mubr.bf16.mxu0 0
      %872 = vmatmul.mubr.bf16.gmra.mxu0 %v517
      %v873 = vpop.f32.mrf.mxu0
      %v874 = vadd.f32 %v357, %v873
      %v875 = vpop.f32.mrf.mxu0
      %v876 = vpop.f32.mrf.mxu0
      %v877 = vadd.f32 %v357, %v876
      %v878 = vpop.f32.mrf.mxu0
      %879 = vmatprep.mubr.bf16.mxu0 0
      %880 = vmatmul.mubr.bf16.gmra.mxu0 %v518
      %v881 = vpop.f32.mrf.mxu0
      %v882 = vadd.f32 %v357, %v881
      %v883 = vpop.f32.mrf.mxu0
      %v884 = vpop.f32.mrf.mxu0
      %v885 = vadd.f32 %v357, %v884
      %v886 = vpop.f32.mrf.mxu0
      %887 = vdwg.mxu0
      %vm888 = vcmp.ge.f32.partialorder %v634, 0.0
      %vm889 = vcmp.ge.f32.partialorder %v637, 0.0
      %vm890 = vcmp.ge.f32.partialorder %v642, 0.0
      %vm891 = vcmp.ge.f32.partialorder %v645, 0.0
      %vm892 = vcmp.ge.f32.partialorder %v650, 0.0
      %vm893 = vcmp.ge.f32.partialorder %v653, 0.0
      %vm894 = vcmp.ge.f32.partialorder %v658, 0.0
      %vm895 = vcmp.ge.f32.partialorder %v661, 0.0
      %vm896 = vcmp.ge.f32.partialorder %v666, 0.0
      %vm897 = vcmp.ge.f32.partialorder %v669, 0.0
      %vm898 = vcmp.ge.f32.partialorder %v674, 0.0
      %vm899 = vcmp.ge.f32.partialorder %v677, 0.0
      %vm900 = vcmp.ge.f32.partialorder %v682, 0.0
      %vm901 = vcmp.ge.f32.partialorder %v685, 0.0
      %vm902 = vcmp.ge.f32.partialorder %v690, 0.0
      %vm903 = vcmp.ge.f32.partialorder %v693, 0.0
      %vm904 = vcmp.ge.f32.partialorder %v698, 0.0
      %vm905 = vcmp.ge.f32.partialorder %v701, 0.0
      %vm906 = vcmp.ge.f32.partialorder %v706, 0.0
      %vm907 = vcmp.ge.f32.partialorder %v709, 0.0
      %vm908 = vcmp.ge.f32.partialorder %v714, 0.0
      %vm909 = vcmp.ge.f32.partialorder %v717, 0.0
      %vm910 = vcmp.ge.f32.partialorder %v722, 0.0
      %vm911 = vcmp.ge.f32.partialorder %v725, 0.0
      %vm912 = vcmp.ge.f32.partialorder %v730, 0.0
      %vm913 = vcmp.ge.f32.partialorder %v733, 0.0
      %vm914 = vcmp.ge.f32.partialorder %v738, 0.0
      %vm915 = vcmp.ge.f32.partialorder %v741, 0.0
      %vm916 = vcmp.ge.f32.partialorder %v746, 0.0
      %vm917 = vcmp.ge.f32.partialorder %v749, 0.0
      %vm918 = vcmp.ge.f32.partialorder %v754, 0.0
      %vm919 = vcmp.ge.f32.partialorder %v757, 0.0
      %vm920 = vcmp.ge.f32.partialorder %v762, 0.0
      %vm921 = vcmp.ge.f32.partialorder %v765, 0.0
      %vm922 = vcmp.ge.f32.partialorder %v770, 0.0
      %vm923 = vcmp.ge.f32.partialorder %v773, 0.0
      %vm924 = vcmp.ge.f32.partialorder %v778, 0.0
      %vm925 = vcmp.ge.f32.partialorder %v781, 0.0
      %vm926 = vcmp.ge.f32.partialorder %v786, 0.0
      %vm927 = vcmp.ge.f32.partialorder %v789, 0.0
      %vm928 = vcmp.ge.f32.partialorder %v794, 0.0
      %vm929 = vcmp.ge.f32.partialorder %v797, 0.0
      %vm930 = vcmp.ge.f32.partialorder %v802, 0.0
      %vm931 = vcmp.ge.f32.partialorder %v805, 0.0
      %vm932 = vcmp.ge.f32.partialorder %v810, 0.0
      %vm933 = vcmp.ge.f32.partialorder %v813, 0.0
      %vm934 = vcmp.ge.f32.partialorder %v818, 0.0
      %vm935 = vcmp.ge.f32.partialorder %v821, 0.0
      %vm936 = vcmp.ge.f32.partialorder %v826, 0.0
      %vm937 = vcmp.ge.f32.partialorder %v829, 0.0
      %vm938 = vcmp.ge.f32.partialorder %v834, 0.0
      %vm939 = vcmp.ge.f32.partialorder %v837, 0.0
      %vm940 = vcmp.ge.f32.partialorder %v842, 0.0
      %vm941 = vcmp.ge.f32.partialorder %v845, 0.0
      %vm942 = vcmp.ge.f32.partialorder %v850, 0.0
      %vm943 = vcmp.ge.f32.partialorder %v853, 0.0
      %vm944 = vcmp.ge.f32.partialorder %v858, 0.0
      %vm945 = vcmp.ge.f32.partialorder %v861, 0.0
      %vm946 = vcmp.ge.f32.partialorder %v866, 0.0
      %vm947 = vcmp.ge.f32.partialorder %v869, 0.0
      %vm948 = vcmp.ge.f32.partialorder %v874, 0.0
      %vm949 = vcmp.ge.f32.partialorder %v877, 0.0
      %vm950 = vcmp.ge.f32.partialorder %v882, 0.0
      %vm951 = vcmp.ge.f32.partialorder %v885, 0.0
      %v952 = vld [vmem:[%s260] sm:$0x1]
      %v954 = vlaneseq
      %v955 = vshrl.u32 %v954, 7
      %v956 = vsub.s32 0, %v955
      %v957 = vrot.slane %v952, %v956
      %v959 = vmul.f32 %v634, %v957
      %v960 = vmul.f32 %v637, %v957
      %v961 = vmul.f32 %v642, %v957
      %v962 = vmul.f32 %v645, %v957
      %v963 = vmul.f32 %v650, %v957
      %v964 = vmul.f32 %v653, %v957
      %v965 = vmul.f32 %v658, %v957
      %v966 = vmul.f32 %v661, %v957
      %v967 = vmul.f32 %v666, %v957
      %v968 = vmul.f32 %v669, %v957
      %v969 = vmul.f32 %v674, %v957
      %v970 = vmul.f32 %v677, %v957
      %v971 = vmul.f32 %v682, %v957
      %v972 = vmul.f32 %v685, %v957
      %v973 = vmul.f32 %v690, %v957
      %v974 = vmul.f32 %v693, %v957
      %v975 = vmul.f32 %v698, %v957
      %v976 = vmul.f32 %v701, %v957
      %v977 = vmul.f32 %v706, %v957
      %v978 = vmul.f32 %v709, %v957
      %v979 = vmul.f32 %v714, %v957
      %v980 = vmul.f32 %v717, %v957
      %v981 = vmul.f32 %v722, %v957
      %v982 = vmul.f32 %v725, %v957
      %v983 = vmul.f32 %v730, %v957
      %v984 = vmul.f32 %v733, %v957
      %v985 = vmul.f32 %v738, %v957
      %v986 = vmul.f32 %v741, %v957
      %v987 = vmul.f32 %v746, %v957
      %v988 = vmul.f32 %v749, %v957
      %v989 = vmul.f32 %v754, %v957
      %v990 = vmul.f32 %v757, %v957
      %v991 = vmul.f32 %v762, %v957
      %v992 = vmul.f32 %v765, %v957
      %v993 = vmul.f32 %v770, %v957
      %v994 = vmul.f32 %v773, %v957
      %v995 = vmul.f32 %v778, %v957
      %v996 = vmul.f32 %v781, %v957
      %v997 = vmul.f32 %v786, %v957
      %v998 = vmul.f32 %v789, %v957
      %v999 = vmul.f32 %v794, %v957
      %v1000 = vmul.f32 %v797, %v957
      %v1001 = vmul.f32 %v802, %v957
      %v1002 = vmul.f32 %v805, %v957
      %v1003 = vmul.f32 %v810, %v957
      %v1004 = vmul.f32 %v813, %v957
      %v1005 = vmul.f32 %v818, %v957
      %v1006 = vmul.f32 %v821, %v957
      %v1007 = vmul.f32 %v826, %v957
      %v1008 = vmul.f32 %v829, %v957
      %v1009 = vmul.f32 %v834, %v957
      %v1010 = vmul.f32 %v837, %v957
      %v1011 = vmul.f32 %v842, %v957
      %v1012 = vmul.f32 %v845, %v957
      %v1013 = vmul.f32 %v850, %v957
      %v1014 = vmul.f32 %v853, %v957
      %v1015 = vmul.f32 %v858, %v957
      %v1016 = vmul.f32 %v861, %v957
      %v1017 = vmul.f32 %v866, %v957
      %v1018 = vmul.f32 %v869, %v957
      %v1019 = vmul.f32 %v874, %v957
      %v1020 = vmul.f32 %v877, %v957
      %v1021 = vmul.f32 %v882, %v957
      %v1022 = vmul.f32 %v885, %v957
      %v1023 = vsel %vm888, %v634, %v959
      %v1024 = vsel %vm889, %v637, %v960
      %v1025 = vsel %vm890, %v642, %v961
      %v1026 = vsel %vm891, %v645, %v962
      %v1027 = vsel %vm892, %v650, %v963
      %v1028 = vsel %vm893, %v653, %v964
      %v1029 = vsel %vm894, %v658, %v965
      %v1030 = vsel %vm895, %v661, %v966
      %v1031 = vsel %vm896, %v666, %v967
      %v1032 = vsel %vm897, %v669, %v968
      %v1033 = vsel %vm898, %v674, %v969
      %v1034 = vsel %vm899, %v677, %v970
      %v1035 = vsel %vm900, %v682, %v971
      %v1036 = vsel %vm901, %v685, %v972
      %v1037 = vsel %vm902, %v690, %v973
      %v1038 = vsel %vm903, %v693, %v974
      %v1039 = vsel %vm904, %v698, %v975
      %v1040 = vsel %vm905, %v701, %v976
      %v1041 = vsel %vm906, %v706, %v977
      %v1042 = vsel %vm907, %v709, %v978
      %v1043 = vsel %vm908, %v714, %v979
      %v1044 = vsel %vm909, %v717, %v980
      %v1045 = vsel %vm910, %v722, %v981
      %v1046 = vsel %vm911, %v725, %v982
      %v1047 = vsel %vm912, %v730, %v983
      %v1048 = vsel %vm913, %v733, %v984
      %v1049 = vsel %vm914, %v738, %v985
      %v1050 = vsel %vm915, %v741, %v986
      %v1051 = vsel %vm916, %v746, %v987
      %v1052 = vsel %vm917, %v749, %v988
      %v1053 = vsel %vm918, %v754, %v989
      %v1054 = vsel %vm919, %v757, %v990
      %v1055 = vsel %vm920, %v762, %v991
      %v1056 = vsel %vm921, %v765, %v992
      %v1057 = vsel %vm922, %v770, %v993
      %v1058 = vsel %vm923, %v773, %v994
      %v1059 = vsel %vm924, %v778, %v995
      %v1060 = vsel %vm925, %v781, %v996
      %v1061 = vsel %vm926, %v786, %v997
      %v1062 = vsel %vm927, %v789, %v998
      %v1063 = vsel %vm928, %v794, %v999
      %v1064 = vsel %vm929, %v797, %v1000
      %v1065 = vsel %vm930, %v802, %v1001
      %v1066 = vsel %vm931, %v805, %v1002
      %v1067 = vsel %vm932, %v810, %v1003
      %v1068 = vsel %vm933, %v813, %v1004
      %v1069 = vsel %vm934, %v818, %v1005
      %v1070 = vsel %vm935, %v821, %v1006
      %v1071 = vsel %vm936, %v826, %v1007
      %v1072 = vsel %vm937, %v829, %v1008
      %v1073 = vsel %vm938, %v834, %v1009
      %v1074 = vsel %vm939, %v837, %v1010
      %v1075 = vsel %vm940, %v842, %v1011
      %v1076 = vsel %vm941, %v845, %v1012
      %v1077 = vsel %vm942, %v850, %v1013
      %v1078 = vsel %vm943, %v853, %v1014
      %v1079 = vsel %vm944, %v858, %v1015
      %v1080 = vsel %vm945, %v861, %v1016
      %v1081 = vsel %vm946, %v866, %v1017
      %v1082 = vsel %vm947, %v869, %v1018
      %v1083 = vsel %vm948, %v874, %v1019
      %v1084 = vsel %vm949, %v877, %v1020
      %v1085 = vsel %vm950, %v882, %v1021
      %v1086 = vsel %vm951, %v885, %v1022
      %v1087 = vpack.c.bf16 %v1024, %v1023
      %v1088 = vpack.c.bf16 %v1026, %v1025
      %v1089 = vpack.c.bf16 %v1028, %v1027
      %v1090 = vpack.c.bf16 %v1030, %v1029
      %v1091 = vpack.c.bf16 %v1032, %v1031
      %v1092 = vpack.c.bf16 %v1034, %v1033
      %v1093 = vpack.c.bf16 %v1036, %v1035
      %v1094 = vpack.c.bf16 %v1038, %v1037
      %v1095 = vpack.c.bf16 %v1040, %v1039
      %v1096 = vpack.c.bf16 %v1042, %v1041
      %v1097 = vpack.c.bf16 %v1044, %v1043
      %v1098 = vpack.c.bf16 %v1046, %v1045
      %v1099 = vpack.c.bf16 %v1048, %v1047
      %v1100 = vpack.c.bf16 %v1050, %v1049
      %v1101 = vpack.c.bf16 %v1052, %v1051
      %v1102 = vpack.c.bf16 %v1054, %v1053
      %v1103 = vpack.c.bf16 %v1056, %v1055
      %v1104 = vpack.c.bf16 %v1058, %v1057
      %v1105 = vpack.c.bf16 %v1060, %v1059
      %v1106 = vpack.c.bf16 %v1062, %v1061
      %v1107 = vpack.c.bf16 %v1064, %v1063
      %v1108 = vpack.c.bf16 %v1066, %v1065
      %v1109 = vpack.c.bf16 %v1068, %v1067
      %v1110 = vpack.c.bf16 %v1070, %v1069
      %v1111 = vpack.c.bf16 %v1072, %v1071
      %v1112 = vpack.c.bf16 %v1074, %v1073
      %v1113 = vpack.c.bf16 %v1076, %v1075
      %v1114 = vpack.c.bf16 %v1078, %v1077
      %v1115 = vpack.c.bf16 %v1080, %v1079
      %v1116 = vpack.c.bf16 %v1082, %v1081
      %v1117 = vpack.c.bf16 %v1084, %v1083
      %v1118 = vpack.c.bf16 %v1086, %v1085
      %v1151 = vunpack.c.l.b16 %v1087
      %v1152 = vunpack.c.h.b16 %v1087
      %v1153 = vunpack.c.l.b16 %v1088
      %v1154 = vunpack.c.h.b16 %v1088
      %v1155 = vunpack.c.l.b16 %v1089
      %v1156 = vunpack.c.h.b16 %v1089
      %v1157 = vunpack.c.l.b16 %v1090
      %v1158 = vunpack.c.h.b16 %v1090
      %v1159 = vunpack.c.l.b16 %v1091
      %v1160 = vunpack.c.h.b16 %v1091
      %v1161 = vunpack.c.l.b16 %v1092
      %v1162 = vunpack.c.h.b16 %v1092
      %v1163 = vunpack.c.l.b16 %v1093
      %v1164 = vunpack.c.h.b16 %v1093
      %v1165 = vunpack.c.l.b16 %v1094
      %v1166 = vunpack.c.h.b16 %v1094
      %v1167 = vunpack.c.l.b16 %v1095
      %v1168 = vunpack.c.h.b16 %v1095
      %v1169 = vunpack.c.l.b16 %v1096
      %v1170 = vunpack.c.h.b16 %v1096
      %v1171 = vunpack.c.l.b16 %v1097
      %v1172 = vunpack.c.h.b16 %v1097
      %v1173 = vunpack.c.l.b16 %v1098
      %v1174 = vunpack.c.h.b16 %v1098
      %v1175 = vunpack.c.l.b16 %v1099
      %v1176 = vunpack.c.h.b16 %v1099
      %v1177 = vunpack.c.l.b16 %v1100
      %v1178 = vunpack.c.h.b16 %v1100
      %v1179 = vunpack.c.l.b16 %v1101
      %v1180 = vunpack.c.h.b16 %v1101
      %v1181 = vunpack.c.l.b16 %v1102
      %v1182 = vunpack.c.h.b16 %v1102
      %v1183 = vunpack.c.l.b16 %v1103
      %v1184 = vunpack.c.h.b16 %v1103
      %v1185 = vunpack.c.l.b16 %v1104
      %v1186 = vunpack.c.h.b16 %v1104
      %v1187 = vunpack.c.l.b16 %v1105
      %v1188 = vunpack.c.h.b16 %v1105
      %v1189 = vunpack.c.l.b16 %v1106
      %v1190 = vunpack.c.h.b16 %v1106
      %v1191 = vunpack.c.l.b16 %v1107
      %v1192 = vunpack.c.h.b16 %v1107
      %v1193 = vunpack.c.l.b16 %v1108
      %v1194 = vunpack.c.h.b16 %v1108
      %v1195 = vunpack.c.l.b16 %v1109
      %v1196 = vunpack.c.h.b16 %v1109
      %v1197 = vunpack.c.l.b16 %v1110
      %v1198 = vunpack.c.h.b16 %v1110
      %v1199 = vunpack.c.l.b16 %v1111
      %v1200 = vunpack.c.h.b16 %v1111
      %v1201 = vunpack.c.l.b16 %v1112
      %v1202 = vunpack.c.h.b16 %v1112
      %v1203 = vunpack.c.l.b16 %v1113
      %v1204 = vunpack.c.h.b16 %v1113
      %v1205 = vunpack.c.l.b16 %v1114
      %v1206 = vunpack.c.h.b16 %v1114
      %v1207 = vunpack.c.l.b16 %v1115
      %v1208 = vunpack.c.h.b16 %v1115
      %v1209 = vunpack.c.l.b16 %v1116
      %v1210 = vunpack.c.h.b16 %v1116
      %v1211 = vunpack.c.l.b16 %v1117
      %v1212 = vunpack.c.h.b16 %v1117
      %v1213 = vunpack.c.l.b16 %v1118
      %v1214 = vunpack.c.h.b16 %v1118
      %v1215 = vpack.c.b16 %v1151, %v1151
      %v1216 = vpack.c.b16 %v1152, %v1152
      %v1217 = vpack.c.b16 %v1153, %v1153
      %v1218 = vpack.c.b16 %v1154, %v1154
      %v1219 = vpack.c.b16 %v1155, %v1155
      %v1220 = vpack.c.b16 %v1156, %v1156
      %v1221 = vpack.c.b16 %v1157, %v1157
      %v1222 = vpack.c.b16 %v1158, %v1158
      %v1223 = vpack.c.b16 %v1159, %v1159
      %v1224 = vpack.c.b16 %v1160, %v1160
      %v1225 = vpack.c.b16 %v1161, %v1161
      %v1226 = vpack.c.b16 %v1162, %v1162
      %v1227 = vpack.c.b16 %v1163, %v1163
      %v1228 = vpack.c.b16 %v1164, %v1164
      %v1229 = vpack.c.b16 %v1165, %v1165
      %v1230 = vpack.c.b16 %v1166, %v1166
      %v1231 = vpack.c.b16 %v1167, %v1167
      %v1232 = vpack.c.b16 %v1168, %v1168
      %v1233 = vpack.c.b16 %v1169, %v1169
      %v1234 = vpack.c.b16 %v1170, %v1170
      %v1235 = vpack.c.b16 %v1171, %v1171
      %v1236 = vpack.c.b16 %v1172, %v1172
      %v1237 = vpack.c.b16 %v1173, %v1173
      %v1238 = vpack.c.b16 %v1174, %v1174
      %v1239 = vpack.c.b16 %v1175, %v1175
      %v1240 = vpack.c.b16 %v1176, %v1176
      %v1241 = vpack.c.b16 %v1177, %v1177
      %v1242 = vpack.c.b16 %v1178, %v1178
      %v1243 = vpack.c.b16 %v1179, %v1179
      %v1244 = vpack.c.b16 %v1180, %v1180
      %v1245 = vpack.c.b16 %v1181, %v1181
      %v1246 = vpack.c.b16 %v1182, %v1182
      %v1247 = vpack.c.b16 %v1183, %v1183
      %v1248 = vpack.c.b16 %v1184, %v1184
      %v1249 = vpack.c.b16 %v1185, %v1185
      %v1250 = vpack.c.b16 %v1186, %v1186
      %v1251 = vpack.c.b16 %v1187, %v1187
      %v1252 = vpack.c.b16 %v1188, %v1188
      %v1253 = vpack.c.b16 %v1189, %v1189
      %v1254 = vpack.c.b16 %v1190, %v1190
      %v1255 = vpack.c.b16 %v1191, %v1191
      %v1256 = vpack.c.b16 %v1192, %v1192
      %v1257 = vpack.c.b16 %v1193, %v1193
      %v1258 = vpack.c.b16 %v1194, %v1194
      %v1259 = vpack.c.b16 %v1195, %v1195
      %v1260 = vpack.c.b16 %v1196, %v1196
      %v1261 = vpack.c.b16 %v1197, %v1197
      %v1262 = vpack.c.b16 %v1198, %v1198
      %v1263 = vpack.c.b16 %v1199, %v1199
      %v1264 = vpack.c.b16 %v1200, %v1200
      %v1265 = vpack.c.b16 %v1201, %v1201
      %v1266 = vpack.c.b16 %v1202, %v1202
      %v1267 = vpack.c.b16 %v1203, %v1203
      %v1268 = vpack.c.b16 %v1204, %v1204
      %v1269 = vpack.c.b16 %v1205, %v1205
      %v1270 = vpack.c.b16 %v1206, %v1206
      %v1271 = vpack.c.b16 %v1207, %v1207
      %v1272 = vpack.c.b16 %v1208, %v1208
      %v1273 = vpack.c.b16 %v1209, %v1209
      %v1274 = vpack.c.b16 %v1210, %v1210
      %v1275 = vpack.c.b16 %v1211, %v1211
      %v1276 = vpack.c.b16 %v1212, %v1212
      %v1277 = vpack.c.b16 %v1213, %v1213
      %v1278 = vpack.c.b16 %v1214, %v1214
      %1343 = vst [vmem:[%s269] sm:$0xf] %v1215
      %1344 = vst [vmem:[%s269 + $0x4] sm:$0xf] %v1216
      %1345 = vst [vmem:[%s269 + $0x8] sm:$0xf] %v1217
      %1346 = vst [vmem:[%s269 + $0xc] sm:$0xf] %v1218
      %1347 = vst [vmem:[%s269 + $0x10] sm:$0xf] %v1219
      %1348 = vst [vmem:[%s269 + $0x14] sm:$0xf] %v1220
      %1349 = vst [vmem:[%s269 + $0x18] sm:$0xf] %v1221
      %1350 = vst [vmem:[%s269 + $0x1c] sm:$0xf] %v1222
      %1351 = vst [vmem:[%s269 + $0x20] sm:$0xf] %v1223
      %1352 = vst [vmem:[%s269 + $0x24] sm:$0xf] %v1224
      %1353 = vst [vmem:[%s269 + $0x28] sm:$0xf] %v1225
      %1354 = vst [vmem:[%s269 + $0x2c] sm:$0xf] %v1226
      %1355 = vst [vmem:[%s269 + $0x30] sm:$0xf] %v1227
      %1356 = vst [vmem:[%s269 + $0x34] sm:$0xf] %v1228
      %1357 = vst [vmem:[%s269 + $0x38] sm:$0xf] %v1229
      %1358 = vst [vmem:[%s269 + $0x3c] sm:$0xf] %v1230
      %1359 = vst [vmem:[%s269 + $0x40] sm:$0xf] %v1231
      %1360 = vst [vmem:[%s269 + $0x44] sm:$0xf] %v1232
      %1361 = vst [vmem:[%s269 + $0x48] sm:$0xf] %v1233
      %1362 = vst [vmem:[%s269 + $0x4c] sm:$0xf] %v1234
      %1363 = vst [vmem:[%s269 + $0x50] sm:$0xf] %v1235
      %1364 = vst [vmem:[%s269 + $0x54] sm:$0xf] %v1236
      %1365 = vst [vmem:[%s269 + $0x58] sm:$0xf] %v1237
      %1366 = vst [vmem:[%s269 + $0x5c] sm:$0xf] %v1238
      %1367 = vst [vmem:[%s269 + $0x60] sm:$0xf] %v1239
      %1368 = vst [vmem:[%s269 + $0x64] sm:$0xf] %v1240
      %1369 = vst [vmem:[%s269 + $0x68] sm:$0xf] %v1241
      %1370 = vst [vmem:[%s269 + $0x6c] sm:$0xf] %v1242
      %1371 = vst [vmem:[%s269 + $0x70] sm:$0xf] %v1243
      %1372 = vst [vmem:[%s269 + $0x74] sm:$0xf] %v1244
      %1373 = vst [vmem:[%s269 + $0x78] sm:$0xf] %v1245
      %1374 = vst [vmem:[%s269 + $0x7c] sm:$0xf] %v1246
      %1375 = vst [vmem:[%s269 + $0x80] sm:$0xf] %v1247
      %1376 = vst [vmem:[%s269 + $0x84] sm:$0xf] %v1248
      %1377 = vst [vmem:[%s269 + $0x88] sm:$0xf] %v1249
      %1378 = vst [vmem:[%s269 + $0x8c] sm:$0xf] %v1250
      %1379 = vst [vmem:[%s269 + $0x90] sm:$0xf] %v1251
      %1380 = vst [vmem:[%s269 + $0x94] sm:$0xf] %v1252
      %1381 = vst [vmem:[%s269 + $0x98] sm:$0xf] %v1253
      %1382 = vst [vmem:[%s269 + $0x9c] sm:$0xf] %v1254
      %1383 = vst [vmem:[%s269 + $0xa0] sm:$0xf] %v1255
      %1384 = vst [vmem:[%s269 + $0xa4] sm:$0xf] %v1256
      %1385 = vst [vmem:[%s269 + $0xa8] sm:$0xf] %v1257
      %1386 = vst [vmem:[%s269 + $0xac] sm:$0xf] %v1258
      %1387 = vst [vmem:[%s269 + $0xb0] sm:$0xf] %v1259
      %1388 = vst [vmem:[%s269 + $0xb4] sm:$0xf] %v1260
      %1389 = vst [vmem:[%s269 + $0xb8] sm:$0xf] %v1261
      %1390 = vst [vmem:[%s269 + $0xbc] sm:$0xf] %v1262
      %1391 = vst [vmem:[%s269 + $0xc0] sm:$0xf] %v1263
      %1392 = vst [vmem:[%s269 + $0xc4] sm:$0xf] %v1264
      %1393 = vst [vmem:[%s269 + $0xc8] sm:$0xf] %v1265
      %1394 = vst [vmem:[%s269 + $0xcc] sm:$0xf] %v1266
      %1395 = vst [vmem:[%s269 + $0xd0] sm:$0xf] %v1267
      %1396 = vst [vmem:[%s269 + $0xd4] sm:$0xf] %v1268
      %1397 = vst [vmem:[%s269 + $0xd8] sm:$0xf] %v1269
      %1398 = vst [vmem:[%s269 + $0xdc] sm:$0xf] %v1270
      %1399 = vst [vmem:[%s269 + $0xe0] sm:$0xf] %v1271
      %1400 = vst [vmem:[%s269 + $0xe4] sm:$0xf] %v1272
      %1401 = vst [vmem:[%s269 + $0xe8] sm:$0xf] %v1273
      %1402 = vst [vmem:[%s269 + $0xec] sm:$0xf] %v1274
      %1403 = vst [vmem:[%s269 + $0xf0] sm:$0xf] %v1275
      %1404 = vst [vmem:[%s269 + $0xf4] sm:$0xf] %v1276
      %1405 = vst [vmem:[%s269 + $0xf8] sm:$0xf] %v1277
      %1406 = vst [vmem:[%s269 + $0xfc] sm:$0xf] %v1278
      %s1407 = smul.u32 64, %s20
      %p1408 = scmp.lt.s32.totalorder %s19, 2
      %s1409 = scalar_select %p1408, %s19, 2
      %p1410 = scmp.lt.s32.totalorder %s1407, 255
      %s1411 = scalar_select %p1410, %s1407, 255
      %s1412 = smul.addr %s1409, 256
      %s1413 = sadd.s32 %s1411, %s1412
      %s1414 = smul.addr %s1413, 4
      %s1415 = scalar_lea.vmem %s4, %s1414
      // Predicated region
      $region37: #{classsr_forward.8} parent=35 // pred_check
        %p1416 = pneg %p151
      $region38: #{classsr_forward.8} parent=35 // pred_check_branch
        %1418 = sbr.rel (%p1416) target = $region40
      $region39: #{classsr_forward.8} parent=35 // pred_region
        %s1419 = smul.u32 64, %s20
      $region40: #{classsr_forward.8} parent=35 // pred_fallthru
        _
    $region36: #{classsr_forward.8} parent=5 // pred_fallthru
      _
    %p1420 = scmp.le.s32.totalorder 2, %s10
    // Predicated region
    $region41: #{classsr_forward.8} parent=5 // pred_check
      %p1421 = pneg %p1420
    $region42: #{classsr_forward.8} parent=5 // pred_check_branch
      %1423 = sbr.rel (%p1421) target = $region44
    $region43: #{classsr_forward.8} parent=5 // pred_region
      %s1424 = ssub.s32 %s10, 2
      // Predicated region
      $region45: #{classsr_forward.8} parent=43 // pred_check
        %p1425 = pneg %p157
      $region46: #{classsr_forward.8} parent=43 // pred_check_branch
        %1427 = sbr.rel (%p1425) target = $region48
      $region47: #{classsr_forward.8} parent=43 // pred_region
        %s1428 = smul.u32 64, %s22
        %p1429 = scmp.lt.s32.totalorder %s21, 2
        %s1430 = scalar_select %p1429, %s21, 2
        %p1431 = scmp.lt.s32.totalorder %s1428, 255
        %s1432 = scalar_select %p1431, %s1428, 255
        %s1433 = smul.addr %s1430, 256
        %s1434 = sadd.s32 %s1432, %s1433
        %s1435 = smul.addr %s1434, 4
        %s1436 = scalar_lea.vmem %s4, %s1435
      $region48: #{classsr_forward.8} parent=43 // pred_fallthru
        _
    $region44: #{classsr_forward.8} parent=5 // pred_fallthru
      _
  $region6: #{classsr_forward.8} parent=0 // loop_footer
    %s14 = sadd.s32 1, %s10
  $region7: #{classsr_forward.8} parent=0 // loop_footer_branch
    %9 = sbr.rel target = $region3
  $region8: #{classsr_forward.8} parent=0 // loop_exit
    _

// kernel: classsr_forward.9
$region0: #{classsr_forward.9}
  #allocation0 [shape = 'u32[]', space=smem, size = 0x4, offset = 0x4, fixed_abs, tag = 'smem constant byte address 0x4 - core index']
  #allocation1 [shape = 'u32[144,128]{1,0:T(1,128)}', space=vmem, size = 0x12000, scoped, tag = 'internal scratch']
  %s0 = inlined_call_operand.vmem [shape: bf16[3,2048,128], index: 0, kind: input, shape index: {}]
  %s1 = inlined_call_operand.vmem [shape: bf16[3,128,128], index: 1, kind: input, shape index: {}]
  %s2 = inlined_call_operand.vmem [shape: f32[3,1,128], index: 2, kind: input, shape index: {}]
  %s3 = inlined_call_operand.vmem [shape: f32[3,1,128], index: 3, kind: input, shape index: {}]
  %s4 = inlined_call_operand.vmem [shape: bf16[3,2048,128], index: 4, kind: output, shape index: {}]
  %s5 = sld [smem:[#allocation0]]
  $region49: #{classsr_forward.9} parent=0
    _
  %s7 = ssub.s32 1, %s5
  %s8 = scalar_select 0, %s7, %s5
  loop: start=0, step=1, limit=14
  $region2: #{classsr_forward.9} parent=0 // loop_pre_header
    _
  $region3: #{classsr_forward.9} parent=0 // loop_header
    %s10 = sphi 0, %s14
    %p11 = scmp.ge.s32.totalorder %s10, 14
    %s17 = sphi 0, %s29
    %s18 = sphi 0, %s25
    %s19 = sphi 0, %s17
    %s20 = sphi 0, %s18
    %s21 = sphi 0, %s19
    %s22 = sphi 0, %s20
    %s34 = sphi 0, %s36
    %s37 = sphi 0, %s34
    %s38 = sphi 0, %s37
    %s54 = sphi 0, %s38
    %s60 = sphi 0, %s62
    %s63 = sphi 0, %s60
    %s64 = sphi 0, %s63
    %s80 = sphi 0, %s64
    %s86 = sphi 0, %s88
    %s89 = sphi 0, %s86
    %s90 = sphi 0, %s89
    %s106 = sphi 0, %s90
    %s112 = sphi 0, %s114
    %s115 = sphi 0, %s112
    %s116 = sphi 0, %s115
    %s132 = sphi 0, %s116
    %s140 = sphi 0, %s142
    %s143 = sphi 0, %s140
    %s144 = sphi 0, %s143
    %s160 = sphi 0, %s144
  $region4: #{classsr_forward.9} parent=0 // loop_header_branch
    %13 = sbr.rel (%p11) target = $region8
  $region5: #{classsr_forward.9} parent=0 // loop_body
    %s15 = ssub.s32 %s10, 1
    %s16 = ssub.s32 %s10, 2
    %s23 = sadd.s32 1, %s18
    %p24 = scmp.ge.s32.totalorder %s23, 4
    %s25 = scalar_select %p24, 0, %s23
    %s26 = sadd.s32 1, %s17
    %s27 = scalar_select %p24, %s26, %s17
    %p28 = scmp.ge.s32.totalorder %s27, 3
    %s29 = scalar_select %p28, 0, %s27
    %s30 = ssub.s32 %s17, %s29
    %s31 = ssub.s32 %s18, %s25
    %s32 = sor.u32 %s30, %s31
    %p33 = scmp.eq.s32.totalorder %s32, 0
    %s35 = sadd.s32 %s34, 1
    %s36 = scalar_select %p33, %s34, %s35
    %p39 = pneg %p33
    %p40 = scmp.eq.s32.totalorder %s10, 11
    %p41 = por %p39, %p40
    %p42 = scmp.ne.s32.totalorder %s34, %s37
    %p43 = scmp.eq.s32.totalorder %s10, 0
    %p44 = por %p42, %p43
    %p45 = scmp.ne.s32.totalorder %s34, %s37
    %p46 = scmp.eq.s32.totalorder %s15, 11
    %p47 = por %p45, %p46
    %p48 = scmp.ne.s32.totalorder %s37, %s38
    %p49 = scmp.eq.s32.totalorder %s15, 0
    %p50 = por %p48, %p49
    %p51 = scmp.ne.s32.totalorder %s37, %s38
    %p52 = scmp.eq.s32.totalorder %s16, 11
    %p53 = por %p51, %p52
    %p55 = scmp.ne.s32.totalorder %s38, %s54
    %p56 = scmp.eq.s32.totalorder %s16, 0
    %p57 = por %p55, %p56
    %s58 = ssub.s32 %s17, %s29
    %p59 = scmp.eq.s32.totalorder %s58, 0
    %s61 = sadd.s32 %s60, 1
    %s62 = scalar_select %p59, %s60, %s61
    %p65 = pneg %p59
    %p66 = scmp.eq.s32.totalorder %s10, 11
    %p67 = por %p65, %p66
    %p68 = scmp.ne.s32.totalorder %s60, %s63
    %p69 = scmp.eq.s32.totalorder %s10, 0
    %p70 = por %p68, %p69
    %p71 = scmp.ne.s32.totalorder %s60, %s63
    %p72 = scmp.eq.s32.totalorder %s15, 11
    %p73 = por %p71, %p72
    %p74 = scmp.ne.s32.totalorder %s63, %s64
    %p75 = scmp.eq.s32.totalorder %s15, 0
    %p76 = por %p74, %p75
    %p77 = scmp.ne.s32.totalorder %s63, %s64
    %p78 = scmp.eq.s32.totalorder %s16, 11
    %p79 = por %p77, %p78
    %p81 = scmp.ne.s32.totalorder %s64, %s80
    %p82 = scmp.eq.s32.totalorder %s16, 0
    %p83 = por %p81, %p82
    %s84 = ssub.s32 %s17, %s29
    %p85 = scmp.eq.s32.totalorder %s84, 0
    %s87 = sadd.s32 %s86, 1
    %s88 = scalar_select %p85, %s86, %s87
    %p91 = pneg %p85
    %p92 = scmp.eq.s32.totalorder %s10, 11
    %p93 = por %p91, %p92
    %p94 = scmp.ne.s32.totalorder %s86, %s89
    %p95 = scmp.eq.s32.totalorder %s10, 0
    %p96 = por %p94, %p95
    %p97 = scmp.ne.s32.totalorder %s86, %s89
    %p98 = scmp.eq.s32.totalorder %s15, 11
    %p99 = por %p97, %p98
    %p100 = scmp.ne.s32.totalorder %s89, %s90
    %p101 = scmp.eq.s32.totalorder %s15, 0
    %p102 = por %p100, %p101
    %p103 = scmp.ne.s32.totalorder %s89, %s90
    %p104 = scmp.eq.s32.totalorder %s16, 11
    %p105 = por %p103, %p104
    %p107 = scmp.ne.s32.totalorder %s90, %s106
    %p108 = scmp.eq.s32.totalorder %s16, 0
    %p109 = por %p107, %p108
    %s110 = ssub.s32 %s17, %s29
    %p111 = scmp.eq.s32.totalorder %s110, 0
    %s113 = sadd.s32 %s112, 1
    %s114 = scalar_select %p111, %s112, %s113
    %p117 = pneg %p111
    %p118 = scmp.eq.s32.totalorder %s10, 11
    %p119 = por %p117, %p118
    %p120 = scmp.ne.s32.totalorder %s112, %s115
    %p121 = scmp.eq.s32.totalorder %s10, 0
    %p122 = por %p120, %p121
    %p123 = scmp.ne.s32.totalorder %s112, %s115
    %p124 = scmp.eq.s32.totalorder %s15, 11
    %p125 = por %p123, %p124
    %p126 = scmp.ne.s32.totalorder %s115, %s116
    %p127 = scmp.eq.s32.totalorder %s15, 0
    %p128 = por %p126, %p127
    %p129 = scmp.ne.s32.totalorder %s115, %s116
    %p130 = scmp.eq.s32.totalorder %s16, 11
    %p131 = por %p129, %p130
    %p133 = scmp.ne.s32.totalorder %s116, %s132
    %p134 = scmp.eq.s32.totalorder %s16, 0
    %p135 = por %p133, %p134
    %s136 = ssub.s32 %s17, %s29
    %s137 = ssub.s32 %s18, %s25
    %s138 = sor.u32 %s136, %s137
    %p139 = scmp.eq.s32.totalorder %s138, 0
    %s141 = sadd.s32 %s140, 1
    %s142 = scalar_select %p139, %s140, %s141
    %p145 = pneg %p139
    %p146 = scmp.eq.s32.totalorder %s10, 11
    %p147 = por %p145, %p146
    %p148 = scmp.ne.s32.totalorder %s140, %s143
    %p149 = scmp.eq.s32.totalorder %s10, 0
    %p150 = por %p148, %p149
    %p151 = scmp.ne.s32.totalorder %s140, %s143
    %p152 = scmp.eq.s32.totalorder %s15, 11
    %p153 = por %p151, %p152
    %p154 = scmp.ne.s32.totalorder %s143, %s144
    %p155 = scmp.eq.s32.totalorder %s15, 0
    %p156 = por %p154, %p155
    %p157 = scmp.ne.s32.totalorder %s143, %s144
    %p158 = scmp.eq.s32.totalorder %s16, 11
    %p159 = por %p157, %p158
    %p161 = scmp.ne.s32.totalorder %s144, %s160
    %p162 = scmp.eq.s32.totalorder %s16, 0
    %p163 = por %p161, %p162
    %p164 = scmp.le.s32.totalorder 1, %s10
    %p165 = scmp.lt.s32.totalorder %s10, 13
    %p166 = pnand %p164, %p165
    %p167 = pneg %p166
    // Predicated region
    $region9: #{classsr_forward.9} parent=5 // pred_check
      _
    $region10: #{classsr_forward.9} parent=5 // pred_check_branch
      %169 = sbr.rel (%p166) target = $region12
    $region11: #{classsr_forward.9} parent=5 // pred_region
      %s170 = ssub.s32 %s10, 1
    $region12: #{classsr_forward.9} parent=5 // pred_fallthru
      _
    %p171 = scmp.lt.s32.totalorder %s10, 12
    // Predicated region
    $region13: #{classsr_forward.9} parent=5 // pred_check
      %p172 = pneg %p171
    $region14: #{classsr_forward.9} parent=5 // pred_check_branch
      %174 = sbr.rel (%p172) target = $region16
    $region15: #{classsr_forward.9} parent=5 // pred_region
      // Predicated region
      $region17: #{classsr_forward.9} parent=15 // pred_check
        %p175 = pneg %p44
      $region18: #{classsr_forward.9} parent=15 // pred_check_branch
        %177 = sbr.rel (%p175) target = $region20
      $region19: #{classsr_forward.9} parent=15 // pred_region
        %s178 = smul.u32 64, %s18
        %p179 = scmp.lt.s32.totalorder %s17, 2
        %s180 = scalar_select %p179, %s17, 2
        %p181 = scmp.lt.s32.totalorder %s178, 255
        %s182 = scalar_select %p181, %s178, 255
        %s183 = smul.addr %s180, 256
        %s184 = sadd.s32 %s182, %s183
        %s185 = smul.addr %s184, 4
        %s186 = scalar_lea.vmem %s0, %s185
        %s187 = smul.u32 64, %s18
      $region20: #{classsr_forward.9} parent=15 // pred_fallthru
        _
      // Predicated region
      $region21: #{classsr_forward.9} parent=15 // pred_check
        %p188 = pneg %p70
      $region22: #{classsr_forward.9} parent=15 // pred_check_branch
        %190 = sbr.rel (%p188) target = $region24
      $region23: #{classsr_forward.9} parent=15 // pred_region
        %p191 = scmp.lt.s32.totalorder %s17, 2
        %s192 = scalar_select %p191, %s17, 2
        %s193 = smul.addr %s192, 16
        %s194 = smul.addr %s193, 4
        %s195 = scalar_lea.vmem %s1, %s194
      $region24: #{classsr_forward.9} parent=15 // pred_fallthru
        _
      // Predicated region
      $region25: #{classsr_forward.9} parent=15 // pred_check
        %p196 = pneg %p96
      $region26: #{classsr_forward.9} parent=15 // pred_check_branch
        %198 = sbr.rel (%p196) target = $region28
      $region27: #{classsr_forward.9} parent=15 // pred_region
        %p199 = scmp.lt.s32.totalorder %s17, 2
        %s200 = scalar_select %p199, %s17, 2
        %s201 = scalar_lea.vmem %s2, %s200
      $region28: #{classsr_forward.9} parent=15 // pred_fallthru
        _
      // Predicated region
      $region29: #{classsr_forward.9} parent=15 // pred_check
        %p202 = pneg %p122
      $region30: #{classsr_forward.9} parent=15 // pred_check_branch
        %204 = sbr.rel (%p202) target = $region32
      $region31: #{classsr_forward.9} parent=15 // pred_region
        %p205 = scmp.lt.s32.totalorder %s17, 2
        %s206 = scalar_select %p205, %s17, 2
        %s207 = scalar_lea.vmem %s3, %s206
      $region32: #{classsr_forward.9} parent=15 // pred_fallthru
        _
    $region16: #{classsr_forward.9} parent=5 // pred_fallthru
      _
    %p208 = scmp.le.s32.totalorder 1, %s10
    %p209 = scmp.lt.s32.totalorder %s10, 13
    %p210 = pnand %p208, %p209
    %p211 = pneg %p210
    // Predicated region
    $region33: #{classsr_forward.9} parent=5 // pred_check
      _
    $region34: #{classsr_forward.9} parent=5 // pred_check_branch
      %213 = sbr.rel (%p210) target = $region36
    $region35: #{classsr_forward.9} parent=5 // pred_region
      %s214 = ssub.s32 %s10, 1
      %s215 = smul.u32 64, %s20
      %p216 = scmp.lt.s32.totalorder %s19, 2
      %s217 = scalar_select %p216, %s19, 2
      %p218 = scmp.lt.s32.totalorder %s215, 255
      %s219 = scalar_select %p218, %s215, 255
      %s220 = smul.addr %s217, 256
      %s221 = sadd.s32 %s219, %s220
      %s222 = smul.addr %s221, 4
      %s223 = scalar_lea.vmem %s0, %s222
      %p224 = pneg %p50
      %p225 = pneg %p47
      %p226 = scmp.lt.s32.totalorder %s19, 2
      %s227 = scalar_select %p226, %s19, 2
      %s228 = smul.addr %s227, 16
      %s229 = smul.addr %s228, 4
      %s230 = scalar_lea.vmem %s1, %s229
      %p231 = pneg %p76
      %p232 = pneg %p73
      %p233 = scmp.lt.s32.totalorder %s19, 2
      %s234 = scalar_select %p233, %s19, 2
      %s235 = scalar_lea.vmem %s2, %s234
      %p236 = pneg %p102
      %p237 = pneg %p99
      %p238 = scmp.lt.s32.totalorder %s19, 2
      %s239 = scalar_select %p238, %s19, 2
      %s240 = scalar_lea.vmem %s3, %s239
      %p241 = pneg %p128
      %p242 = pneg %p125
      %p243 = pneg %p156
      %p244 = pneg %p153
      %s245 = smul.u32 64, %s20
      %p246 = scmp.lt.s32.totalorder %s19, 2
      %s247 = scalar_select %p246, %s19, 2
      %p248 = scmp.lt.s32.totalorder %s245, 255
      %s249 = scalar_select %p248, %s245, 255
      %s250 = smul.addr %s247, 256
      %s251 = sadd.s32 %s249, %s250
      %s252 = smul.addr %s251, 4
      %s253 = scalar_lea.vmem %s4, %s252
      %s254 = smul.u32 64, %s20
      %p255 = scmp.lt.s32.totalorder %s19, 2
      %s256 = scalar_select %p255, %s19, 2
      %p257 = scmp.lt.s32.totalorder %s254, 255
      %s258 = scalar_select %p257, %s254, 255
      %s259 = smul.addr %s256, 256
      %s260 = sadd.s32 %s258, %s259
      %s261 = smul.addr %s260, 4
      %s262 = scalar_lea.vmem %s0, %s261
      %s263 = smul.u32 64, %s20
      %p264 = scmp.lt.s32.totalorder %s19, 2
      %s265 = scalar_select %p264, %s19, 2
      %s266 = smul.addr %s265, 16
      %s267 = smul.addr %s266, 4
      %s268 = scalar_lea.vmem %s1, %s267
      %p269 = scmp.lt.s32.totalorder %s19, 2
      %s270 = scalar_select %p269, %s19, 2
      %s271 = scalar_lea.vmem %s2, %s270
      %p272 = scmp.lt.s32.totalorder %s19, 2
      %s273 = scalar_select %p272, %s19, 2
      %s274 = scalar_lea.vmem %s3, %s273
      %s275 = smul.u32 64, %s20
      %p276 = scmp.lt.s32.totalorder %s19, 2
      %s277 = scalar_select %p276, %s19, 2
      %p278 = scmp.lt.s32.totalorder %s275, 255
      %s279 = scalar_select %p278, %s275, 255
      %s280 = smul.addr %s277, 256
      %s281 = sadd.s32 %s279, %s280
      %s282 = smul.addr %s281, 4
      %s283 = scalar_lea.vmem %s4, %s282
      %s284 = smul.u32 64, %s20
      %v286 = vld [vmem:[%s262] sm:$0xf]
      %v287 = vld [vmem:[%s262 + $0x4] sm:$0xf]
      %v288 = vld [vmem:[%s262 + $0x8] sm:$0xf]
      %v289 = vld [vmem:[%s262 + $0xc] sm:$0xf]
      %v290 = vld [vmem:[%s262 + $0x10] sm:$0xf]
      %v291 = vld [vmem:[%s262 + $0x14] sm:$0xf]
      %v292 = vld [vmem:[%s262 + $0x18] sm:$0xf]
      %v293 = vld [vmem:[%s262 + $0x1c] sm:$0xf]
      %v294 = vld [vmem:[%s262 + $0x20] sm:$0xf]
      %v295 = vld [vmem:[%s262 + $0x24] sm:$0xf]
      %v296 = vld [vmem:[%s262 + $0x28] sm:$0xf]
      %v297 = vld [vmem:[%s262 + $0x2c] sm:$0xf]
      %v298 = vld [vmem:[%s262 + $0x30] sm:$0xf]
      %v299 = vld [vmem:[%s262 + $0x34] sm:$0xf]
      %v300 = vld [vmem:[%s262 + $0x38] sm:$0xf]
      %v301 = vld [vmem:[%s262 + $0x3c] sm:$0xf]
      %v302 = vld [vmem:[%s262 + $0x40] sm:$0xf]
      %v303 = vld [vmem:[%s262 + $0x44] sm:$0xf]
      %v304 = vld [vmem:[%s262 + $0x48] sm:$0xf]
      %v305 = vld [vmem:[%s262 + $0x4c] sm:$0xf]
      %v306 = vld [vmem:[%s262 + $0x50] sm:$0xf]
      %v307 = vld [vmem:[%s262 + $0x54] sm:$0xf]
      %v308 = vld [vmem:[%s262 + $0x58] sm:$0xf]
      %v309 = vld [vmem:[%s262 + $0x5c] sm:$0xf]
      %v310 = vld [vmem:[%s262 + $0x60] sm:$0xf]
      %v311 = vld [vmem:[%s262 + $0x64] sm:$0xf]
      %v312 = vld [vmem:[%s262 + $0x68] sm:$0xf]
      %v313 = vld [vmem:[%s262 + $0x6c] sm:$0xf]
      %v314 = vld [vmem:[%s262 + $0x70] sm:$0xf]
      %v315 = vld [vmem:[%s262 + $0x74] sm:$0xf]
      %v316 = vld [vmem:[%s262 + $0x78] sm:$0xf]
      %v317 = vld [vmem:[%s262 + $0x7c] sm:$0xf]
      %v318 = vld [vmem:[%s262 + $0x80] sm:$0xf]
      %v319 = vld [vmem:[%s262 + $0x84] sm:$0xf]
      %v320 = vld [vmem:[%s262 + $0x88] sm:$0xf]
      %v321 = vld [vmem:[%s262 + $0x8c] sm:$0xf]
      %v322 = vld [vmem:[%s262 + $0x90] sm:$0xf]
      %v323 = vld [vmem:[%s262 + $0x94] sm:$0xf]
      %v324 = vld [vmem:[%s262 + $0x98] sm:$0xf]
      %v325 = vld [vmem:[%s262 + $0x9c] sm:$0xf]
      %v326 = vld [vmem:[%s262 + $0xa0] sm:$0xf]
      %v327 = vld [vmem:[%s262 + $0xa4] sm:$0xf]
      %v328 = vld [vmem:[%s262 + $0xa8] sm:$0xf]
      %v329 = vld [vmem:[%s262 + $0xac] sm:$0xf]
      %v330 = vld [vmem:[%s262 + $0xb0] sm:$0xf]
      %v331 = vld [vmem:[%s262 + $0xb4] sm:$0xf]
      %v332 = vld [vmem:[%s262 + $0xb8] sm:$0xf]
      %v333 = vld [vmem:[%s262 + $0xbc] sm:$0xf]
      %v334 = vld [vmem:[%s262 + $0xc0] sm:$0xf]
      %v335 = vld [vmem:[%s262 + $0xc4] sm:$0xf]
      %v336 = vld [vmem:[%s262 + $0xc8] sm:$0xf]
      %v337 = vld [vmem:[%s262 + $0xcc] sm:$0xf]
      %v338 = vld [vmem:[%s262 + $0xd0] sm:$0xf]
      %v339 = vld [vmem:[%s262 + $0xd4] sm:$0xf]
      %v340 = vld [vmem:[%s262 + $0xd8] sm:$0xf]
      %v341 = vld [vmem:[%s262 + $0xdc] sm:$0xf]
      %v342 = vld [vmem:[%s262 + $0xe0] sm:$0xf]
      %v343 = vld [vmem:[%s262 + $0xe4] sm:$0xf]
      %v344 = vld [vmem:[%s262 + $0xe8] sm:$0xf]
      %v345 = vld [vmem:[%s262 + $0xec] sm:$0xf]
      %v346 = vld [vmem:[%s262 + $0xf0] sm:$0xf]
      %v347 = vld [vmem:[%s262 + $0xf4] sm:$0xf]
      %v348 = vld [vmem:[%s262 + $0xf8] sm:$0xf]
      %v349 = vld [vmem:[%s262 + $0xfc] sm:$0xf]
      %v350 = vld [vmem:[%s268] sm:$0xf]
      %v351 = vld [vmem:[%s268 + $0x4] sm:$0xf]
      %v352 = vld [vmem:[%s268 + $0x8] sm:$0xf]
      %v353 = vld [vmem:[%s268 + $0xc] sm:$0xf]
      %v354 = vld [vmem:[%s268 + $0x10] sm:$0xf]
      %v355 = vld [vmem:[%s268 + $0x14] sm:$0xf]
      %v356 = vld [vmem:[%s268 + $0x18] sm:$0xf]
      %v357 = vld [vmem:[%s268 + $0x1c] sm:$0xf]
      %v358 = vld [vmem:[%s268 + $0x20] sm:$0xf]
      %v359 = vld [vmem:[%s268 + $0x24] sm:$0xf]
      %v360 = vld [vmem:[%s268 + $0x28] sm:$0xf]
      %v361 = vld [vmem:[%s268 + $0x2c] sm:$0xf]
      %v362 = vld [vmem:[%s268 + $0x30] sm:$0xf]
      %v363 = vld [vmem:[%s268 + $0x34] sm:$0xf]
      %v364 = vld [vmem:[%s268 + $0x38] sm:$0xf]
      %v365 = vld [vmem:[%s268 + $0x3c] sm:$0xf]
      %v366 = vld [vmem:[%s271] sm:$0x1]
      %v368 = vlaneseq
      %v369 = vshrl.u32 %v368, 7
      %v370 = vsub.s32 0, %v369
      %v371 = vrot.slane %v366, %v370
      %v437 = vunpack.c.l.b16 %v286
      %v438 = vunpack.c.l.b16 %v287
      %v439 = vunpack.c.l.b16 %v288
      %v440 = vunpack.c.l.b16 %v289
      %v441 = vunpack.c.l.b16 %v290
      %v442 = vunpack.c.l.b16 %v291
      %v443 = vunpack.c.l.b16 %v292
      %v444 = vunpack.c.l.b16 %v293
      %v445 = vunpack.c.l.b16 %v294
      %v446 = vunpack.c.l.b16 %v295
      %v447 = vunpack.c.l.b16 %v296
      %v448 = vunpack.c.l.b16 %v297
      %v449 = vunpack.c.l.b16 %v298
      %v450 = vunpack.c.l.b16 %v299
      %v451 = vunpack.c.l.b16 %v300
      %v452 = vunpack.c.l.b16 %v301
      %v453 = vunpack.c.l.b16 %v302
      %v454 = vunpack.c.l.b16 %v303
      %v455 = vunpack.c.l.b16 %v304
      %v456 = vunpack.c.l.b16 %v305
      %v457 = vunpack.c.l.b16 %v306
      %v458 = vunpack.c.l.b16 %v307
      %v459 = vunpack.c.l.b16 %v308
      %v460 = vunpack.c.l.b16 %v309
      %v461 = vunpack.c.l.b16 %v310
      %v462 = vunpack.c.l.b16 %v311
      %v463 = vunpack.c.l.b16 %v312
      %v464 = vunpack.c.l.b16 %v313
      %v465 = vunpack.c.l.b16 %v314
      %v466 = vunpack.c.l.b16 %v315
      %v467 = vunpack.c.l.b16 %v316
      %v468 = vunpack.c.l.b16 %v317
      %v469 = vunpack.c.l.b16 %v318
      %v470 = vunpack.c.l.b16 %v319
      %v471 = vunpack.c.l.b16 %v320
      %v472 = vunpack.c.l.b16 %v321
      %v473 = vunpack.c.l.b16 %v322
      %v474 = vunpack.c.l.b16 %v323
      %v475 = vunpack.c.l.b16 %v324
      %v476 = vunpack.c.l.b16 %v325
      %v477 = vunpack.c.l.b16 %v326
      %v478 = vunpack.c.l.b16 %v327
      %v479 = vunpack.c.l.b16 %v328
      %v480 = vunpack.c.l.b16 %v329
      %v481 = vunpack.c.l.b16 %v330
      %v482 = vunpack.c.l.b16 %v331
      %v483 = vunpack.c.l.b16 %v332
      %v484 = vunpack.c.l.b16 %v333
      %v485 = vunpack.c.l.b16 %v334
      %v486 = vunpack.c.l.b16 %v335
      %v487 = vunpack.c.l.b16 %v336
      %v488 = vunpack.c.l.b16 %v337
      %v489 = vunpack.c.l.b16 %v338
      %v490 = vunpack.c.l.b16 %v339
      %v491 = vunpack.c.l.b16 %v340
      %v492 = vunpack.c.l.b16 %v341
      %v493 = vunpack.c.l.b16 %v342
      %v494 = vunpack.c.l.b16 %v343
      %v495 = vunpack.c.l.b16 %v344
      %v496 = vunpack.c.l.b16 %v345
      %v497 = vunpack.c.l.b16 %v346
      %v498 = vunpack.c.l.b16 %v347
      %v499 = vunpack.c.l.b16 %v348
      %v500 = vunpack.c.l.b16 %v349
      %v501 = vpack.c.b16 %v438, %v437
      %v502 = vpack.c.b16 %v440, %v439
      %v503 = vpack.c.b16 %v442, %v441
      %v504 = vpack.c.b16 %v444, %v443
      %v505 = vpack.c.b16 %v446, %v445
      %v506 = vpack.c.b16 %v448, %v447
      %v507 = vpack.c.b16 %v450, %v449
      %v508 = vpack.c.b16 %v452, %v451
      %v509 = vpack.c.b16 %v454, %v453
      %v510 = vpack.c.b16 %v456, %v455
      %v511 = vpack.c.b16 %v458, %v457
      %v512 = vpack.c.b16 %v460, %v459
      %v513 = vpack.c.b16 %v462, %v461
      %v514 = vpack.c.b16 %v464, %v463
      %v515 = vpack.c.b16 %v466, %v465
      %v516 = vpack.c.b16 %v468, %v467
      %v517 = vpack.c.b16 %v470, %v469
      %v518 = vpack.c.b16 %v472, %v471
      %v519 = vpack.c.b16 %v474, %v473
      %v520 = vpack.c.b16 %v476, %v475
      %v521 = vpack.c.b16 %v478, %v477
      %v522 = vpack.c.b16 %v480, %v479
      %v523 = vpack.c.b16 %v482, %v481
      %v524 = vpack.c.b16 %v484, %v483
      %v525 = vpack.c.b16 %v486, %v485
      %v526 = vpack.c.b16 %v488, %v487
      %v527 = vpack.c.b16 %v490, %v489
      %v528 = vpack.c.b16 %v492, %v491
      %v529 = vpack.c.b16 %v494, %v493
      %v530 = vpack.c.b16 %v496, %v495
      %v531 = vpack.c.b16 %v498, %v497
      %v532 = vpack.c.b16 %v500, %v499
      %v581 = vunpack.c.l.b16 %v350
      %v582 = vunpack.c.l.b16 %v351
      %v583 = vunpack.c.l.b16 %v352
      %v584 = vunpack.c.l.b16 %v353
      %v585 = vunpack.c.l.b16 %v354
      %v586 = vunpack.c.l.b16 %v355
      %v587 = vunpack.c.l.b16 %v356
      %v588 = vunpack.c.l.b16 %v357
      %v589 = vunpack.c.l.b16 %v358
      %v590 = vunpack.c.l.b16 %v359
      %v591 = vunpack.c.l.b16 %v360
      %v592 = vunpack.c.l.b16 %v361
      %v593 = vunpack.c.l.b16 %v362
      %v594 = vunpack.c.l.b16 %v363
      %v595 = vunpack.c.l.b16 %v364
      %v596 = vunpack.c.l.b16 %v365
      %v597 = vpack.c.b16 %v582, %v581
      %v598 = vpack.c.b16 %v584, %v583
      %v599 = vpack.c.b16 %v586, %v585
      %v600 = vpack.c.b16 %v588, %v587
      %v601 = vpack.c.b16 %v590, %v589
      %v602 = vpack.c.b16 %v592, %v591
      %v603 = vpack.c.b16 %v594, %v593
      %v604 = vpack.c.b16 %v596, %v595
      %613 = vmatprep.subr.bf16.mxu0 0
      %614 = vmatpush1.bf16.msra.mxu0 %v604
      %615 = vmatprep.subr.bf16.mxu0 0
      %616 = vmatpush1.bf16.msra.mxu0 %v603
      %617 = vmatprep.subr.bf16.mxu0 0
      %618 = vmatpush1.bf16.msra.mxu0 %v602
      %619 = vmatprep.subr.bf16.mxu0 0
      %620 = vmatpush1.bf16.msra.mxu0 %v601
      %621 = vmatprep.subr.bf16.mxu0 0
      %622 = vmatpush1.bf16.msra.mxu0 %v600
      %623 = vmatprep.subr.bf16.mxu0 0
      %624 = vmatpush1.bf16.msra.mxu0 %v599
      %625 = vmatprep.subr.bf16.mxu0 0
      %626 = vmatpush1.bf16.msra.mxu0 %v598
      %627 = vmatprep.subr.bf16.mxu0 0
      %628 = vmatpush1.bf16.msra.mxu0 %v597
      %629 = vmatprep.subr.bf16.mxu0 0
      %630 = vmatpush2.bf16.msra.mxu0 0
      %631 = vmatprep.subr.bf16.mxu0 0
      %632 = vmatpush2.bf16.msra.mxu0 0
      %633 = vmatprep.subr.bf16.mxu0 0
      %634 = vmatpush2.bf16.msra.mxu0 0
      %635 = vmatprep.subr.bf16.mxu0 0
      %636 = vmatpush2.bf16.msra.mxu0 0
      %637 = vmatprep.subr.bf16.mxu0 0
      %638 = vmatpush2.bf16.msra.mxu0 0
      %639 = vmatprep.subr.bf16.mxu0 0
      %640 = vmatpush2.bf16.msra.mxu0 0
      %641 = vmatprep.subr.bf16.mxu0 0
      %642 = vmatpush2.bf16.msra.mxu0 0
      %643 = vmatprep.subr.bf16.mxu0 0
      %644 = vmatpush2.bf16.msra.mxu0 0
      %645 = vmatprep.mubr.bf16.mxu0 0
      %646 = vmatmul.mubr.bf16.gmra.mxu0 %v501
      %v647 = vpop.f32.mrf.mxu0
      %v648 = vadd.f32 %v371, %v647
      %v649 = vpop.f32.mrf.mxu0
      %v650 = vpop.f32.mrf.mxu0
      %v651 = vadd.f32 %v371, %v650
      %v652 = vpop.f32.mrf.mxu0
      %653 = vmatprep.mubr.bf16.mxu0 0
      %654 = vmatmul.mubr.bf16.gmra.mxu0 %v502
      %v655 = vpop.f32.mrf.mxu0
      %v656 = vadd.f32 %v371, %v655
      %v657 = vpop.f32.mrf.mxu0
      %v658 = vpop.f32.mrf.mxu0
      %v659 = vadd.f32 %v371, %v658
      %v660 = vpop.f32.mrf.mxu0
      %661 = vmatprep.mubr.bf16.mxu0 0
      %662 = vmatmul.mubr.bf16.gmra.mxu0 %v503
      %v663 = vpop.f32.mrf.mxu0
      %v664 = vadd.f32 %v371, %v663
      %v665 = vpop.f32.mrf.mxu0
      %v666 = vpop.f32.mrf.mxu0
      %v667 = vadd.f32 %v371, %v666
      %v668 = vpop.f32.mrf.mxu0
      %669 = vmatprep.mubr.bf16.mxu0 0
      %670 = vmatmul.mubr.bf16.gmra.mxu0 %v504
      %v671 = vpop.f32.mrf.mxu0
      %v672 = vadd.f32 %v371, %v671
      %v673 = vpop.f32.mrf.mxu0
      %v674 = vpop.f32.mrf.mxu0
      %v675 = vadd.f32 %v371, %v674
      %v676 = vpop.f32.mrf.mxu0
      %677 = vmatprep.mubr.bf16.mxu0 0
      %678 = vmatmul.mubr.bf16.gmra.mxu0 %v505
      %v679 = vpop.f32.mrf.mxu0
      %v680 = vadd.f32 %v371, %v679
      %v681 = vpop.f32.mrf.mxu0
      %v682 = vpop.f32.mrf.mxu0
      %v683 = vadd.f32 %v371, %v682
      %v684 = vpop.f32.mrf.mxu0
      %685 = vmatprep.mubr.bf16.mxu0 0
      %686 = vmatmul.mubr.bf16.gmra.mxu0 %v506
      %v687 = vpop.f32.mrf.mxu0
      %v688 = vadd.f32 %v371, %v687
      %v689 = vpop.f32.mrf.mxu0
      %v690 = vpop.f32.mrf.mxu0
      %v691 = vadd.f32 %v371, %v690
      %v692 = vpop.f32.mrf.mxu0
      %693 = vmatprep.mubr.bf16.mxu0 0
      %694 = vmatmul.mubr.bf16.gmra.mxu0 %v507
      %v695 = vpop.f32.mrf.mxu0
      %v696 = vadd.f32 %v371, %v695
      %v697 = vpop.f32.mrf.mxu0
      %v698 = vpop.f32.mrf.mxu0
      %v699 = vadd.f32 %v371, %v698
      %v700 = vpop.f32.mrf.mxu0
      %701 = vmatprep.mubr.bf16.mxu0 0
      %702 = vmatmul.mubr.bf16.gmra.mxu0 %v508
      %v703 = vpop.f32.mrf.mxu0
      %v704 = vadd.f32 %v371, %v703
      %v705 = vpop.f32.mrf.mxu0
      %v706 = vpop.f32.mrf.mxu0
      %v707 = vadd.f32 %v371, %v706
      %v708 = vpop.f32.mrf.mxu0
      %709 = vmatprep.mubr.bf16.mxu0 0
      %710 = vmatmul.mubr.bf16.gmra.mxu0 %v509
      %v711 = vpop.f32.mrf.mxu0
      %v712 = vadd.f32 %v371, %v711
      %v713 = vpop.f32.mrf.mxu0
      %v714 = vpop.f32.mrf.mxu0
      %v715 = vadd.f32 %v371, %v714
      %v716 = vpop.f32.mrf.mxu0
      %717 = vmatprep.mubr.bf16.mxu0 0
      %718 = vmatmul.mubr.bf16.gmra.mxu0 %v510
      %v719 = vpop.f32.mrf.mxu0
      %v720 = vadd.f32 %v371, %v719
      %v721 = vpop.f32.mrf.mxu0
      %v722 = vpop.f32.mrf.mxu0
      %v723 = vadd.f32 %v371, %v722
      %v724 = vpop.f32.mrf.mxu0
      %725 = vmatprep.mubr.bf16.mxu0 0
      %726 = vmatmul.mubr.bf16.gmra.mxu0 %v511
      %v727 = vpop.f32.mrf.mxu0
      %v728 = vadd.f32 %v371, %v727
      %v729 = vpop.f32.mrf.mxu0
      %v730 = vpop.f32.mrf.mxu0
      %v731 = vadd.f32 %v371, %v730
      %v732 = vpop.f32.mrf.mxu0
      %733 = vmatprep.mubr.bf16.mxu0 0
      %734 = vmatmul.mubr.bf16.gmra.mxu0 %v512
      %v735 = vpop.f32.mrf.mxu0
      %v736 = vadd.f32 %v371, %v735
      %v737 = vpop.f32.mrf.mxu0
      %v738 = vpop.f32.mrf.mxu0
      %v739 = vadd.f32 %v371, %v738
      %v740 = vpop.f32.mrf.mxu0
      %741 = vmatprep.mubr.bf16.mxu0 0
      %742 = vmatmul.mubr.bf16.gmra.mxu0 %v513
      %v743 = vpop.f32.mrf.mxu0
      %v744 = vadd.f32 %v371, %v743
      %v745 = vpop.f32.mrf.mxu0
      %v746 = vpop.f32.mrf.mxu0
      %v747 = vadd.f32 %v371, %v746
      %v748 = vpop.f32.mrf.mxu0
      %749 = vmatprep.mubr.bf16.mxu0 0
      %750 = vmatmul.mubr.bf16.gmra.mxu0 %v514
      %v751 = vpop.f32.mrf.mxu0
      %v752 = vadd.f32 %v371, %v751
      %v753 = vpop.f32.mrf.mxu0
      %v754 = vpop.f32.mrf.mxu0
      %v755 = vadd.f32 %v371, %v754
      %v756 = vpop.f32.mrf.mxu0
      %757 = vmatprep.mubr.bf16.mxu0 0
      %758 = vmatmul.mubr.bf16.gmra.mxu0 %v515
      %v759 = vpop.f32.mrf.mxu0
      %v760 = vadd.f32 %v371, %v759
      %v761 = vpop.f32.mrf.mxu0
      %v762 = vpop.f32.mrf.mxu0
      %v763 = vadd.f32 %v371, %v762
      %v764 = vpop.f32.mrf.mxu0
      %765 = vmatprep.mubr.bf16.mxu0 0
      %766 = vmatmul.mubr.bf16.gmra.mxu0 %v516
      %v767 = vpop.f32.mrf.mxu0
      %v768 = vadd.f32 %v371, %v767
      %v769 = vpop.f32.mrf.mxu0
      %v770 = vpop.f32.mrf.mxu0
      %v771 = vadd.f32 %v371, %v770
      %v772 = vpop.f32.mrf.mxu0
      %773 = vmatprep.mubr.bf16.mxu0 0
      %774 = vmatmul.mubr.bf16.gmra.mxu0 %v517
      %v775 = vpop.f32.mrf.mxu0
      %v776 = vadd.f32 %v371, %v775
      %v777 = vpop.f32.mrf.mxu0
      %v778 = vpop.f32.mrf.mxu0
      %v779 = vadd.f32 %v371, %v778
      %v780 = vpop.f32.mrf.mxu0
      %781 = vmatprep.mubr.bf16.mxu0 0
      %782 = vmatmul.mubr.bf16.gmra.mxu0 %v518
      %v783 = vpop.f32.mrf.mxu0
      %v784 = vadd.f32 %v371, %v783
      %v785 = vpop.f32.mrf.mxu0
      %v786 = vpop.f32.mrf.mxu0
      %v787 = vadd.f32 %v371, %v786
      %v788 = vpop.f32.mrf.mxu0
      %789 = vmatprep.mubr.bf16.mxu0 0
      %790 = vmatmul.mubr.bf16.gmra.mxu0 %v519
      %v791 = vpop.f32.mrf.mxu0
      %v792 = vadd.f32 %v371, %v791
      %v793 = vpop.f32.mrf.mxu0
      %v794 = vpop.f32.mrf.mxu0
      %v795 = vadd.f32 %v371, %v794
      %v796 = vpop.f32.mrf.mxu0
      %797 = vmatprep.mubr.bf16.mxu0 0
      %798 = vmatmul.mubr.bf16.gmra.mxu0 %v520
      %v799 = vpop.f32.mrf.mxu0
      %v800 = vadd.f32 %v371, %v799
      %v801 = vpop.f32.mrf.mxu0
      %v802 = vpop.f32.mrf.mxu0
      %v803 = vadd.f32 %v371, %v802
      %v804 = vpop.f32.mrf.mxu0
      %805 = vmatprep.mubr.bf16.mxu0 0
      %806 = vmatmul.mubr.bf16.gmra.mxu0 %v521
      %v807 = vpop.f32.mrf.mxu0
      %v808 = vadd.f32 %v371, %v807
      %v809 = vpop.f32.mrf.mxu0
      %v810 = vpop.f32.mrf.mxu0
      %v811 = vadd.f32 %v371, %v810
      %v812 = vpop.f32.mrf.mxu0
      %813 = vmatprep.mubr.bf16.mxu0 0
      %814 = vmatmul.mubr.bf16.gmra.mxu0 %v522
      %v815 = vpop.f32.mrf.mxu0
      %v816 = vadd.f32 %v371, %v815
      %v817 = vpop.f32.mrf.mxu0
      %v818 = vpop.f32.mrf.mxu0
      %v819 = vadd.f32 %v371, %v818
      %v820 = vpop.f32.mrf.mxu0
      %821 = vmatprep.mubr.bf16.mxu0 0
      %822 = vmatmul.mubr.bf16.gmra.mxu0 %v523
      %v823 = vpop.f32.mrf.mxu0
      %v824 = vadd.f32 %v371, %v823
      %v825 = vpop.f32.mrf.mxu0
      %v826 = vpop.f32.mrf.mxu0
      %v827 = vadd.f32 %v371, %v826
      %v828 = vpop.f32.mrf.mxu0
      %829 = vmatprep.mubr.bf16.mxu0 0
      %830 = vmatmul.mubr.bf16.gmra.mxu0 %v524
      %v831 = vpop.f32.mrf.mxu0
      %v832 = vadd.f32 %v371, %v831
      %v833 = vpop.f32.mrf.mxu0
      %v834 = vpop.f32.mrf.mxu0
      %v835 = vadd.f32 %v371, %v834
      %v836 = vpop.f32.mrf.mxu0
      %837 = vmatprep.mubr.bf16.mxu0 0
      %838 = vmatmul.mubr.bf16.gmra.mxu0 %v525
      %v839 = vpop.f32.mrf.mxu0
      %v840 = vadd.f32 %v371, %v839
      %v841 = vpop.f32.mrf.mxu0
      %v842 = vpop.f32.mrf.mxu0
      %v843 = vadd.f32 %v371, %v842
      %v844 = vpop.f32.mrf.mxu0
      %845 = vmatprep.mubr.bf16.mxu0 0
      %846 = vmatmul.mubr.bf16.gmra.mxu0 %v526
      %v847 = vpop.f32.mrf.mxu0
      %v848 = vadd.f32 %v371, %v847
      %v849 = vpop.f32.mrf.mxu0
      %v850 = vpop.f32.mrf.mxu0
      %v851 = vadd.f32 %v371, %v850
      %v852 = vpop.f32.mrf.mxu0
      %853 = vmatprep.mubr.bf16.mxu0 0
      %854 = vmatmul.mubr.bf16.gmra.mxu0 %v527
      %v855 = vpop.f32.mrf.mxu0
      %v856 = vadd.f32 %v371, %v855
      %v857 = vpop.f32.mrf.mxu0
      %v858 = vpop.f32.mrf.mxu0
      %v859 = vadd.f32 %v371, %v858
      %v860 = vpop.f32.mrf.mxu0
      %861 = vmatprep.mubr.bf16.mxu0 0
      %862 = vmatmul.mubr.bf16.gmra.mxu0 %v528
      %v863 = vpop.f32.mrf.mxu0
      %v864 = vadd.f32 %v371, %v863
      %v865 = vpop.f32.mrf.mxu0
      %v866 = vpop.f32.mrf.mxu0
      %v867 = vadd.f32 %v371, %v866
      %v868 = vpop.f32.mrf.mxu0
      %869 = vmatprep.mubr.bf16.mxu0 0
      %870 = vmatmul.mubr.bf16.gmra.mxu0 %v529
      %v871 = vpop.f32.mrf.mxu0
      %v872 = vadd.f32 %v371, %v871
      %v873 = vpop.f32.mrf.mxu0
      %v874 = vpop.f32.mrf.mxu0
      %v875 = vadd.f32 %v371, %v874
      %v876 = vpop.f32.mrf.mxu0
      %877 = vmatprep.mubr.bf16.mxu0 0
      %878 = vmatmul.mubr.bf16.gmra.mxu0 %v530
      %v879 = vpop.f32.mrf.mxu0
      %v880 = vadd.f32 %v371, %v879
      %v881 = vpop.f32.mrf.mxu0
      %v882 = vpop.f32.mrf.mxu0
      %v883 = vadd.f32 %v371, %v882
      %v884 = vpop.f32.mrf.mxu0
      %885 = vmatprep.mubr.bf16.mxu0 0
      %886 = vmatmul.mubr.bf16.gmra.mxu0 %v531
      %v887 = vpop.f32.mrf.mxu0
      %v888 = vadd.f32 %v371, %v887
      %v889 = vpop.f32.mrf.mxu0
      %v890 = vpop.f32.mrf.mxu0
      %v891 = vadd.f32 %v371, %v890
      %v892 = vpop.f32.mrf.mxu0
      %893 = vmatprep.mubr.bf16.mxu0 0
      %894 = vmatmul.mubr.bf16.gmra.mxu0 %v532
      %v895 = vpop.f32.mrf.mxu0
      %v896 = vadd.f32 %v371, %v895
      %v897 = vpop.f32.mrf.mxu0
      %v898 = vpop.f32.mrf.mxu0
      %v899 = vadd.f32 %v371, %v898
      %v900 = vpop.f32.mrf.mxu0
      %901 = vdwg.mxu0
      %vm902 = vcmp.ge.f32.partialorder %v648, 0.0
      %vm903 = vcmp.ge.f32.partialorder %v651, 0.0
      %vm904 = vcmp.ge.f32.partialorder %v656, 0.0
      %vm905 = vcmp.ge.f32.partialorder %v659, 0.0
      %vm906 = vcmp.ge.f32.partialorder %v664, 0.0
      %vm907 = vcmp.ge.f32.partialorder %v667, 0.0
      %vm908 = vcmp.ge.f32.partialorder %v672, 0.0
      %vm909 = vcmp.ge.f32.partialorder %v675, 0.0
      %vm910 = vcmp.ge.f32.partialorder %v680, 0.0
      %vm911 = vcmp.ge.f32.partialorder %v683, 0.0
      %vm912 = vcmp.ge.f32.partialorder %v688, 0.0
      %vm913 = vcmp.ge.f32.partialorder %v691, 0.0
      %vm914 = vcmp.ge.f32.partialorder %v696, 0.0
      %vm915 = vcmp.ge.f32.partialorder %v699, 0.0
      %vm916 = vcmp.ge.f32.partialorder %v704, 0.0
      %vm917 = vcmp.ge.f32.partialorder %v707, 0.0
      %vm918 = vcmp.ge.f32.partialorder %v712, 0.0
      %vm919 = vcmp.ge.f32.partialorder %v715, 0.0
      %vm920 = vcmp.ge.f32.partialorder %v720, 0.0
      %vm921 = vcmp.ge.f32.partialorder %v723, 0.0
      %vm922 = vcmp.ge.f32.partialorder %v728, 0.0
      %vm923 = vcmp.ge.f32.partialorder %v731, 0.0
      %vm924 = vcmp.ge.f32.partialorder %v736, 0.0
      %vm925 = vcmp.ge.f32.partialorder %v739, 0.0
      %vm926 = vcmp.ge.f32.partialorder %v744, 0.0
      %vm927 = vcmp.ge.f32.partialorder %v747, 0.0
      %vm928 = vcmp.ge.f32.partialorder %v752, 0.0
      %vm929 = vcmp.ge.f32.partialorder %v755, 0.0
      %vm930 = vcmp.ge.f32.partialorder %v760, 0.0
      %vm931 = vcmp.ge.f32.partialorder %v763, 0.0
      %vm932 = vcmp.ge.f32.partialorder %v768, 0.0
      %vm933 = vcmp.ge.f32.partialorder %v771, 0.0
      %vm934 = vcmp.ge.f32.partialorder %v776, 0.0
      %vm935 = vcmp.ge.f32.partialorder %v779, 0.0
      %vm936 = vcmp.ge.f32.partialorder %v784, 0.0
      %vm937 = vcmp.ge.f32.partialorder %v787, 0.0
      %vm938 = vcmp.ge.f32.partialorder %v792, 0.0
      %vm939 = vcmp.ge.f32.partialorder %v795, 0.0
      %vm940 = vcmp.ge.f32.partialorder %v800, 0.0
      %vm941 = vcmp.ge.f32.partialorder %v803, 0.0
      %vm942 = vcmp.ge.f32.partialorder %v808, 0.0
      %vm943 = vcmp.ge.f32.partialorder %v811, 0.0
      %vm944 = vcmp.ge.f32.partialorder %v816, 0.0
      %vm945 = vcmp.ge.f32.partialorder %v819, 0.0
      %vm946 = vcmp.ge.f32.partialorder %v824, 0.0
      %vm947 = vcmp.ge.f32.partialorder %v827, 0.0
      %vm948 = vcmp.ge.f32.partialorder %v832, 0.0
      %vm949 = vcmp.ge.f32.partialorder %v835, 0.0
      %vm950 = vcmp.ge.f32.partialorder %v840, 0.0
      %vm951 = vcmp.ge.f32.partialorder %v843, 0.0
      %vm952 = vcmp.ge.f32.partialorder %v848, 0.0
      %vm953 = vcmp.ge.f32.partialorder %v851, 0.0
      %vm954 = vcmp.ge.f32.partialorder %v856, 0.0
      %vm955 = vcmp.ge.f32.partialorder %v859, 0.0
      %vm956 = vcmp.ge.f32.partialorder %v864, 0.0
      %vm957 = vcmp.ge.f32.partialorder %v867, 0.0
      %vm958 = vcmp.ge.f32.partialorder %v872, 0.0
      %vm959 = vcmp.ge.f32.partialorder %v875, 0.0
      %vm960 = vcmp.ge.f32.partialorder %v880, 0.0
      %vm961 = vcmp.ge.f32.partialorder %v883, 0.0
      %vm962 = vcmp.ge.f32.partialorder %v888, 0.0
      %vm963 = vcmp.ge.f32.partialorder %v891, 0.0
      %vm964 = vcmp.ge.f32.partialorder %v896, 0.0
      %vm965 = vcmp.ge.f32.partialorder %v899, 0.0
      %v966 = vld [vmem:[%s274] sm:$0x1]
      %v968 = vlaneseq
      %v969 = vshrl.u32 %v968, 7
      %v970 = vsub.s32 0, %v969
      %v971 = vrot.slane %v966, %v970
      %v973 = vmul.f32 %v648, %v971
      %v974 = vmul.f32 %v651, %v971
      %v975 = vmul.f32 %v656, %v971
      %v976 = vmul.f32 %v659, %v971
      %v977 = vmul.f32 %v664, %v971
      %v978 = vmul.f32 %v667, %v971
      %v979 = vmul.f32 %v672, %v971
      %v980 = vmul.f32 %v675, %v971
      %v981 = vmul.f32 %v680, %v971
      %v982 = vmul.f32 %v683, %v971
      %v983 = vmul.f32 %v688, %v971
      %v984 = vmul.f32 %v691, %v971
      %v985 = vmul.f32 %v696, %v971
      %v986 = vmul.f32 %v699, %v971
      %v987 = vmul.f32 %v704, %v971
      %v988 = vmul.f32 %v707, %v971
      %v989 = vmul.f32 %v712, %v971
      %v990 = vmul.f32 %v715, %v971
      %v991 = vmul.f32 %v720, %v971
      %v992 = vmul.f32 %v723, %v971
      %v993 = vmul.f32 %v728, %v971
      %v994 = vmul.f32 %v731, %v971
      %v995 = vmul.f32 %v736, %v971
      %v996 = vmul.f32 %v739, %v971
      %v997 = vmul.f32 %v744, %v971
      %v998 = vmul.f32 %v747, %v971
      %v999 = vmul.f32 %v752, %v971
      %v1000 = vmul.f32 %v755, %v971
      %v1001 = vmul.f32 %v760, %v971
      %v1002 = vmul.f32 %v763, %v971
      %v1003 = vmul.f32 %v768, %v971
      %v1004 = vmul.f32 %v771, %v971
      %v1005 = vmul.f32 %v776, %v971
      %v1006 = vmul.f32 %v779, %v971
      %v1007 = vmul.f32 %v784, %v971
      %v1008 = vmul.f32 %v787, %v971
      %v1009 = vmul.f32 %v792, %v971
      %v1010 = vmul.f32 %v795, %v971
      %v1011 = vmul.f32 %v800, %v971
      %v1012 = vmul.f32 %v803, %v971
      %v1013 = vmul.f32 %v808, %v971
      %v1014 = vmul.f32 %v811, %v971
      %v1015 = vmul.f32 %v816, %v971
      %v1016 = vmul.f32 %v819, %v971
      %v1017 = vmul.f32 %v824, %v971
      %v1018 = vmul.f32 %v827, %v971
      %v1019 = vmul.f32 %v832, %v971
      %v1020 = vmul.f32 %v835, %v971
      %v1021 = vmul.f32 %v840, %v971
      %v1022 = vmul.f32 %v843, %v971
      %v1023 = vmul.f32 %v848, %v971
      %v1024 = vmul.f32 %v851, %v971
      %v1025 = vmul.f32 %v856, %v971
      %v1026 = vmul.f32 %v859, %v971
      %v1027 = vmul.f32 %v864, %v971
      %v1028 = vmul.f32 %v867, %v971
      %v1029 = vmul.f32 %v872, %v971
      %v1030 = vmul.f32 %v875, %v971
      %v1031 = vmul.f32 %v880, %v971
      %v1032 = vmul.f32 %v883, %v971
      %v1033 = vmul.f32 %v888, %v971
      %v1034 = vmul.f32 %v891, %v971
      %v1035 = vmul.f32 %v896, %v971
      %v1036 = vmul.f32 %v899, %v971
      %v1037 = vsel %vm902, %v648, %v973
      %v1038 = vsel %vm903, %v651, %v974
      %v1039 = vsel %vm904, %v656, %v975
      %v1040 = vsel %vm905, %v659, %v976
      %v1041 = vsel %vm906, %v664, %v977
      %v1042 = vsel %vm907, %v667, %v978
      %v1043 = vsel %vm908, %v672, %v979
      %v1044 = vsel %vm909, %v675, %v980
      %v1045 = vsel %vm910, %v680, %v981
      %v1046 = vsel %vm911, %v683, %v982
      %v1047 = vsel %vm912, %v688, %v983
      %v1048 = vsel %vm913, %v691, %v984
      %v1049 = vsel %vm914, %v696, %v985
      %v1050 = vsel %vm915, %v699, %v986
      %v1051 = vsel %vm916, %v704, %v987
      %v1052 = vsel %vm917, %v707, %v988
      %v1053 = vsel %vm918, %v712, %v989
      %v1054 = vsel %vm919, %v715, %v990
      %v1055 = vsel %vm920, %v720, %v991
      %v1056 = vsel %vm921, %v723, %v992
      %v1057 = vsel %vm922, %v728, %v993
      %v1058 = vsel %vm923, %v731, %v994
      %v1059 = vsel %vm924, %v736, %v995
      %v1060 = vsel %vm925, %v739, %v996
      %v1061 = vsel %vm926, %v744, %v997
      %v1062 = vsel %vm927, %v747, %v998
      %v1063 = vsel %vm928, %v752, %v999
      %v1064 = vsel %vm929, %v755, %v1000
      %v1065 = vsel %vm930, %v760, %v1001
      %v1066 = vsel %vm931, %v763, %v1002
      %v1067 = vsel %vm932, %v768, %v1003
      %v1068 = vsel %vm933, %v771, %v1004
      %v1069 = vsel %vm934, %v776, %v1005
      %v1070 = vsel %vm935, %v779, %v1006
      %v1071 = vsel %vm936, %v784, %v1007
      %v1072 = vsel %vm937, %v787, %v1008
      %v1073 = vsel %vm938, %v792, %v1009
      %v1074 = vsel %vm939, %v795, %v1010
      %v1075 = vsel %vm940, %v800, %v1011
      %v1076 = vsel %vm941, %v803, %v1012
      %v1077 = vsel %vm942, %v808, %v1013
      %v1078 = vsel %vm943, %v811, %v1014
      %v1079 = vsel %vm944, %v816, %v1015
      %v1080 = vsel %vm945, %v819, %v1016
      %v1081 = vsel %vm946, %v824, %v1017
      %v1082 = vsel %vm947, %v827, %v1018
      %v1083 = vsel %vm948, %v832, %v1019
      %v1084 = vsel %vm949, %v835, %v1020
      %v1085 = vsel %vm950, %v840, %v1021
      %v1086 = vsel %vm951, %v843, %v1022
      %v1087 = vsel %vm952, %v848, %v1023
      %v1088 = vsel %vm953, %v851, %v1024
      %v1089 = vsel %vm954, %v856, %v1025
      %v1090 = vsel %vm955, %v859, %v1026
      %v1091 = vsel %vm956, %v864, %v1027
      %v1092 = vsel %vm957, %v867, %v1028
      %v1093 = vsel %vm958, %v872, %v1029
      %v1094 = vsel %vm959, %v875, %v1030
      %v1095 = vsel %vm960, %v880, %v1031
      %v1096 = vsel %vm961, %v883, %v1032
      %v1097 = vsel %vm962, %v888, %v1033
      %v1098 = vsel %vm963, %v891, %v1034
      %v1099 = vsel %vm964, %v896, %v1035
      %v1100 = vsel %vm965, %v899, %v1036
      %v1101 = vpack.c.bf16 %v1038, %v1037
      %v1102 = vpack.c.bf16 %v1040, %v1039
      %v1103 = vpack.c.bf16 %v1042, %v1041
      %v1104 = vpack.c.bf16 %v1044, %v1043
      %v1105 = vpack.c.bf16 %v1046, %v1045
      %v1106 = vpack.c.bf16 %v1048, %v1047
      %v1107 = vpack.c.bf16 %v1050, %v1049
      %v1108 = vpack.c.bf16 %v1052, %v1051
      %v1109 = vpack.c.bf16 %v1054, %v1053
      %v1110 = vpack.c.bf16 %v1056, %v1055
      %v1111 = vpack.c.bf16 %v1058, %v1057
      %v1112 = vpack.c.bf16 %v1060, %v1059
      %v1113 = vpack.c.bf16 %v1062, %v1061
      %v1114 = vpack.c.bf16 %v1064, %v1063
      %v1115 = vpack.c.bf16 %v1066, %v1065
      %v1116 = vpack.c.bf16 %v1068, %v1067
      %v1117 = vpack.c.bf16 %v1070, %v1069
      %v1118 = vpack.c.bf16 %v1072, %v1071
      %v1119 = vpack.c.bf16 %v1074, %v1073
      %v1120 = vpack.c.bf16 %v1076, %v1075
      %v1121 = vpack.c.bf16 %v1078, %v1077
      %v1122 = vpack.c.bf16 %v1080, %v1079
      %v1123 = vpack.c.bf16 %v1082, %v1081
      %v1124 = vpack.c.bf16 %v1084, %v1083
      %v1125 = vpack.c.bf16 %v1086, %v1085
      %v1126 = vpack.c.bf16 %v1088, %v1087
      %v1127 = vpack.c.bf16 %v1090, %v1089
      %v1128 = vpack.c.bf16 %v1092, %v1091
      %v1129 = vpack.c.bf16 %v1094, %v1093
      %v1130 = vpack.c.bf16 %v1096, %v1095
      %v1131 = vpack.c.bf16 %v1098, %v1097
      %v1132 = vpack.c.bf16 %v1100, %v1099
      %v1165 = vunpack.c.l.b16 %v1101
      %v1166 = vunpack.c.h.b16 %v1101
      %v1167 = vunpack.c.l.b16 %v1102
      %v1168 = vunpack.c.h.b16 %v1102
      %v1169 = vunpack.c.l.b16 %v1103
      %v1170 = vunpack.c.h.b16 %v1103
      %v1171 = vunpack.c.l.b16 %v1104
      %v1172 = vunpack.c.h.b16 %v1104
      %v1173 = vunpack.c.l.b16 %v1105
      %v1174 = vunpack.c.h.b16 %v1105
      %v1175 = vunpack.c.l.b16 %v1106
      %v1176 = vunpack.c.h.b16 %v1106
      %v1177 = vunpack.c.l.b16 %v1107
      %v1178 = vunpack.c.h.b16 %v1107
      %v1179 = vunpack.c.l.b16 %v1108
      %v1180 = vunpack.c.h.b16 %v1108
      %v1181 = vunpack.c.l.b16 %v1109
      %v1182 = vunpack.c.h.b16 %v1109
      %v1183 = vunpack.c.l.b16 %v1110
      %v1184 = vunpack.c.h.b16 %v1110
      %v1185 = vunpack.c.l.b16 %v1111
      %v1186 = vunpack.c.h.b16 %v1111
      %v1187 = vunpack.c.l.b16 %v1112
      %v1188 = vunpack.c.h.b16 %v1112
      %v1189 = vunpack.c.l.b16 %v1113
      %v1190 = vunpack.c.h.b16 %v1113
      %v1191 = vunpack.c.l.b16 %v1114
      %v1192 = vunpack.c.h.b16 %v1114
      %v1193 = vunpack.c.l.b16 %v1115
      %v1194 = vunpack.c.h.b16 %v1115
      %v1195 = vunpack.c.l.b16 %v1116
      %v1196 = vunpack.c.h.b16 %v1116
      %v1197 = vunpack.c.l.b16 %v1117
      %v1198 = vunpack.c.h.b16 %v1117
      %v1199 = vunpack.c.l.b16 %v1118
      %v1200 = vunpack.c.h.b16 %v1118
      %v1201 = vunpack.c.l.b16 %v1119
      %v1202 = vunpack.c.h.b16 %v1119
      %v1203 = vunpack.c.l.b16 %v1120
      %v1204 = vunpack.c.h.b16 %v1120
      %v1205 = vunpack.c.l.b16 %v1121
      %v1206 = vunpack.c.h.b16 %v1121
      %v1207 = vunpack.c.l.b16 %v1122
      %v1208 = vunpack.c.h.b16 %v1122
      %v1209 = vunpack.c.l.b16 %v1123
      %v1210 = vunpack.c.h.b16 %v1123
      %v1211 = vunpack.c.l.b16 %v1124
      %v1212 = vunpack.c.h.b16 %v1124
      %v1213 = vunpack.c.l.b16 %v1125
      %v1214 = vunpack.c.h.b16 %v1125
      %v1215 = vunpack.c.l.b16 %v1126
      %v1216 = vunpack.c.h.b16 %v1126
      %v1217 = vunpack.c.l.b16 %v1127
      %v1218 = vunpack.c.h.b16 %v1127
      %v1219 = vunpack.c.l.b16 %v1128
      %v1220 = vunpack.c.h.b16 %v1128
      %v1221 = vunpack.c.l.b16 %v1129
      %v1222 = vunpack.c.h.b16 %v1129
      %v1223 = vunpack.c.l.b16 %v1130
      %v1224 = vunpack.c.h.b16 %v1130
      %v1225 = vunpack.c.l.b16 %v1131
      %v1226 = vunpack.c.h.b16 %v1131
      %v1227 = vunpack.c.l.b16 %v1132
      %v1228 = vunpack.c.h.b16 %v1132
      %v1229 = vpack.c.b16 %v1165, %v1165
      %v1230 = vpack.c.b16 %v1166, %v1166
      %v1231 = vpack.c.b16 %v1167, %v1167
      %v1232 = vpack.c.b16 %v1168, %v1168
      %v1233 = vpack.c.b16 %v1169, %v1169
      %v1234 = vpack.c.b16 %v1170, %v1170
      %v1235 = vpack.c.b16 %v1171, %v1171
      %v1236 = vpack.c.b16 %v1172, %v1172
      %v1237 = vpack.c.b16 %v1173, %v1173
      %v1238 = vpack.c.b16 %v1174, %v1174
      %v1239 = vpack.c.b16 %v1175, %v1175
      %v1240 = vpack.c.b16 %v1176, %v1176
      %v1241 = vpack.c.b16 %v1177, %v1177
      %v1242 = vpack.c.b16 %v1178, %v1178
      %v1243 = vpack.c.b16 %v1179, %v1179
      %v1244 = vpack.c.b16 %v1180, %v1180
      %v1245 = vpack.c.b16 %v1181, %v1181
      %v1246 = vpack.c.b16 %v1182, %v1182
      %v1247 = vpack.c.b16 %v1183, %v1183
      %v1248 = vpack.c.b16 %v1184, %v1184
      %v1249 = vpack.c.b16 %v1185, %v1185
      %v1250 = vpack.c.b16 %v1186, %v1186
      %v1251 = vpack.c.b16 %v1187, %v1187
      %v1252 = vpack.c.b16 %v1188, %v1188
      %v1253 = vpack.c.b16 %v1189, %v1189
      %v1254 = vpack.c.b16 %v1190, %v1190
      %v1255 = vpack.c.b16 %v1191, %v1191
      %v1256 = vpack.c.b16 %v1192, %v1192
      %v1257 = vpack.c.b16 %v1193, %v1193
      %v1258 = vpack.c.b16 %v1194, %v1194
      %v1259 = vpack.c.b16 %v1195, %v1195
      %v1260 = vpack.c.b16 %v1196, %v1196
      %v1261 = vpack.c.b16 %v1197, %v1197
      %v1262 = vpack.c.b16 %v1198, %v1198
      %v1263 = vpack.c.b16 %v1199, %v1199
      %v1264 = vpack.c.b16 %v1200, %v1200
      %v1265 = vpack.c.b16 %v1201, %v1201
      %v1266 = vpack.c.b16 %v1202, %v1202
      %v1267 = vpack.c.b16 %v1203, %v1203
      %v1268 = vpack.c.b16 %v1204, %v1204
      %v1269 = vpack.c.b16 %v1205, %v1205
      %v1270 = vpack.c.b16 %v1206, %v1206
      %v1271 = vpack.c.b16 %v1207, %v1207
      %v1272 = vpack.c.b16 %v1208, %v1208
      %v1273 = vpack.c.b16 %v1209, %v1209
      %v1274 = vpack.c.b16 %v1210, %v1210
      %v1275 = vpack.c.b16 %v1211, %v1211
      %v1276 = vpack.c.b16 %v1212, %v1212
      %v1277 = vpack.c.b16 %v1213, %v1213
      %v1278 = vpack.c.b16 %v1214, %v1214
      %v1279 = vpack.c.b16 %v1215, %v1215
      %v1280 = vpack.c.b16 %v1216, %v1216
      %v1281 = vpack.c.b16 %v1217, %v1217
      %v1282 = vpack.c.b16 %v1218, %v1218
      %v1283 = vpack.c.b16 %v1219, %v1219
      %v1284 = vpack.c.b16 %v1220, %v1220
      %v1285 = vpack.c.b16 %v1221, %v1221
      %v1286 = vpack.c.b16 %v1222, %v1222
      %v1287 = vpack.c.b16 %v1223, %v1223
      %v1288 = vpack.c.b16 %v1224, %v1224
      %v1289 = vpack.c.b16 %v1225, %v1225
      %v1290 = vpack.c.b16 %v1226, %v1226
      %v1291 = vpack.c.b16 %v1227, %v1227
      %v1292 = vpack.c.b16 %v1228, %v1228
      %1357 = vst [vmem:[%s283] sm:$0xf] %v1229
      %1358 = vst [vmem:[%s283 + $0x4] sm:$0xf] %v1230
      %1359 = vst [vmem:[%s283 + $0x8] sm:$0xf] %v1231
      %1360 = vst [vmem:[%s283 + $0xc] sm:$0xf] %v1232
      %1361 = vst [vmem:[%s283 + $0x10] sm:$0xf] %v1233
      %1362 = vst [vmem:[%s283 + $0x14] sm:$0xf] %v1234
      %1363 = vst [vmem:[%s283 + $0x18] sm:$0xf] %v1235
      %1364 = vst [vmem:[%s283 + $0x1c] sm:$0xf] %v1236
      %1365 = vst [vmem:[%s283 + $0x20] sm:$0xf] %v1237
      %1366 = vst [vmem:[%s283 + $0x24] sm:$0xf] %v1238
      %1367 = vst [vmem:[%s283 + $0x28] sm:$0xf] %v1239
      %1368 = vst [vmem:[%s283 + $0x2c] sm:$0xf] %v1240
      %1369 = vst [vmem:[%s283 + $0x30] sm:$0xf] %v1241
      %1370 = vst [vmem:[%s283 + $0x34] sm:$0xf] %v1242
      %1371 = vst [vmem:[%s283 + $0x38] sm:$0xf] %v1243
      %1372 = vst [vmem:[%s283 + $0x3c] sm:$0xf] %v1244
      %1373 = vst [vmem:[%s283 + $0x40] sm:$0xf] %v1245
      %1374 = vst [vmem:[%s283 + $0x44] sm:$0xf] %v1246
      %1375 = vst [vmem:[%s283 + $0x48] sm:$0xf] %v1247
      %1376 = vst [vmem:[%s283 + $0x4c] sm:$0xf] %v1248
      %1377 = vst [vmem:[%s283 + $0x50] sm:$0xf] %v1249
      %1378 = vst [vmem:[%s283 + $0x54] sm:$0xf] %v1250
      %1379 = vst [vmem:[%s283 + $0x58] sm:$0xf] %v1251
      %1380 = vst [vmem:[%s283 + $0x5c] sm:$0xf] %v1252
      %1381 = vst [vmem:[%s283 + $0x60] sm:$0xf] %v1253
      %1382 = vst [vmem:[%s283 + $0x64] sm:$0xf] %v1254
      %1383 = vst [vmem:[%s283 + $0x68] sm:$0xf] %v1255
      %1384 = vst [vmem:[%s283 + $0x6c] sm:$0xf] %v1256
      %1385 = vst [vmem:[%s283 + $0x70] sm:$0xf] %v1257
      %1386 = vst [vmem:[%s283 + $0x74] sm:$0xf] %v1258
      %1387 = vst [vmem:[%s283 + $0x78] sm:$0xf] %v1259
      %1388 = vst [vmem:[%s283 + $0x7c] sm:$0xf] %v1260
      %1389 = vst [vmem:[%s283 + $0x80] sm:$0xf] %v1261
      %1390 = vst [vmem:[%s283 + $0x84] sm:$0xf] %v1262
      %1391 = vst [vmem:[%s283 + $0x88] sm:$0xf] %v1263
      %1392 = vst [vmem:[%s283 + $0x8c] sm:$0xf] %v1264
      %1393 = vst [vmem:[%s283 + $0x90] sm:$0xf] %v1265
      %1394 = vst [vmem:[%s283 + $0x94] sm:$0xf] %v1266
      %1395 = vst [vmem:[%s283 + $0x98] sm:$0xf] %v1267
      %1396 = vst [vmem:[%s283 + $0x9c] sm:$0xf] %v1268
      %1397 = vst [vmem:[%s283 + $0xa0] sm:$0xf] %v1269
      %1398 = vst [vmem:[%s283 + $0xa4] sm:$0xf] %v1270
      %1399 = vst [vmem:[%s283 + $0xa8] sm:$0xf] %v1271
      %1400 = vst [vmem:[%s283 + $0xac] sm:$0xf] %v1272
      %1401 = vst [vmem:[%s283 + $0xb0] sm:$0xf] %v1273
      %1402 = vst [vmem:[%s283 + $0xb4] sm:$0xf] %v1274
      %1403 = vst [vmem:[%s283 + $0xb8] sm:$0xf] %v1275
      %1404 = vst [vmem:[%s283 + $0xbc] sm:$0xf] %v1276
      %1405 = vst [vmem:[%s283 + $0xc0] sm:$0xf] %v1277
      %1406 = vst [vmem:[%s283 + $0xc4] sm:$0xf] %v1278
      %1407 = vst [vmem:[%s283 + $0xc8] sm:$0xf] %v1279
      %1408 = vst [vmem:[%s283 + $0xcc] sm:$0xf] %v1280
      %1409 = vst [vmem:[%s283 + $0xd0] sm:$0xf] %v1281
      %1410 = vst [vmem:[%s283 + $0xd4] sm:$0xf] %v1282
      %1411 = vst [vmem:[%s283 + $0xd8] sm:$0xf] %v1283
      %1412 = vst [vmem:[%s283 + $0xdc] sm:$0xf] %v1284
      %1413 = vst [vmem:[%s283 + $0xe0] sm:$0xf] %v1285
      %1414 = vst [vmem:[%s283 + $0xe4] sm:$0xf] %v1286
      %1415 = vst [vmem:[%s283 + $0xe8] sm:$0xf] %v1287
      %1416 = vst [vmem:[%s283 + $0xec] sm:$0xf] %v1288
      %1417 = vst [vmem:[%s283 + $0xf0] sm:$0xf] %v1289
      %1418 = vst [vmem:[%s283 + $0xf4] sm:$0xf] %v1290
      %1419 = vst [vmem:[%s283 + $0xf8] sm:$0xf] %v1291
      %1420 = vst [vmem:[%s283 + $0xfc] sm:$0xf] %v1292
      %s1421 = smul.u32 64, %s20
      %p1422 = scmp.lt.s32.totalorder %s19, 2
      %s1423 = scalar_select %p1422, %s19, 2
      %p1424 = scmp.lt.s32.totalorder %s1421, 255
      %s1425 = scalar_select %p1424, %s1421, 255
      %s1426 = smul.addr %s1423, 256
      %s1427 = sadd.s32 %s1425, %s1426
      %s1428 = smul.addr %s1427, 4
      %s1429 = scalar_lea.vmem %s4, %s1428
      // Predicated region
      $region37: #{classsr_forward.9} parent=35 // pred_check
        %p1430 = pneg %p153
      $region38: #{classsr_forward.9} parent=35 // pred_check_branch
        %1432 = sbr.rel (%p1430) target = $region40
      $region39: #{classsr_forward.9} parent=35 // pred_region
        %s1433 = smul.u32 64, %s20
      $region40: #{classsr_forward.9} parent=35 // pred_fallthru
        _
    $region36: #{classsr_forward.9} parent=5 // pred_fallthru
      _
    %p1434 = scmp.le.s32.totalorder 2, %s10
    // Predicated region
    $region41: #{classsr_forward.9} parent=5 // pred_check
      %p1435 = pneg %p1434
    $region42: #{classsr_forward.9} parent=5 // pred_check_branch
      %1437 = sbr.rel (%p1435) target = $region44
    $region43: #{classsr_forward.9} parent=5 // pred_region
      %s1438 = ssub.s32 %s10, 2
      // Predicated region
      $region45: #{classsr_forward.9} parent=43 // pred_check
        %p1439 = pneg %p159
      $region46: #{classsr_forward.9} parent=43 // pred_check_branch
        %1441 = sbr.rel (%p1439) target = $region48
      $region47: #{classsr_forward.9} parent=43 // pred_region
        %s1442 = smul.u32 64, %s22
        %p1443 = scmp.lt.s32.totalorder %s21, 2
        %s1444 = scalar_select %p1443, %s21, 2
        %p1445 = scmp.lt.s32.totalorder %s1442, 255
        %s1446 = scalar_select %p1445, %s1442, 255
        %s1447 = smul.addr %s1444, 256
        %s1448 = sadd.s32 %s1446, %s1447
        %s1449 = smul.addr %s1448, 4
        %s1450 = scalar_lea.vmem %s4, %s1449
      $region48: #{classsr_forward.9} parent=43 // pred_fallthru
        _
    $region44: #{classsr_forward.9} parent=5 // pred_fallthru
      _
  $region6: #{classsr_forward.9} parent=0 // loop_footer
    %s14 = sadd.s32 1, %s10
  $region7: #{classsr_forward.9} parent=0 // loop_footer_branch
    %9 = sbr.rel target = $region3
  $region8: #{classsr_forward.9} parent=0 // loop_exit
    _

// kernel: classsr_forward.15
$region0: #{classsr_forward.15}
  #allocation0 [shape = 'u32[]', space=smem, size = 0x4, offset = 0x4, fixed_abs, tag = 'smem constant byte address 0x4 - core index']
  #allocation1 [shape = 'u32[144,128]{1,0:T(1,128)}', space=vmem, size = 0x12000, scoped, tag = 'internal scratch']
  %s0 = inlined_call_operand.vmem [shape: bf16[3,2048,512], index: 0, kind: input, shape index: {}]
  %s1 = inlined_call_operand.vmem [shape: bf16[3,512,128], index: 1, kind: input, shape index: {}]
  %s2 = inlined_call_operand.vmem [shape: f32[3,1,128], index: 2, kind: input, shape index: {}]
  %s3 = inlined_call_operand.vmem [shape: f32[3,1,128], index: 3, kind: input, shape index: {}]
  %s4 = inlined_call_operand.vmem [shape: f32[3,2048,128], index: 4, kind: output, shape index: {}]
  %s5 = sld [smem:[#allocation0]]
  $region49: #{classsr_forward.15} parent=0
    _
  %s7 = ssub.s32 1, %s5
  %s8 = scalar_select 0, %s7, %s5
  loop: start=0, step=1, limit=14
  $region2: #{classsr_forward.15} parent=0 // loop_pre_header
    _
  $region3: #{classsr_forward.15} parent=0 // loop_header
    %s10 = sphi 0, %s14
    %p11 = scmp.ge.s32.totalorder %s10, 14
    %s17 = sphi 0, %s29
    %s18 = sphi 0, %s25
    %s19 = sphi 0, %s17
    %s20 = sphi 0, %s18
    %s21 = sphi 0, %s19
    %s22 = sphi 0, %s20
    %s34 = sphi 0, %s36
    %s37 = sphi 0, %s34
    %s38 = sphi 0, %s37
    %s54 = sphi 0, %s38
    %s60 = sphi 0, %s62
    %s63 = sphi 0, %s60
    %s64 = sphi 0, %s63
    %s80 = sphi 0, %s64
    %s86 = sphi 0, %s88
    %s89 = sphi 0, %s86
    %s90 = sphi 0, %s89
    %s106 = sphi 0, %s90
    %s112 = sphi 0, %s114
    %s115 = sphi 0, %s112
    %s116 = sphi 0, %s115
    %s132 = sphi 0, %s116
    %s140 = sphi 0, %s142
    %s143 = sphi 0, %s140
    %s144 = sphi 0, %s143
    %s160 = sphi 0, %s144
  $region4: #{classsr_forward.15} parent=0 // loop_header_branch
    %13 = sbr.rel (%p11) target = $region8
  $region5: #{classsr_forward.15} parent=0 // loop_body
    %s15 = ssub.s32 %s10, 1
    %s16 = ssub.s32 %s10, 2
    %s23 = sadd.s32 1, %s18
    %p24 = scmp.ge.s32.totalorder %s23, 4
    %s25 = scalar_select %p24, 0, %s23
    %s26 = sadd.s32 1, %s17
    %s27 = scalar_select %p24, %s26, %s17
    %p28 = scmp.ge.s32.totalorder %s27, 3
    %s29 = scalar_select %p28, 0, %s27
    %s30 = ssub.s32 %s17, %s29
    %s31 = ssub.s32 %s18, %s25
    %s32 = sor.u32 %s30, %s31
    %p33 = scmp.eq.s32.totalorder %s32, 0
    %s35 = sadd.s32 %s34, 1
    %s36 = scalar_select %p33, %s34, %s35
    %p39 = pneg %p33
    %p40 = scmp.eq.s32.totalorder %s10, 11
    %p41 = por %p39, %p40
    %p42 = scmp.ne.s32.totalorder %s34, %s37
    %p43 = scmp.eq.s32.totalorder %s10, 0
    %p44 = por %p42, %p43
    %p45 = scmp.ne.s32.totalorder %s34, %s37
    %p46 = scmp.eq.s32.totalorder %s15, 11
    %p47 = por %p45, %p46
    %p48 = scmp.ne.s32.totalorder %s37, %s38
    %p49 = scmp.eq.s32.totalorder %s15, 0
    %p50 = por %p48, %p49
    %p51 = scmp.ne.s32.totalorder %s37, %s38
    %p52 = scmp.eq.s32.totalorder %s16, 11
    %p53 = por %p51, %p52
    %p55 = scmp.ne.s32.totalorder %s38, %s54
    %p56 = scmp.eq.s32.totalorder %s16, 0
    %p57 = por %p55, %p56
    %s58 = ssub.s32 %s17, %s29
    %p59 = scmp.eq.s32.totalorder %s58, 0
    %s61 = sadd.s32 %s60, 1
    %s62 = scalar_select %p59, %s60, %s61
    %p65 = pneg %p59
    %p66 = scmp.eq.s32.totalorder %s10, 11
    %p67 = por %p65, %p66
    %p68 = scmp.ne.s32.totalorder %s60, %s63
    %p69 = scmp.eq.s32.totalorder %s10, 0
    %p70 = por %p68, %p69
    %p71 = scmp.ne.s32.totalorder %s60, %s63
    %p72 = scmp.eq.s32.totalorder %s15, 11
    %p73 = por %p71, %p72
    %p74 = scmp.ne.s32.totalorder %s63, %s64
    %p75 = scmp.eq.s32.totalorder %s15, 0
    %p76 = por %p74, %p75
    %p77 = scmp.ne.s32.totalorder %s63, %s64
    %p78 = scmp.eq.s32.totalorder %s16, 11
    %p79 = por %p77, %p78
    %p81 = scmp.ne.s32.totalorder %s64, %s80
    %p82 = scmp.eq.s32.totalorder %s16, 0
    %p83 = por %p81, %p82
    %s84 = ssub.s32 %s17, %s29
    %p85 = scmp.eq.s32.totalorder %s84, 0
    %s87 = sadd.s32 %s86, 1
    %s88 = scalar_select %p85, %s86, %s87
    %p91 = pneg %p85
    %p92 = scmp.eq.s32.totalorder %s10, 11
    %p93 = por %p91, %p92
    %p94 = scmp.ne.s32.totalorder %s86, %s89
    %p95 = scmp.eq.s32.totalorder %s10, 0
    %p96 = por %p94, %p95
    %p97 = scmp.ne.s32.totalorder %s86, %s89
    %p98 = scmp.eq.s32.totalorder %s15, 11
    %p99 = por %p97, %p98
    %p100 = scmp.ne.s32.totalorder %s89, %s90
    %p101 = scmp.eq.s32.totalorder %s15, 0
    %p102 = por %p100, %p101
    %p103 = scmp.ne.s32.totalorder %s89, %s90
    %p104 = scmp.eq.s32.totalorder %s16, 11
    %p105 = por %p103, %p104
    %p107 = scmp.ne.s32.totalorder %s90, %s106
    %p108 = scmp.eq.s32.totalorder %s16, 0
    %p109 = por %p107, %p108
    %s110 = ssub.s32 %s17, %s29
    %p111 = scmp.eq.s32.totalorder %s110, 0
    %s113 = sadd.s32 %s112, 1
    %s114 = scalar_select %p111, %s112, %s113
    %p117 = pneg %p111
    %p118 = scmp.eq.s32.totalorder %s10, 11
    %p119 = por %p117, %p118
    %p120 = scmp.ne.s32.totalorder %s112, %s115
    %p121 = scmp.eq.s32.totalorder %s10, 0
    %p122 = por %p120, %p121
    %p123 = scmp.ne.s32.totalorder %s112, %s115
    %p124 = scmp.eq.s32.totalorder %s15, 11
    %p125 = por %p123, %p124
    %p126 = scmp.ne.s32.totalorder %s115, %s116
    %p127 = scmp.eq.s32.totalorder %s15, 0
    %p128 = por %p126, %p127
    %p129 = scmp.ne.s32.totalorder %s115, %s116
    %p130 = scmp.eq.s32.totalorder %s16, 11
    %p131 = por %p129, %p130
    %p133 = scmp.ne.s32.totalorder %s116, %s132
    %p134 = scmp.eq.s32.totalorder %s16, 0
    %p135 = por %p133, %p134
    %s136 = ssub.s32 %s17, %s29
    %s137 = ssub.s32 %s18, %s25
    %s138 = sor.u32 %s136, %s137
    %p139 = scmp.eq.s32.totalorder %s138, 0
    %s141 = sadd.s32 %s140, 1
    %s142 = scalar_select %p139, %s140, %s141
    %p145 = pneg %p139
    %p146 = scmp.eq.s32.totalorder %s10, 11
    %p147 = por %p145, %p146
    %p148 = scmp.ne.s32.totalorder %s140, %s143
    %p149 = scmp.eq.s32.totalorder %s10, 0
    %p150 = por %p148, %p149
    %p151 = scmp.ne.s32.totalorder %s140, %s143
    %p152 = scmp.eq.s32.totalorder %s15, 11
    %p153 = por %p151, %p152
    %p154 = scmp.ne.s32.totalorder %s143, %s144
    %p155 = scmp.eq.s32.totalorder %s15, 0
    %p156 = por %p154, %p155
    %p157 = scmp.ne.s32.totalorder %s143, %s144
    %p158 = scmp.eq.s32.totalorder %s16, 11
    %p159 = por %p157, %p158
    %p161 = scmp.ne.s32.totalorder %s144, %s160
    %p162 = scmp.eq.s32.totalorder %s16, 0
    %p163 = por %p161, %p162
    %p164 = scmp.le.s32.totalorder 1, %s10
    %p165 = scmp.lt.s32.totalorder %s10, 13
    %p166 = pnand %p164, %p165
    %p167 = pneg %p166
    // Predicated region
    $region9: #{classsr_forward.15} parent=5 // pred_check
      _
    $region10: #{classsr_forward.15} parent=5 // pred_check_branch
      %169 = sbr.rel (%p166) target = $region12
    $region11: #{classsr_forward.15} parent=5 // pred_region
      %s170 = ssub.s32 %s10, 1
    $region12: #{classsr_forward.15} parent=5 // pred_fallthru
      _
    %p171 = scmp.lt.s32.totalorder %s10, 12
    // Predicated region
    $region13: #{classsr_forward.15} parent=5 // pred_check
      %p172 = pneg %p171
    $region14: #{classsr_forward.15} parent=5 // pred_check_branch
      %174 = sbr.rel (%p172) target = $region16
    $region15: #{classsr_forward.15} parent=5 // pred_region
      // Predicated region
      $region17: #{classsr_forward.15} parent=15 // pred_check
        %p175 = pneg %p44
      $region18: #{classsr_forward.15} parent=15 // pred_check_branch
        %177 = sbr.rel (%p175) target = $region20
      $region19: #{classsr_forward.15} parent=15 // pred_region
        %s178 = smul.u32 64, %s18
        %p179 = scmp.lt.s32.totalorder %s17, 2
        %s180 = scalar_select %p179, %s17, 2
        %p181 = scmp.lt.s32.totalorder %s178, 255
        %s182 = scalar_select %p181, %s178, 255
        %s183 = smul.addr %s182, 4
        %s184 = smul.addr %s180, 1024
        %s185 = sadd.s32 %s183, %s184
        %s186 = smul.addr %s185, 4
        %s187 = scalar_lea.vmem %s0, %s186
        %s188 = smul.u32 64, %s18
      $region20: #{classsr_forward.15} parent=15 // pred_fallthru
        _
      // Predicated region
      $region21: #{classsr_forward.15} parent=15 // pred_check
        %p189 = pneg %p70
      $region22: #{classsr_forward.15} parent=15 // pred_check_branch
        %191 = sbr.rel (%p189) target = $region24
      $region23: #{classsr_forward.15} parent=15 // pred_region
        %p192 = scmp.lt.s32.totalorder %s17, 2
        %s193 = scalar_select %p192, %s17, 2
        %s194 = smul.addr %s193, 64
        %s195 = smul.addr %s194, 4
        %s196 = scalar_lea.vmem %s1, %s195
      $region24: #{classsr_forward.15} parent=15 // pred_fallthru
        _
      // Predicated region
      $region25: #{classsr_forward.15} parent=15 // pred_check
        %p197 = pneg %p96
      $region26: #{classsr_forward.15} parent=15 // pred_check_branch
        %199 = sbr.rel (%p197) target = $region28
      $region27: #{classsr_forward.15} parent=15 // pred_region
        %p200 = scmp.lt.s32.totalorder %s17, 2
        %s201 = scalar_select %p200, %s17, 2
        %s202 = scalar_lea.vmem %s2, %s201
      $region28: #{classsr_forward.15} parent=15 // pred_fallthru
        _
      // Predicated region
      $region29: #{classsr_forward.15} parent=15 // pred_check
        %p203 = pneg %p122
      $region30: #{classsr_forward.15} parent=15 // pred_check_branch
        %205 = sbr.rel (%p203) target = $region32
      $region31: #{classsr_forward.15} parent=15 // pred_region
        %p206 = scmp.lt.s32.totalorder %s17, 2
        %s207 = scalar_select %p206, %s17, 2
        %s208 = scalar_lea.vmem %s3, %s207
      $region32: #{classsr_forward.15} parent=15 // pred_fallthru
        _
    $region16: #{classsr_forward.15} parent=5 // pred_fallthru
      _
    %p209 = scmp.le.s32.totalorder 1, %s10
    %p210 = scmp.lt.s32.totalorder %s10, 13
    %p211 = pnand %p209, %p210
    %p212 = pneg %p211
    // Predicated region
    $region33: #{classsr_forward.15} parent=5 // pred_check
      _
    $region34: #{classsr_forward.15} parent=5 // pred_check_branch
      %214 = sbr.rel (%p211) target = $region36
    $region35: #{classsr_forward.15} parent=5 // pred_region
      %s215 = ssub.s32 %s10, 1
      %s216 = smul.u32 64, %s20
      %p217 = scmp.lt.s32.totalorder %s19, 2
      %s218 = scalar_select %p217, %s19, 2
      %p219 = scmp.lt.s32.totalorder %s216, 255
      %s220 = scalar_select %p219, %s216, 255
      %s221 = smul.addr %s220, 4
      %s222 = smul.addr %s218, 1024
      %s223 = sadd.s32 %s221, %s222
      %s224 = smul.addr %s223, 4
      %s225 = scalar_lea.vmem %s0, %s224
      %p226 = pneg %p50
      %p227 = pneg %p47
      %p228 = scmp.lt.s32.totalorder %s19, 2
      %s229 = scalar_select %p228, %s19, 2
      %s230 = smul.addr %s229, 64
      %s231 = smul.addr %s230, 4
      %s232 = scalar_lea.vmem %s1, %s231
      %p233 = pneg %p76
      %p234 = pneg %p73
      %p235 = scmp.lt.s32.totalorder %s19, 2
      %s236 = scalar_select %p235, %s19, 2
      %s237 = scalar_lea.vmem %s2, %s236
      %p238 = pneg %p102
      %p239 = pneg %p99
      %p240 = scmp.lt.s32.totalorder %s19, 2
      %s241 = scalar_select %p240, %s19, 2
      %s242 = scalar_lea.vmem %s3, %s241
      %p243 = pneg %p128
      %p244 = pneg %p125
      %p245 = pneg %p156
      %p246 = pneg %p153
      %s247 = smul.u32 64, %s20
      %p248 = scmp.lt.s32.totalorder %s19, 2
      %s249 = scalar_select %p248, %s19, 2
      %p250 = scmp.lt.s32.totalorder %s247, 255
      %s251 = scalar_select %p250, %s247, 255
      %s252 = smul.addr %s249, 256
      %s253 = sadd.s32 %s251, %s252
      %s254 = smul.addr %s253, 8
      %s255 = scalar_lea.vmem %s4, %s254
      %s256 = smul.u32 64, %s20
      %p257 = scmp.lt.s32.totalorder %s19, 2
      %s258 = scalar_select %p257, %s19, 2
      %p259 = scmp.lt.s32.totalorder %s256, 255
      %s260 = scalar_select %p259, %s256, 255
      %s261 = smul.addr %s260, 4
      %s262 = smul.addr %s258, 1024
      %s263 = sadd.s32 %s261, %s262
      %s264 = smul.addr %s263, 4
      %s265 = scalar_lea.vmem %s0, %s264
      %s266 = smul.u32 64, %s20
      %p267 = scmp.lt.s32.totalorder %s19, 2
      %s268 = scalar_select %p267, %s19, 2
      %s269 = smul.addr %s268, 64
      %s270 = smul.addr %s269, 4
      %s271 = scalar_lea.vmem %s1, %s270
      %p272 = scmp.lt.s32.totalorder %s19, 2
      %s273 = scalar_select %p272, %s19, 2
      %s274 = scalar_lea.vmem %s2, %s273
      %p275 = scmp.lt.s32.totalorder %s19, 2
      %s276 = scalar_select %p275, %s19, 2
      %s277 = scalar_lea.vmem %s3, %s276
      %s278 = smul.u32 64, %s20
      %p279 = scmp.lt.s32.totalorder %s19, 2
      %s280 = scalar_select %p279, %s19, 2
      %p281 = scmp.lt.s32.totalorder %s278, 255
      %s282 = scalar_select %p281, %s278, 255
      %s283 = smul.addr %s280, 256
      %s284 = sadd.s32 %s282, %s283
      %s285 = smul.addr %s284, 8
      %s286 = scalar_lea.vmem %s4, %s285
      %s287 = smul.u32 64, %s20
      %v289 = vld [vmem:[%s265] sm:$0xff]
      %v290 = vld [vmem:[%s265 + $0x8] sm:$0xff]
      %v291 = vld [vmem:[%s265 + $0x10] sm:$0xff]
      %v292 = vld [vmem:[%s265 + $0x18] sm:$0xff]
      %v293 = vld [vmem:[%s265 + $0x20] sm:$0xff]
      %v294 = vld [vmem:[%s265 + $0x28] sm:$0xff]
      %v295 = vld [vmem:[%s265 + $0x30] sm:$0xff]
      %v296 = vld [vmem:[%s265 + $0x38] sm:$0xff]
      %v297 = vld [vmem:[%s265 + $0x40] sm:$0xff]
      %v298 = vld [vmem:[%s265 + $0x48] sm:$0xff]
      %v299 = vld [vmem:[%s265 + $0x50] sm:$0xff]
      %v300 = vld [vmem:[%s265 + $0x58] sm:$0xff]
      %v301 = vld [vmem:[%s265 + $0x60] sm:$0xff]
      %v302 = vld [vmem:[%s265 + $0x68] sm:$0xff]
      %v303 = vld [vmem:[%s265 + $0x70] sm:$0xff]
      %v304 = vld [vmem:[%s265 + $0x78] sm:$0xff]
      %v305 = vld [vmem:[%s265 + $0x80] sm:$0xff]
      %v306 = vld [vmem:[%s265 + $0x88] sm:$0xff]
      %v307 = vld [vmem:[%s265 + $0x90] sm:$0xff]
      %v308 = vld [vmem:[%s265 + $0x98] sm:$0xff]
      %v309 = vld [vmem:[%s265 + $0xa0] sm:$0xff]
      %v310 = vld [vmem:[%s265 + $0xa8] sm:$0xff]
      %v311 = vld [vmem:[%s265 + $0xb0] sm:$0xff]
      %v312 = vld [vmem:[%s265 + $0xb8] sm:$0xff]
      %v313 = vld [vmem:[%s265 + $0xc0] sm:$0xff]
      %v314 = vld [vmem:[%s265 + $0xc8] sm:$0xff]
      %v315 = vld [vmem:[%s265 + $0xd0] sm:$0xff]
      %v316 = vld [vmem:[%s265 + $0xd8] sm:$0xff]
      %v317 = vld [vmem:[%s265 + $0xe0] sm:$0xff]
      %v318 = vld [vmem:[%s265 + $0xe8] sm:$0xff]
      %v319 = vld [vmem:[%s265 + $0xf0] sm:$0xff]
      %v320 = vld [vmem:[%s265 + $0xf8] sm:$0xff]
      %v321 = vld [vmem:[%s265 + $0x100] sm:$0xff]
      %v322 = vld [vmem:[%s265 + $0x108] sm:$0xff]
      %v323 = vld [vmem:[%s265 + $0x110] sm:$0xff]
      %v324 = vld [vmem:[%s265 + $0x118] sm:$0xff]
      %v325 = vld [vmem:[%s265 + $0x120] sm:$0xff]
      %v326 = vld [vmem:[%s265 + $0x128] sm:$0xff]
      %v327 = vld [vmem:[%s265 + $0x130] sm:$0xff]
      %v328 = vld [vmem:[%s265 + $0x138] sm:$0xff]
      %v329 = vld [vmem:[%s265 + $0x140] sm:$0xff]
      %v330 = vld [vmem:[%s265 + $0x148] sm:$0xff]
      %v331 = vld [vmem:[%s265 + $0x150] sm:$0xff]
      %v332 = vld [vmem:[%s265 + $0x158] sm:$0xff]
      %v333 = vld [vmem:[%s265 + $0x160] sm:$0xff]
      %v334 = vld [vmem:[%s265 + $0x168] sm:$0xff]
      %v335 = vld [vmem:[%s265 + $0x170] sm:$0xff]
      %v336 = vld [vmem:[%s265 + $0x178] sm:$0xff]
      %v337 = vld [vmem:[%s265 + $0x180] sm:$0xff]
      %v338 = vld [vmem:[%s265 + $0x188] sm:$0xff]
      %v339 = vld [vmem:[%s265 + $0x190] sm:$0xff]
      %v340 = vld [vmem:[%s265 + $0x198] sm:$0xff]
      %v341 = vld [vmem:[%s265 + $0x1a0] sm:$0xff]
      %v342 = vld [vmem:[%s265 + $0x1a8] sm:$0xff]
      %v343 = vld [vmem:[%s265 + $0x1b0] sm:$0xff]
      %v344 = vld [vmem:[%s265 + $0x1b8] sm:$0xff]
      %v345 = vld [vmem:[%s265 + $0x1c0] sm:$0xff]
      %v346 = vld [vmem:[%s265 + $0x1c8] sm:$0xff]
      %v347 = vld [vmem:[%s265 + $0x1d0] sm:$0xff]
      %v348 = vld [vmem:[%s265 + $0x1d8] sm:$0xff]
      %v349 = vld [vmem:[%s265 + $0x1e0] sm:$0xff]
      %v350 = vld [vmem:[%s265 + $0x1e8] sm:$0xff]
      %v351 = vld [vmem:[%s265 + $0x1f0] sm:$0xff]
      %v352 = vld [vmem:[%s265 + $0x1f8] sm:$0xff]
      %v353 = vld [vmem:[%s265 + $0x200] sm:$0xff]
      %v354 = vld [vmem:[%s265 + $0x208] sm:$0xff]
      %v355 = vld [vmem:[%s265 + $0x210] sm:$0xff]
      %v356 = vld [vmem:[%s265 + $0x218] sm:$0xff]
      %v357 = vld [vmem:[%s265 + $0x220] sm:$0xff]
      %v358 = vld [vmem:[%s265 + $0x228] sm:$0xff]
      %v359 = vld [vmem:[%s265 + $0x230] sm:$0xff]
      %v360 = vld [vmem:[%s265 + $0x238] sm:$0xff]
      %v361 = vld [vmem:[%s265 + $0x240] sm:$0xff]
      %v362 = vld [vmem:[%s265 + $0x248] sm:$0xff]
      %v363 = vld [vmem:[%s265 + $0x250] sm:$0xff]
      %v364 = vld [vmem:[%s265 + $0x258] sm:$0xff]
      %v365 = vld [vmem:[%s265 + $0x260] sm:$0xff]
      %v366 = vld [vmem:[%s265 + $0x268] sm:$0xff]
      %v367 = vld [vmem:[%s265 + $0x270] sm:$0xff]
      %v368 = vld [vmem:[%s265 + $0x278] sm:$0xff]
      %v369 = vld [vmem:[%s265 + $0x280] sm:$0xff]
      %v370 = vld [vmem:[%s265 + $0x288] sm:$0xff]
      %v371 = vld [vmem:[%s265 + $0x290] sm:$0xff]
      %v372 = vld [vmem:[%s265 + $0x298] sm:$0xff]
      %v373 = vld [vmem:[%s265 + $0x2a0] sm:$0xff]
      %v374 = vld [vmem:[%s265 + $0x2a8] sm:$0xff]
      %v375 = vld [vmem:[%s265 + $0x2b0] sm:$0xff]
      %v376 = vld [vmem:[%s265 + $0x2b8] sm:$0xff]
      %v377 = vld [vmem:[%s265 + $0x2c0] sm:$0xff]
      %v378 = vld [vmem:[%s265 + $0x2c8] sm:$0xff]
      %v379 = vld [vmem:[%s265 + $0x2d0] sm:$0xff]
      %v380 = vld [vmem:[%s265 + $0x2d8] sm:$0xff]
      %v381 = vld [vmem:[%s265 + $0x2e0] sm:$0xff]
      %v382 = vld [vmem:[%s265 + $0x2e8] sm:$0xff]
      %v383 = vld [vmem:[%s265 + $0x2f0] sm:$0xff]
      %v384 = vld [vmem:[%s265 + $0x2f8] sm:$0xff]
      %v385 = vld [vmem:[%s265 + $0x300] sm:$0xff]
      %v386 = vld [vmem:[%s265 + $0x308] sm:$0xff]
      %v387 = vld [vmem:[%s265 + $0x310] sm:$0xff]
      %v388 = vld [vmem:[%s265 + $0x318] sm:$0xff]
      %v389 = vld [vmem:[%s265 + $0x320] sm:$0xff]
      %v390 = vld [vmem:[%s265 + $0x328] sm:$0xff]
      %v391 = vld [vmem:[%s265 + $0x330] sm:$0xff]
      %v392 = vld [vmem:[%s265 + $0x338] sm:$0xff]
      %v393 = vld [vmem:[%s265 + $0x340] sm:$0xff]
      %v394 = vld [vmem:[%s265 + $0x348] sm:$0xff]
      %v395 = vld [vmem:[%s265 + $0x350] sm:$0xff]
      %v396 = vld [vmem:[%s265 + $0x358] sm:$0xff]
      %v397 = vld [vmem:[%s265 + $0x360] sm:$0xff]
      %v398 = vld [vmem:[%s265 + $0x368] sm:$0xff]
      %v399 = vld [vmem:[%s265 + $0x370] sm:$0xff]
      %v400 = vld [vmem:[%s265 + $0x378] sm:$0xff]
      %v401 = vld [vmem:[%s265 + $0x380] sm:$0xff]
      %v402 = vld [vmem:[%s265 + $0x388] sm:$0xff]
      %v403 = vld [vmem:[%s265 + $0x390] sm:$0xff]
      %v404 = vld [vmem:[%s265 + $0x398] sm:$0xff]
      %v405 = vld [vmem:[%s265 + $0x3a0] sm:$0xff]
      %v406 = vld [vmem:[%s265 + $0x3a8] sm:$0xff]
      %v407 = vld [vmem:[%s265 + $0x3b0] sm:$0xff]
      %v408 = vld [vmem:[%s265 + $0x3b8] sm:$0xff]
      %v409 = vld [vmem:[%s265 + $0x3c0] sm:$0xff]
      %v410 = vld [vmem:[%s265 + $0x3c8] sm:$0xff]
      %v411 = vld [vmem:[%s265 + $0x3d0] sm:$0xff]
      %v412 = vld [vmem:[%s265 + $0x3d8] sm:$0xff]
      %v413 = vld [vmem:[%s265 + $0x3e0] sm:$0xff]
      %v414 = vld [vmem:[%s265 + $0x3e8] sm:$0xff]
      %v415 = vld [vmem:[%s265 + $0x3f0] sm:$0xff]
      %v416 = vld [vmem:[%s265 + $0x3f8] sm:$0xff]
      %v417 = vld [vmem:[%s271] sm:$0xf]
      %v418 = vld [vmem:[%s271 + $0x4] sm:$0xf]
      %v419 = vld [vmem:[%s271 + $0x8] sm:$0xf]
      %v420 = vld [vmem:[%s271 + $0xc] sm:$0xf]
      %v421 = vld [vmem:[%s271 + $0x10] sm:$0xf]
      %v422 = vld [vmem:[%s271 + $0x14] sm:$0xf]
      %v423 = vld [vmem:[%s271 + $0x18] sm:$0xf]
      %v424 = vld [vmem:[%s271 + $0x1c] sm:$0xf]
      %v425 = vld [vmem:[%s271 + $0x20] sm:$0xf]
      %v426 = vld [vmem:[%s271 + $0x24] sm:$0xf]
      %v427 = vld [vmem:[%s271 + $0x28] sm:$0xf]
      %v428 = vld [vmem:[%s271 + $0x2c] sm:$0xf]
      %v429 = vld [vmem:[%s271 + $0x30] sm:$0xf]
      %v430 = vld [vmem:[%s271 + $0x34] sm:$0xf]
      %v431 = vld [vmem:[%s271 + $0x38] sm:$0xf]
      %v432 = vld [vmem:[%s271 + $0x3c] sm:$0xf]
      %v433 = vld [vmem:[%s271 + $0x40] sm:$0xf]
      %v434 = vld [vmem:[%s271 + $0x44] sm:$0xf]
      %v435 = vld [vmem:[%s271 + $0x48] sm:$0xf]
      %v436 = vld [vmem:[%s271 + $0x4c] sm:$0xf]
      %v437 = vld [vmem:[%s271 + $0x50] sm:$0xf]
      %v438 = vld [vmem:[%s271 + $0x54] sm:$0xf]
      %v439 = vld [vmem:[%s271 + $0x58] sm:$0xf]
      %v440 = vld [vmem:[%s271 + $0x5c] sm:$0xf]
      %v441 = vld [vmem:[%s271 + $0x60] sm:$0xf]
      %v442 = vld [vmem:[%s271 + $0x64] sm:$0xf]
      %v443 = vld [vmem:[%s271 + $0x68] sm:$0xf]
      %v444 = vld [vmem:[%s271 + $0x6c] sm:$0xf]
      %v445 = vld [vmem:[%s271 + $0x70] sm:$0xf]
      %v446 = vld [vmem:[%s271 + $0x74] sm:$0xf]
      %v447 = vld [vmem:[%s271 + $0x78] sm:$0xf]
      %v448 = vld [vmem:[%s271 + $0x7c] sm:$0xf]
      %v449 = vld [vmem:[%s271 + $0x80] sm:$0xf]
      %v450 = vld [vmem:[%s271 + $0x84] sm:$0xf]
      %v451 = vld [vmem:[%s271 + $0x88] sm:$0xf]
      %v452 = vld [vmem:[%s271 + $0x8c] sm:$0xf]
      %v453 = vld [vmem:[%s271 + $0x90] sm:$0xf]
      %v454 = vld [vmem:[%s271 + $0x94] sm:$0xf]
      %v455 = vld [vmem:[%s271 + $0x98] sm:$0xf]
      %v456 = vld [vmem:[%s271 + $0x9c] sm:$0xf]
      %v457 = vld [vmem:[%s271 + $0xa0] sm:$0xf]
      %v458 = vld [vmem:[%s271 + $0xa4] sm:$0xf]
      %v459 = vld [vmem:[%s271 + $0xa8] sm:$0xf]
      %v460 = vld [vmem:[%s271 + $0xac] sm:$0xf]
      %v461 = vld [vmem:[%s271 + $0xb0] sm:$0xf]
      %v462 = vld [vmem:[%s271 + $0xb4] sm:$0xf]
      %v463 = vld [vmem:[%s271 + $0xb8] sm:$0xf]
      %v464 = vld [vmem:[%s271 + $0xbc] sm:$0xf]
      %v465 = vld [vmem:[%s271 + $0xc0] sm:$0xf]
      %v466 = vld [vmem:[%s271 + $0xc4] sm:$0xf]
      %v467 = vld [vmem:[%s271 + $0xc8] sm:$0xf]
      %v468 = vld [vmem:[%s271 + $0xcc] sm:$0xf]
      %v469 = vld [vmem:[%s271 + $0xd0] sm:$0xf]
      %v470 = vld [vmem:[%s271 + $0xd4] sm:$0xf]
      %v471 = vld [vmem:[%s271 + $0xd8] sm:$0xf]
      %v472 = vld [vmem:[%s271 + $0xdc] sm:$0xf]
      %v473 = vld [vmem:[%s271 + $0xe0] sm:$0xf]
      %v474 = vld [vmem:[%s271 + $0xe4] sm:$0xf]
      %v475 = vld [vmem:[%s271 + $0xe8] sm:$0xf]
      %v476 = vld [vmem:[%s271 + $0xec] sm:$0xf]
      %v477 = vld [vmem:[%s271 + $0xf0] sm:$0xf]
      %v478 = vld [vmem:[%s271 + $0xf4] sm:$0xf]
      %v479 = vld [vmem:[%s271 + $0xf8] sm:$0xf]
      %v480 = vld [vmem:[%s271 + $0xfc] sm:$0xf]
      %v481 = vld [vmem:[%s274] sm:$0x1]
      %v483 = vlaneseq
      %v484 = vshrl.u32 %v483, 7
      %v485 = vsub.s32 0, %v484
      %v486 = vrot.slane %v481, %v485
      %v616 = vunpack.c.l.b16 %v289
      %v617 = vunpack.c.h.b16 %v289
      %v618 = vunpack.c.l.b16 %v290
      %v619 = vunpack.c.h.b16 %v290
      %v620 = vunpack.c.l.b16 %v291
      %v621 = vunpack.c.h.b16 %v291
      %v622 = vunpack.c.l.b16 %v292
      %v623 = vunpack.c.h.b16 %v292
      %v624 = vunpack.c.l.b16 %v293
      %v625 = vunpack.c.h.b16 %v293
      %v626 = vunpack.c.l.b16 %v294
      %v627 = vunpack.c.h.b16 %v294
      %v628 = vunpack.c.l.b16 %v295
      %v629 = vunpack.c.h.b16 %v295
      %v630 = vunpack.c.l.b16 %v296
      %v631 = vunpack.c.h.b16 %v296
      %v632 = vunpack.c.l.b16 %v297
      %v633 = vunpack.c.h.b16 %v297
      %v634 = vunpack.c.l.b16 %v298
      %v635 = vunpack.c.h.b16 %v298
      %v636 = vunpack.c.l.b16 %v299
      %v637 = vunpack.c.h.b16 %v299
      %v638 = vunpack.c.l.b16 %v300
      %v639 = vunpack.c.h.b16 %v300
      %v640 = vunpack.c.l.b16 %v301
      %v641 = vunpack.c.h.b16 %v301
      %v642 = vunpack.c.l.b16 %v302
      %v643 = vunpack.c.h.b16 %v302
      %v644 = vunpack.c.l.b16 %v303
      %v645 = vunpack.c.h.b16 %v303
      %v646 = vunpack.c.l.b16 %v304
      %v647 = vunpack.c.h.b16 %v304
      %v648 = vunpack.c.l.b16 %v305
      %v649 = vunpack.c.h.b16 %v305
      %v650 = vunpack.c.l.b16 %v306
      %v651 = vunpack.c.h.b16 %v306
      %v652 = vunpack.c.l.b16 %v307
      %v653 = vunpack.c.h.b16 %v307
      %v654 = vunpack.c.l.b16 %v308
      %v655 = vunpack.c.h.b16 %v308
      %v656 = vunpack.c.l.b16 %v309
      %v657 = vunpack.c.h.b16 %v309
      %v658 = vunpack.c.l.b16 %v310
      %v659 = vunpack.c.h.b16 %v310
      %v660 = vunpack.c.l.b16 %v311
      %v661 = vunpack.c.h.b16 %v311
      %v662 = vunpack.c.l.b16 %v312
      %v663 = vunpack.c.h.b16 %v312
      %v664 = vunpack.c.l.b16 %v313
      %v665 = vunpack.c.h.b16 %v313
      %v666 = vunpack.c.l.b16 %v314
      %v667 = vunpack.c.h.b16 %v314
      %v668 = vunpack.c.l.b16 %v315
      %v669 = vunpack.c.h.b16 %v315
      %v670 = vunpack.c.l.b16 %v316
      %v671 = vunpack.c.h.b16 %v316
      %v672 = vunpack.c.l.b16 %v317
      %v673 = vunpack.c.h.b16 %v317
      %v674 = vunpack.c.l.b16 %v318
      %v675 = vunpack.c.h.b16 %v318
      %v676 = vunpack.c.l.b16 %v319
      %v677 = vunpack.c.h.b16 %v319
      %v678 = vunpack.c.l.b16 %v320
      %v679 = vunpack.c.h.b16 %v320
      %v680 = vunpack.c.l.b16 %v321
      %v681 = vunpack.c.h.b16 %v321
      %v682 = vunpack.c.l.b16 %v322
      %v683 = vunpack.c.h.b16 %v322
      %v684 = vunpack.c.l.b16 %v323
      %v685 = vunpack.c.h.b16 %v323
      %v686 = vunpack.c.l.b16 %v324
      %v687 = vunpack.c.h.b16 %v324
      %v688 = vunpack.c.l.b16 %v325
      %v689 = vunpack.c.h.b16 %v325
      %v690 = vunpack.c.l.b16 %v326
      %v691 = vunpack.c.h.b16 %v326
      %v692 = vunpack.c.l.b16 %v327
      %v693 = vunpack.c.h.b16 %v327
      %v694 = vunpack.c.l.b16 %v328
      %v695 = vunpack.c.h.b16 %v328
      %v696 = vunpack.c.l.b16 %v329
      %v697 = vunpack.c.h.b16 %v329
      %v698 = vunpack.c.l.b16 %v330
      %v699 = vunpack.c.h.b16 %v330
      %v700 = vunpack.c.l.b16 %v331
      %v701 = vunpack.c.h.b16 %v331
      %v702 = vunpack.c.l.b16 %v332
      %v703 = vunpack.c.h.b16 %v332
      %v704 = vunpack.c.l.b16 %v333
      %v705 = vunpack.c.h.b16 %v333
      %v706 = vunpack.c.l.b16 %v334
      %v707 = vunpack.c.h.b16 %v334
      %v708 = vunpack.c.l.b16 %v335
      %v709 = vunpack.c.h.b16 %v335
      %v710 = vunpack.c.l.b16 %v336
      %v711 = vunpack.c.h.b16 %v336
      %v712 = vunpack.c.l.b16 %v337
      %v713 = vunpack.c.h.b16 %v337
      %v714 = vunpack.c.l.b16 %v338
      %v715 = vunpack.c.h.b16 %v338
      %v716 = vunpack.c.l.b16 %v339
      %v717 = vunpack.c.h.b16 %v339
      %v718 = vunpack.c.l.b16 %v340
      %v719 = vunpack.c.h.b16 %v340
      %v720 = vunpack.c.l.b16 %v341
      %v721 = vunpack.c.h.b16 %v341
      %v722 = vunpack.c.l.b16 %v342
      %v723 = vunpack.c.h.b16 %v342
      %v724 = vunpack.c.l.b16 %v343
      %v725 = vunpack.c.h.b16 %v343
      %v726 = vunpack.c.l.b16 %v344
      %v727 = vunpack.c.h.b16 %v344
      %v728 = vunpack.c.l.b16 %v345
      %v729 = vunpack.c.h.b16 %v345
      %v730 = vunpack.c.l.b16 %v346
      %v731 = vunpack.c.h.b16 %v346
      %v732 = vunpack.c.l.b16 %v347
      %v733 = vunpack.c.h.b16 %v347
      %v734 = vunpack.c.l.b16 %v348
      %v735 = vunpack.c.h.b16 %v348
      %v736 = vunpack.c.l.b16 %v349
      %v737 = vunpack.c.h.b16 %v349
      %v738 = vunpack.c.l.b16 %v350
      %v739 = vunpack.c.h.b16 %v350
      %v740 = vunpack.c.l.b16 %v351
      %v741 = vunpack.c.h.b16 %v351
      %v742 = vunpack.c.l.b16 %v352
      %v743 = vunpack.c.h.b16 %v352
      %v744 = vunpack.c.l.b16 %v353
      %v745 = vunpack.c.h.b16 %v353
      %v746 = vunpack.c.l.b16 %v354
      %v747 = vunpack.c.h.b16 %v354
      %v748 = vunpack.c.l.b16 %v355
      %v749 = vunpack.c.h.b16 %v355
      %v750 = vunpack.c.l.b16 %v356
      %v751 = vunpack.c.h.b16 %v356
      %v752 = vunpack.c.l.b16 %v357
      %v753 = vunpack.c.h.b16 %v357
      %v754 = vunpack.c.l.b16 %v358
      %v755 = vunpack.c.h.b16 %v358
      %v756 = vunpack.c.l.b16 %v359
      %v757 = vunpack.c.h.b16 %v359
      %v758 = vunpack.c.l.b16 %v360
      %v759 = vunpack.c.h.b16 %v360
      %v760 = vunpack.c.l.b16 %v361
      %v761 = vunpack.c.h.b16 %v361
      %v762 = vunpack.c.l.b16 %v362
      %v763 = vunpack.c.h.b16 %v362
      %v764 = vunpack.c.l.b16 %v363
      %v765 = vunpack.c.h.b16 %v363
      %v766 = vunpack.c.l.b16 %v364
      %v767 = vunpack.c.h.b16 %v364
      %v768 = vunpack.c.l.b16 %v365
      %v769 = vunpack.c.h.b16 %v365
      %v770 = vunpack.c.l.b16 %v366
      %v771 = vunpack.c.h.b16 %v366
      %v772 = vunpack.c.l.b16 %v367
      %v773 = vunpack.c.h.b16 %v367
      %v774 = vunpack.c.l.b16 %v368
      %v775 = vunpack.c.h.b16 %v368
      %v776 = vunpack.c.l.b16 %v369
      %v777 = vunpack.c.h.b16 %v369
      %v778 = vunpack.c.l.b16 %v370
      %v779 = vunpack.c.h.b16 %v370
      %v780 = vunpack.c.l.b16 %v371
      %v781 = vunpack.c.h.b16 %v371
      %v782 = vunpack.c.l.b16 %v372
      %v783 = vunpack.c.h.b16 %v372
      %v784 = vunpack.c.l.b16 %v373
      %v785 = vunpack.c.h.b16 %v373
      %v786 = vunpack.c.l.b16 %v374
      %v787 = vunpack.c.h.b16 %v374
      %v788 = vunpack.c.l.b16 %v375
      %v789 = vunpack.c.h.b16 %v375
      %v790 = vunpack.c.l.b16 %v376
      %v791 = vunpack.c.h.b16 %v376
      %v792 = vunpack.c.l.b16 %v377
      %v793 = vunpack.c.h.b16 %v377
      %v794 = vunpack.c.l.b16 %v378
      %v795 = vunpack.c.h.b16 %v378
      %v796 = vunpack.c.l.b16 %v379
      %v797 = vunpack.c.h.b16 %v379
      %v798 = vunpack.c.l.b16 %v380
      %v799 = vunpack.c.h.b16 %v380
      %v800 = vunpack.c.l.b16 %v381
      %v801 = vunpack.c.h.b16 %v381
      %v802 = vunpack.c.l.b16 %v382
      %v803 = vunpack.c.h.b16 %v382
      %v804 = vunpack.c.l.b16 %v383
      %v805 = vunpack.c.h.b16 %v383
      %v806 = vunpack.c.l.b16 %v384
      %v807 = vunpack.c.h.b16 %v384
      %v808 = vunpack.c.l.b16 %v385
      %v809 = vunpack.c.h.b16 %v385
      %v810 = vunpack.c.l.b16 %v386
      %v811 = vunpack.c.h.b16 %v386
      %v812 = vunpack.c.l.b16 %v387
      %v813 = vunpack.c.h.b16 %v387
      %v814 = vunpack.c.l.b16 %v388
      %v815 = vunpack.c.h.b16 %v388
      %v816 = vunpack.c.l.b16 %v389
      %v817 = vunpack.c.h.b16 %v389
      %v818 = vunpack.c.l.b16 %v390
      %v819 = vunpack.c.h.b16 %v390
      %v820 = vunpack.c.l.b16 %v391
      %v821 = vunpack.c.h.b16 %v391
      %v822 = vunpack.c.l.b16 %v392
      %v823 = vunpack.c.h.b16 %v392
      %v824 = vunpack.c.l.b16 %v393
      %v825 = vunpack.c.h.b16 %v393
      %v826 = vunpack.c.l.b16 %v394
      %v827 = vunpack.c.h.b16 %v394
      %v828 = vunpack.c.l.b16 %v395
      %v829 = vunpack.c.h.b16 %v395
      %v830 = vunpack.c.l.b16 %v396
      %v831 = vunpack.c.h.b16 %v396
      %v832 = vunpack.c.l.b16 %v397
      %v833 = vunpack.c.h.b16 %v397
      %v834 = vunpack.c.l.b16 %v398
      %v835 = vunpack.c.h.b16 %v398
      %v836 = vunpack.c.l.b16 %v399
      %v837 = vunpack.c.h.b16 %v399
      %v838 = vunpack.c.l.b16 %v400
      %v839 = vunpack.c.h.b16 %v400
      %v840 = vunpack.c.l.b16 %v401
      %v841 = vunpack.c.h.b16 %v401
      %v842 = vunpack.c.l.b16 %v402
      %v843 = vunpack.c.h.b16 %v402
      %v844 = vunpack.c.l.b16 %v403
      %v845 = vunpack.c.h.b16 %v403
      %v846 = vunpack.c.l.b16 %v404
      %v847 = vunpack.c.h.b16 %v404
      %v848 = vunpack.c.l.b16 %v405
      %v849 = vunpack.c.h.b16 %v405
      %v850 = vunpack.c.l.b16 %v406
      %v851 = vunpack.c.h.b16 %v406
      %v852 = vunpack.c.l.b16 %v407
      %v853 = vunpack.c.h.b16 %v407
      %v854 = vunpack.c.l.b16 %v408
      %v855 = vunpack.c.h.b16 %v408
      %v856 = vunpack.c.l.b16 %v409
      %v857 = vunpack.c.h.b16 %v409
      %v858 = vunpack.c.l.b16 %v410
      %v859 = vunpack.c.h.b16 %v410
      %v860 = vunpack.c.l.b16 %v411
      %v861 = vunpack.c.h.b16 %v411
      %v862 = vunpack.c.l.b16 %v412
      %v863 = vunpack.c.h.b16 %v412
      %v864 = vunpack.c.l.b16 %v413
      %v865 = vunpack.c.h.b16 %v413
      %v866 = vunpack.c.l.b16 %v414
      %v867 = vunpack.c.h.b16 %v414
      %v868 = vunpack.c.l.b16 %v415
      %v869 = vunpack.c.h.b16 %v415
      %v870 = vunpack.c.l.b16 %v416
      %v871 = vunpack.c.h.b16 %v416
      %v872 = vpack.c.b16 %v620, %v616
      %v873 = vpack.c.b16 %v621, %v617
      %v874 = vpack.c.b16 %v622, %v618
      %v875 = vpack.c.b16 %v623, %v619
      %v876 = vpack.c.b16 %v628, %v624
      %v877 = vpack.c.b16 %v629, %v625
      %v878 = vpack.c.b16 %v630, %v626
      %v879 = vpack.c.b16 %v631, %v627
      %v880 = vpack.c.b16 %v636, %v632
      %v881 = vpack.c.b16 %v637, %v633
      %v882 = vpack.c.b16 %v638, %v634
      %v883 = vpack.c.b16 %v639, %v635
      %v884 = vpack.c.b16 %v644, %v640
      %v885 = vpack.c.b16 %v645, %v641
      %v886 = vpack.c.b16 %v646, %v642
      %v887 = vpack.c.b16 %v647, %v643
      %v888 = vpack.c.b16 %v652, %v648
      %v889 = vpack.c.b16 %v653, %v649
      %v890 = vpack.c.b16 %v654, %v650
      %v891 = vpack.c.b16 %v655, %v651
      %v892 = vpack.c.b16 %v660, %v656
      %v893 = vpack.c.b16 %v661, %v657
      %v894 = vpack.c.b16 %v662, %v658
      %v895 = vpack.c.b16 %v663, %v659
      %v896 = vpack.c.b16 %v668, %v664
      %v897 = vpack.c.b16 %v669, %v665
      %v898 = vpack.c.b16 %v670, %v666
      %v899 = vpack.c.b16 %v671, %v667
      %v900 = vpack.c.b16 %v676, %v672
      %v901 = vpack.c.b16 %v677, %v673
      %v902 = vpack.c.b16 %v678, %v674
      %v903 = vpack.c.b16 %v679, %v675
      %v904 = vpack.c.b16 %v684, %v680
      %v905 = vpack.c.b16 %v685, %v681
      %v906 = vpack.c.b16 %v686, %v682
      %v907 = vpack.c.b16 %v687, %v683
      %v908 = vpack.c.b16 %v692, %v688
      %v909 = vpack.c.b16 %v693, %v689
      %v910 = vpack.c.b16 %v694, %v690
      %v911 = vpack.c.b16 %v695, %v691
      %v912 = vpack.c.b16 %v700, %v696
      %v913 = vpack.c.b16 %v701, %v697
      %v914 = vpack.c.b16 %v702, %v698
      %v915 = vpack.c.b16 %v703, %v699
      %v916 = vpack.c.b16 %v708, %v704
      %v917 = vpack.c.b16 %v709, %v705
      %v918 = vpack.c.b16 %v710, %v706
      %v919 = vpack.c.b16 %v711, %v707
      %v920 = vpack.c.b16 %v716, %v712
      %v921 = vpack.c.b16 %v717, %v713
      %v922 = vpack.c.b16 %v718, %v714
      %v923 = vpack.c.b16 %v719, %v715
      %v924 = vpack.c.b16 %v724, %v720
      %v925 = vpack.c.b16 %v725, %v721
      %v926 = vpack.c.b16 %v726, %v722
      %v927 = vpack.c.b16 %v727, %v723
      %v928 = vpack.c.b16 %v732, %v728
      %v929 = vpack.c.b16 %v733, %v729
      %v930 = vpack.c.b16 %v734, %v730
      %v931 = vpack.c.b16 %v735, %v731
      %v932 = vpack.c.b16 %v740, %v736
      %v933 = vpack.c.b16 %v741, %v737
      %v934 = vpack.c.b16 %v742, %v738
      %v935 = vpack.c.b16 %v743, %v739
      %v936 = vpack.c.b16 %v748, %v744
      %v937 = vpack.c.b16 %v749, %v745
      %v938 = vpack.c.b16 %v750, %v746
      %v939 = vpack.c.b16 %v751, %v747
      %v940 = vpack.c.b16 %v756, %v752
      %v941 = vpack.c.b16 %v757, %v753
      %v942 = vpack.c.b16 %v758, %v754
      %v943 = vpack.c.b16 %v759, %v755
      %v944 = vpack.c.b16 %v764, %v760
      %v945 = vpack.c.b16 %v765, %v761
      %v946 = vpack.c.b16 %v766, %v762
      %v947 = vpack.c.b16 %v767, %v763
      %v948 = vpack.c.b16 %v772, %v768
      %v949 = vpack.c.b16 %v773, %v769
      %v950 = vpack.c.b16 %v774, %v770
      %v951 = vpack.c.b16 %v775, %v771
      %v952 = vpack.c.b16 %v780, %v776
      %v953 = vpack.c.b16 %v781, %v777
      %v954 = vpack.c.b16 %v782, %v778
      %v955 = vpack.c.b16 %v783, %v779
      %v956 = vpack.c.b16 %v788, %v784
      %v957 = vpack.c.b16 %v789, %v785
      %v958 = vpack.c.b16 %v790, %v786
      %v959 = vpack.c.b16 %v791, %v787
      %v960 = vpack.c.b16 %v796, %v792
      %v961 = vpack.c.b16 %v797, %v793
      %v962 = vpack.c.b16 %v798, %v794
      %v963 = vpack.c.b16 %v799, %v795
      %v964 = vpack.c.b16 %v804, %v800
      %v965 = vpack.c.b16 %v805, %v801
      %v966 = vpack.c.b16 %v806, %v802
      %v967 = vpack.c.b16 %v807, %v803
      %v968 = vpack.c.b16 %v812, %v808
      %v969 = vpack.c.b16 %v813, %v809
      %v970 = vpack.c.b16 %v814, %v810
      %v971 = vpack.c.b16 %v815, %v811
      %v972 = vpack.c.b16 %v820, %v816
      %v973 = vpack.c.b16 %v821, %v817
      %v974 = vpack.c.b16 %v822, %v818
      %v975 = vpack.c.b16 %v823, %v819
      %v976 = vpack.c.b16 %v828, %v824
      %v977 = vpack.c.b16 %v829, %v825
      %v978 = vpack.c.b16 %v830, %v826
      %v979 = vpack.c.b16 %v831, %v827
      %v980 = vpack.c.b16 %v836, %v832
      %v981 = vpack.c.b16 %v837, %v833
      %v982 = vpack.c.b16 %v838, %v834
      %v983 = vpack.c.b16 %v839, %v835
      %v984 = vpack.c.b16 %v844, %v840
      %v985 = vpack.c.b16 %v845, %v841
      %v986 = vpack.c.b16 %v846, %v842
      %v987 = vpack.c.b16 %v847, %v843
      %v988 = vpack.c.b16 %v852, %v848
      %v989 = vpack.c.b16 %v853, %v849
      %v990 = vpack.c.b16 %v854, %v850
      %v991 = vpack.c.b16 %v855, %v851
      %v992 = vpack.c.b16 %v860, %v856
      %v993 = vpack.c.b16 %v861, %v857
      %v994 = vpack.c.b16 %v862, %v858
      %v995 = vpack.c.b16 %v863, %v859
      %v996 = vpack.c.b16 %v868, %v864
      %v997 = vpack.c.b16 %v869, %v865
      %v998 = vpack.c.b16 %v870, %v866
      %v999 = vpack.c.b16 %v871, %v867
      %v1192 = vunpack.c.l.b16 %v417
      %v1193 = vunpack.c.l.b16 %v418
      %v1194 = vunpack.c.l.b16 %v419
      %v1195 = vunpack.c.l.b16 %v420
      %v1196 = vunpack.c.l.b16 %v421
      %v1197 = vunpack.c.l.b16 %v422
      %v1198 = vunpack.c.l.b16 %v423
      %v1199 = vunpack.c.l.b16 %v424
      %v1200 = vunpack.c.l.b16 %v425
      %v1201 = vunpack.c.l.b16 %v426
      %v1202 = vunpack.c.l.b16 %v427
      %v1203 = vunpack.c.l.b16 %v428
      %v1204 = vunpack.c.l.b16 %v429
      %v1205 = vunpack.c.l.b16 %v430
      %v1206 = vunpack.c.l.b16 %v431
      %v1207 = vunpack.c.l.b16 %v432
      %v1208 = vunpack.c.l.b16 %v433
      %v1209 = vunpack.c.l.b16 %v434
      %v1210 = vunpack.c.l.b16 %v435
      %v1211 = vunpack.c.l.b16 %v436
      %v1212 = vunpack.c.l.b16 %v437
      %v1213 = vunpack.c.l.b16 %v438
      %v1214 = vunpack.c.l.b16 %v439
      %v1215 = vunpack.c.l.b16 %v440
      %v1216 = vunpack.c.l.b16 %v441
      %v1217 = vunpack.c.l.b16 %v442
      %v1218 = vunpack.c.l.b16 %v443
      %v1219 = vunpack.c.l.b16 %v444
      %v1220 = vunpack.c.l.b16 %v445
      %v1221 = vunpack.c.l.b16 %v446
      %v1222 = vunpack.c.l.b16 %v447
      %v1223 = vunpack.c.l.b16 %v448
      %v1224 = vunpack.c.l.b16 %v449
      %v1225 = vunpack.c.l.b16 %v450
      %v1226 = vunpack.c.l.b16 %v451
      %v1227 = vunpack.c.l.b16 %v452
      %v1228 = vunpack.c.l.b16 %v453
      %v1229 = vunpack.c.l.b16 %v454
      %v1230 = vunpack.c.l.b16 %v455
      %v1231 = vunpack.c.l.b16 %v456
      %v1232 = vunpack.c.l.b16 %v457
      %v1233 = vunpack.c.l.b16 %v458
      %v1234 = vunpack.c.l.b16 %v459
      %v1235 = vunpack.c.l.b16 %v460
      %v1236 = vunpack.c.l.b16 %v461
      %v1237 = vunpack.c.l.b16 %v462
      %v1238 = vunpack.c.l.b16 %v463
      %v1239 = vunpack.c.l.b16 %v464
      %v1240 = vunpack.c.l.b16 %v465
      %v1241 = vunpack.c.l.b16 %v466
      %v1242 = vunpack.c.l.b16 %v467
      %v1243 = vunpack.c.l.b16 %v468
      %v1244 = vunpack.c.l.b16 %v469
      %v1245 = vunpack.c.l.b16 %v470
      %v1246 = vunpack.c.l.b16 %v471
      %v1247 = vunpack.c.l.b16 %v472
      %v1248 = vunpack.c.l.b16 %v473
      %v1249 = vunpack.c.l.b16 %v474
      %v1250 = vunpack.c.l.b16 %v475
      %v1251 = vunpack.c.l.b16 %v476
      %v1252 = vunpack.c.l.b16 %v477
      %v1253 = vunpack.c.l.b16 %v478
      %v1254 = vunpack.c.l.b16 %v479
      %v1255 = vunpack.c.l.b16 %v480
      %v1256 = vpack.c.b16 %v1193, %v1192
      %v1257 = vpack.c.b16 %v1195, %v1194
      %v1258 = vpack.c.b16 %v1197, %v1196
      %v1259 = vpack.c.b16 %v1199, %v1198
      %v1260 = vpack.c.b16 %v1201, %v1200
      %v1261 = vpack.c.b16 %v1203, %v1202
      %v1262 = vpack.c.b16 %v1205, %v1204
      %v1263 = vpack.c.b16 %v1207, %v1206
      %v1264 = vpack.c.b16 %v1209, %v1208
      %v1265 = vpack.c.b16 %v1211, %v1210
      %v1266 = vpack.c.b16 %v1213, %v1212
      %v1267 = vpack.c.b16 %v1215, %v1214
      %v1268 = vpack.c.b16 %v1217, %v1216
      %v1269 = vpack.c.b16 %v1219, %v1218
      %v1270 = vpack.c.b16 %v1221, %v1220
      %v1271 = vpack.c.b16 %v1223, %v1222
      %v1272 = vpack.c.b16 %v1225, %v1224
      %v1273 = vpack.c.b16 %v1227, %v1226
      %v1274 = vpack.c.b16 %v1229, %v1228
      %v1275 = vpack.c.b16 %v1231, %v1230
      %v1276 = vpack.c.b16 %v1233, %v1232
      %v1277 = vpack.c.b16 %v1235, %v1234
      %v1278 = vpack.c.b16 %v1237, %v1236
      %v1279 = vpack.c.b16 %v1239, %v1238
      %v1280 = vpack.c.b16 %v1241, %v1240
      %v1281 = vpack.c.b16 %v1243, %v1242
      %v1282 = vpack.c.b16 %v1245, %v1244
      %v1283 = vpack.c.b16 %v1247, %v1246
      %v1284 = vpack.c.b16 %v1249, %v1248
      %v1285 = vpack.c.b16 %v1251, %v1250
      %v1286 = vpack.c.b16 %v1253, %v1252
      %v1287 = vpack.c.b16 %v1255, %v1254
      %1320 = vmatprep.subr.bf16.mxu0 0
      %1321 = vmatpush1.bf16.msra.mxu0 %v1263
      %1322 = vmatprep.subr.bf16.mxu0 0
      %1323 = vmatpush1.bf16.msra.mxu0 %v1262
      %1324 = vmatprep.subr.bf16.mxu0 0
      %1325 = vmatpush1.bf16.msra.mxu0 %v1261
      %1326 = vmatprep.subr.bf16.mxu0 0
      %1327 = vmatpush1.bf16.msra.mxu0 %v1260
      %1328 = vmatprep.subr.bf16.mxu0 0
      %1329 = vmatpush1.bf16.msra.mxu0 %v1259
      %1330 = vmatprep.subr.bf16.mxu0 0
      %1331 = vmatpush1.bf16.msra.mxu0 %v1258
      %1332 = vmatprep.subr.bf16.mxu0 0
      %1333 = vmatpush1.bf16.msra.mxu0 %v1257
      %1334 = vmatprep.subr.bf16.mxu0 0
      %1335 = vmatpush1.bf16.msra.mxu0 %v1256
      %1336 = vmatprep.subr.bf16.mxu0 0
      %1337 = vmatpush2.bf16.msra.mxu0 %v1271
      %1338 = vmatprep.subr.bf16.mxu0 0
      %1339 = vmatpush2.bf16.msra.mxu0 %v1270
      %1340 = vmatprep.subr.bf16.mxu0 0
      %1341 = vmatpush2.bf16.msra.mxu0 %v1269
      %1342 = vmatprep.subr.bf16.mxu0 0
      %1343 = vmatpush2.bf16.msra.mxu0 %v1268
      %1344 = vmatprep.subr.bf16.mxu0 0
      %1345 = vmatpush2.bf16.msra.mxu0 %v1267
      %1346 = vmatprep.subr.bf16.mxu0 0
      %1347 = vmatpush2.bf16.msra.mxu0 %v1266
      %1348 = vmatprep.subr.bf16.mxu0 0
      %1349 = vmatpush2.bf16.msra.mxu0 %v1265
      %1350 = vmatprep.subr.bf16.mxu0 0
      %1351 = vmatpush2.bf16.msra.mxu0 %v1264
      %1352 = vmatprep.mubr.bf16.mxu0 %v873
      %1353 = vmatmul.mubr.bf16.gmra.mxu0 %v872
      %v1354 = vpop.f32.mrf.mxu0
      %v1355 = vadd.f32 %v486, %v1354
      %v1356 = vpop.f32.mrf.mxu0
      %v1357 = vpop.f32.mrf.mxu0
      %v1358 = vadd.f32 %v486, %v1357
      %v1359 = vpop.f32.mrf.mxu0
      %1360 = vmatprep.mubr.bf16.mxu0 %v877
      %1361 = vmatmul.mubr.bf16.gmra.mxu0 %v876
      %v1362 = vpop.f32.mrf.mxu0
      %v1363 = vadd.f32 %v486, %v1362
      %v1364 = vpop.f32.mrf.mxu0
      %v1365 = vpop.f32.mrf.mxu0
      %v1366 = vadd.f32 %v486, %v1365
      %v1367 = vpop.f32.mrf.mxu0
      %1368 = vmatprep.mubr.bf16.mxu0 %v881
      %1369 = vmatmul.mubr.bf16.gmra.mxu0 %v880
      %v1370 = vpop.f32.mrf.mxu0
      %v1371 = vadd.f32 %v486, %v1370
      %v1372 = vpop.f32.mrf.mxu0
      %v1373 = vpop.f32.mrf.mxu0
      %v1374 = vadd.f32 %v486, %v1373
      %v1375 = vpop.f32.mrf.mxu0
      %1376 = vmatprep.mubr.bf16.mxu0 %v885
      %1377 = vmatmul.mubr.bf16.gmra.mxu0 %v884
      %v1378 = vpop.f32.mrf.mxu0
      %v1379 = vadd.f32 %v486, %v1378
      %v1380 = vpop.f32.mrf.mxu0
      %v1381 = vpop.f32.mrf.mxu0
      %v1382 = vadd.f32 %v486, %v1381
      %v1383 = vpop.f32.mrf.mxu0
      %1384 = vmatprep.mubr.bf16.mxu0 %v889
      %1385 = vmatmul.mubr.bf16.gmra.mxu0 %v888
      %v1386 = vpop.f32.mrf.mxu0
      %v1387 = vadd.f32 %v486, %v1386
      %v1388 = vpop.f32.mrf.mxu0
      %v1389 = vpop.f32.mrf.mxu0
      %v1390 = vadd.f32 %v486, %v1389
      %v1391 = vpop.f32.mrf.mxu0
      %1392 = vmatprep.mubr.bf16.mxu0 %v893
      %1393 = vmatmul.mubr.bf16.gmra.mxu0 %v892
      %v1394 = vpop.f32.mrf.mxu0
      %v1395 = vadd.f32 %v486, %v1394
      %v1396 = vpop.f32.mrf.mxu0
      %v1397 = vpop.f32.mrf.mxu0
      %v1398 = vadd.f32 %v486, %v1397
      %v1399 = vpop.f32.mrf.mxu0
      %1400 = vmatprep.mubr.bf16.mxu0 %v897
      %1401 = vmatmul.mubr.bf16.gmra.mxu0 %v896
      %v1402 = vpop.f32.mrf.mxu0
      %v1403 = vadd.f32 %v486, %v1402
      %v1404 = vpop.f32.mrf.mxu0
      %v1405 = vpop.f32.mrf.mxu0
      %v1406 = vadd.f32 %v486, %v1405
      %v1407 = vpop.f32.mrf.mxu0
      %1408 = vmatprep.mubr.bf16.mxu0 %v901
      %1409 = vmatmul.mubr.bf16.gmra.mxu0 %v900
      %v1410 = vpop.f32.mrf.mxu0
      %v1411 = vadd.f32 %v486, %v1410
      %v1412 = vpop.f32.mrf.mxu0
      %v1413 = vpop.f32.mrf.mxu0
      %v1414 = vadd.f32 %v486, %v1413
      %v1415 = vpop.f32.mrf.mxu0
      %1416 = vmatprep.mubr.bf16.mxu0 %v905
      %1417 = vmatmul.mubr.bf16.gmra.mxu0 %v904
      %v1418 = vpop.f32.mrf.mxu0
      %v1419 = vadd.f32 %v486, %v1418
      %v1420 = vpop.f32.mrf.mxu0
      %v1421 = vpop.f32.mrf.mxu0
      %v1422 = vadd.f32 %v486, %v1421
      %v1423 = vpop.f32.mrf.mxu0
      %1424 = vmatprep.mubr.bf16.mxu0 %v909
      %1425 = vmatmul.mubr.bf16.gmra.mxu0 %v908
      %v1426 = vpop.f32.mrf.mxu0
      %v1427 = vadd.f32 %v486, %v1426
      %v1428 = vpop.f32.mrf.mxu0
      %v1429 = vpop.f32.mrf.mxu0
      %v1430 = vadd.f32 %v486, %v1429
      %v1431 = vpop.f32.mrf.mxu0
      %1432 = vmatprep.mubr.bf16.mxu0 %v913
      %1433 = vmatmul.mubr.bf16.gmra.mxu0 %v912
      %v1434 = vpop.f32.mrf.mxu0
      %v1435 = vadd.f32 %v486, %v1434
      %v1436 = vpop.f32.mrf.mxu0
      %v1437 = vpop.f32.mrf.mxu0
      %v1438 = vadd.f32 %v486, %v1437
      %v1439 = vpop.f32.mrf.mxu0
      %1440 = vmatprep.mubr.bf16.mxu0 %v917
      %1441 = vmatmul.mubr.bf16.gmra.mxu0 %v916
      %v1442 = vpop.f32.mrf.mxu0
      %v1443 = vadd.f32 %v486, %v1442
      %v1444 = vpop.f32.mrf.mxu0
      %v1445 = vpop.f32.mrf.mxu0
      %v1446 = vadd.f32 %v486, %v1445
      %v1447 = vpop.f32.mrf.mxu0
      %1448 = vmatprep.mubr.bf16.mxu0 %v921
      %1449 = vmatmul.mubr.bf16.gmra.mxu0 %v920
      %v1450 = vpop.f32.mrf.mxu0
      %v1451 = vadd.f32 %v486, %v1450
      %v1452 = vpop.f32.mrf.mxu0
      %v1453 = vpop.f32.mrf.mxu0
      %v1454 = vadd.f32 %v486, %v1453
      %v1455 = vpop.f32.mrf.mxu0
      %1456 = vmatprep.mubr.bf16.mxu0 %v925
      %1457 = vmatmul.mubr.bf16.gmra.mxu0 %v924
      %v1458 = vpop.f32.mrf.mxu0
      %v1459 = vadd.f32 %v486, %v1458
      %v1460 = vpop.f32.mrf.mxu0
      %v1461 = vpop.f32.mrf.mxu0
      %v1462 = vadd.f32 %v486, %v1461
      %v1463 = vpop.f32.mrf.mxu0
      %1464 = vmatprep.mubr.bf16.mxu0 %v929
      %1465 = vmatmul.mubr.bf16.gmra.mxu0 %v928
      %v1466 = vpop.f32.mrf.mxu0
      %v1467 = vadd.f32 %v486, %v1466
      %v1468 = vpop.f32.mrf.mxu0
      %v1469 = vpop.f32.mrf.mxu0
      %v1470 = vadd.f32 %v486, %v1469
      %v1471 = vpop.f32.mrf.mxu0
      %1472 = vmatprep.mubr.bf16.mxu0 %v933
      %1473 = vmatmul.mubr.bf16.gmra.mxu0 %v932
      %v1474 = vpop.f32.mrf.mxu0
      %v1475 = vadd.f32 %v486, %v1474
      %v1476 = vpop.f32.mrf.mxu0
      %v1477 = vpop.f32.mrf.mxu0
      %v1478 = vadd.f32 %v486, %v1477
      %v1479 = vpop.f32.mrf.mxu0
      %1480 = vmatprep.mubr.bf16.mxu0 %v937
      %1481 = vmatmul.mubr.bf16.gmra.mxu0 %v936
      %v1482 = vpop.f32.mrf.mxu0
      %v1483 = vadd.f32 %v486, %v1482
      %v1484 = vpop.f32.mrf.mxu0
      %v1485 = vpop.f32.mrf.mxu0
      %v1486 = vadd.f32 %v486, %v1485
      %v1487 = vpop.f32.mrf.mxu0
      %1488 = vmatprep.mubr.bf16.mxu0 %v941
      %1489 = vmatmul.mubr.bf16.gmra.mxu0 %v940
      %v1490 = vpop.f32.mrf.mxu0
      %v1491 = vadd.f32 %v486, %v1490
      %v1492 = vpop.f32.mrf.mxu0
      %v1493 = vpop.f32.mrf.mxu0
      %v1494 = vadd.f32 %v486, %v1493
      %v1495 = vpop.f32.mrf.mxu0
      %1496 = vmatprep.mubr.bf16.mxu0 %v945
      %1497 = vmatmul.mubr.bf16.gmra.mxu0 %v944
      %v1498 = vpop.f32.mrf.mxu0
      %v1499 = vadd.f32 %v486, %v1498
      %v1500 = vpop.f32.mrf.mxu0
      %v1501 = vpop.f32.mrf.mxu0
      %v1502 = vadd.f32 %v486, %v1501
      %v1503 = vpop.f32.mrf.mxu0
      %1504 = vmatprep.mubr.bf16.mxu0 %v949
      %1505 = vmatmul.mubr.bf16.gmra.mxu0 %v948
      %v1506 = vpop.f32.mrf.mxu0
      %v1507 = vadd.f32 %v486, %v1506
      %v1508 = vpop.f32.mrf.mxu0
      %v1509 = vpop.f32.mrf.mxu0
      %v1510 = vadd.f32 %v486, %v1509
      %v1511 = vpop.f32.mrf.mxu0
      %1512 = vmatprep.mubr.bf16.mxu0 %v953
      %1513 = vmatmul.mubr.bf16.gmra.mxu0 %v952
      %v1514 = vpop.f32.mrf.mxu0
      %v1515 = vadd.f32 %v486, %v1514
      %v1516 = vpop.f32.mrf.mxu0
      %v1517 = vpop.f32.mrf.mxu0
      %v1518 = vadd.f32 %v486, %v1517
      %v1519 = vpop.f32.mrf.mxu0
      %1520 = vmatprep.mubr.bf16.mxu0 %v957
      %1521 = vmatmul.mubr.bf16.gmra.mxu0 %v956
      %v1522 = vpop.f32.mrf.mxu0
      %v1523 = vadd.f32 %v486, %v1522
      %v1524 = vpop.f32.mrf.mxu0
      %v1525 = vpop.f32.mrf.mxu0
      %v1526 = vadd.f32 %v486, %v1525
      %v1527 = vpop.f32.mrf.mxu0
      %1528 = vmatprep.mubr.bf16.mxu0 %v961
      %1529 = vmatmul.mubr.bf16.gmra.mxu0 %v960
      %v1530 = vpop.f32.mrf.mxu0
      %v1531 = vadd.f32 %v486, %v1530
      %v1532 = vpop.f32.mrf.mxu0
      %v1533 = vpop.f32.mrf.mxu0
      %v1534 = vadd.f32 %v486, %v1533
      %v1535 = vpop.f32.mrf.mxu0
      %1536 = vmatprep.mubr.bf16.mxu0 %v965
      %1537 = vmatmul.mubr.bf16.gmra.mxu0 %v964
      %v1538 = vpop.f32.mrf.mxu0
      %v1539 = vadd.f32 %v486, %v1538
      %v1540 = vpop.f32.mrf.mxu0
      %v1541 = vpop.f32.mrf.mxu0
      %v1542 = vadd.f32 %v486, %v1541
      %v1543 = vpop.f32.mrf.mxu0
      %1544 = vmatprep.mubr.bf16.mxu0 %v969
      %1545 = vmatmul.mubr.bf16.gmra.mxu0 %v968
      %v1546 = vpop.f32.mrf.mxu0
      %v1547 = vadd.f32 %v486, %v1546
      %v1548 = vpop.f32.mrf.mxu0
      %v1549 = vpop.f32.mrf.mxu0
      %v1550 = vadd.f32 %v486, %v1549
      %v1551 = vpop.f32.mrf.mxu0
      %1552 = vmatprep.mubr.bf16.mxu0 %v973
      %1553 = vmatmul.mubr.bf16.gmra.mxu0 %v972
      %v1554 = vpop.f32.mrf.mxu0
      %v1555 = vadd.f32 %v486, %v1554
      %v1556 = vpop.f32.mrf.mxu0
      %v1557 = vpop.f32.mrf.mxu0
      %v1558 = vadd.f32 %v486, %v1557
      %v1559 = vpop.f32.mrf.mxu0
      %1560 = vmatprep.mubr.bf16.mxu0 %v977
      %1561 = vmatmul.mubr.bf16.gmra.mxu0 %v976
      %v1562 = vpop.f32.mrf.mxu0
      %v1563 = vadd.f32 %v486, %v1562
      %v1564 = vpop.f32.mrf.mxu0
      %v1565 = vpop.f32.mrf.mxu0
      %v1566 = vadd.f32 %v486, %v1565
      %v1567 = vpop.f32.mrf.mxu0
      %1568 = vmatprep.mubr.bf16.mxu0 %v981
      %1569 = vmatmul.mubr.bf16.gmra.mxu0 %v980
      %v1570 = vpop.f32.mrf.mxu0
      %v1571 = vadd.f32 %v486, %v1570
      %v1572 = vpop.f32.mrf.mxu0
      %v1573 = vpop.f32.mrf.mxu0
      %v1574 = vadd.f32 %v486, %v1573
      %v1575 = vpop.f32.mrf.mxu0
      %1576 = vmatprep.mubr.bf16.mxu0 %v985
      %1577 = vmatmul.mubr.bf16.gmra.mxu0 %v984
      %v1578 = vpop.f32.mrf.mxu0
      %v1579 = vadd.f32 %v486, %v1578
      %v1580 = vpop.f32.mrf.mxu0
      %v1581 = vpop.f32.mrf.mxu0
      %v1582 = vadd.f32 %v486, %v1581
      %v1583 = vpop.f32.mrf.mxu0
      %1584 = vmatprep.mubr.bf16.mxu0 %v989
      %1585 = vmatmul.mubr.bf16.gmra.mxu0 %v988
      %v1586 = vpop.f32.mrf.mxu0
      %v1587 = vadd.f32 %v486, %v1586
      %v1588 = vpop.f32.mrf.mxu0
      %v1589 = vpop.f32.mrf.mxu0
      %v1590 = vadd.f32 %v486, %v1589
      %v1591 = vpop.f32.mrf.mxu0
      %1592 = vmatprep.mubr.bf16.mxu0 %v993
      %1593 = vmatmul.mubr.bf16.gmra.mxu0 %v992
      %v1594 = vpop.f32.mrf.mxu0
      %v1595 = vadd.f32 %v486, %v1594
      %v1596 = vpop.f32.mrf.mxu0
      %v1597 = vpop.f32.mrf.mxu0
      %v1598 = vadd.f32 %v486, %v1597
      %v1599 = vpop.f32.mrf.mxu0
      %1600 = vmatprep.mubr.bf16.mxu0 %v997
      %1601 = vmatmul.mubr.bf16.gmra.mxu0 %v996
      %v1602 = vpop.f32.mrf.mxu0
      %v1603 = vadd.f32 %v486, %v1602
      %v1604 = vpop.f32.mrf.mxu0
      %v1605 = vpop.f32.mrf.mxu0
      %v1606 = vadd.f32 %v486, %v1605
      %v1607 = vpop.f32.mrf.mxu0
      %1608 = vdwg.mxu0
      %1609 = vmatprep.subr.bf16.mxu0 0
      %1610 = vmatpush1.bf16.msra.mxu0 %v1279
      %1611 = vmatprep.subr.bf16.mxu0 0
      %1612 = vmatpush1.bf16.msra.mxu0 %v1278
      %1613 = vmatprep.subr.bf16.mxu0 0
      %1614 = vmatpush1.bf16.msra.mxu0 %v1277
      %1615 = vmatprep.subr.bf16.mxu0 0
      %1616 = vmatpush1.bf16.msra.mxu0 %v1276
      %1617 = vmatprep.subr.bf16.mxu0 0
      %1618 = vmatpush1.bf16.msra.mxu0 %v1275
      %1619 = vmatprep.subr.bf16.mxu0 0
      %1620 = vmatpush1.bf16.msra.mxu0 %v1274
      %1621 = vmatprep.subr.bf16.mxu0 0
      %1622 = vmatpush1.bf16.msra.mxu0 %v1273
      %1623 = vmatprep.subr.bf16.mxu0 0
      %1624 = vmatpush1.bf16.msra.mxu0 %v1272
      %1625 = vmatprep.subr.bf16.mxu0 0
      %1626 = vmatpush2.bf16.msra.mxu0 %v1287
      %1627 = vmatprep.subr.bf16.mxu0 0
      %1628 = vmatpush2.bf16.msra.mxu0 %v1286
      %1629 = vmatprep.subr.bf16.mxu0 0
      %1630 = vmatpush2.bf16.msra.mxu0 %v1285
      %1631 = vmatprep.subr.bf16.mxu0 0
      %1632 = vmatpush2.bf16.msra.mxu0 %v1284
      %1633 = vmatprep.subr.bf16.mxu0 0
      %1634 = vmatpush2.bf16.msra.mxu0 %v1283
      %1635 = vmatprep.subr.bf16.mxu0 0
      %1636 = vmatpush2.bf16.msra.mxu0 %v1282
      %1637 = vmatprep.subr.bf16.mxu0 0
      %1638 = vmatpush2.bf16.msra.mxu0 %v1281
      %1639 = vmatprep.subr.bf16.mxu0 0
      %1640 = vmatpush2.bf16.msra.mxu0 %v1280
      %1641 = vmatprep.mubr.bf16.mxu0 %v875
      %1642 = vmatmul.mubr.bf16.gmra.mxu0 %v874
      %v1643 = vpop.f32.mrf.mxu0
      %v1644 = vadd.f32 %v1355, %v1643
      %v1645 = vpop.f32.mrf.mxu0
      %v1646 = vpop.f32.mrf.mxu0
      %v1647 = vadd.f32 %v1358, %v1646
      %v1648 = vpop.f32.mrf.mxu0
      %1649 = vmatprep.mubr.bf16.mxu0 %v879
      %1650 = vmatmul.mubr.bf16.gmra.mxu0 %v878
      %v1651 = vpop.f32.mrf.mxu0
      %v1652 = vadd.f32 %v1363, %v1651
      %v1653 = vpop.f32.mrf.mxu0
      %v1654 = vpop.f32.mrf.mxu0
      %v1655 = vadd.f32 %v1366, %v1654
      %v1656 = vpop.f32.mrf.mxu0
      %1657 = vmatprep.mubr.bf16.mxu0 %v883
      %1658 = vmatmul.mubr.bf16.gmra.mxu0 %v882
      %v1659 = vpop.f32.mrf.mxu0
      %v1660 = vadd.f32 %v1371, %v1659
      %v1661 = vpop.f32.mrf.mxu0
      %v1662 = vpop.f32.mrf.mxu0
      %v1663 = vadd.f32 %v1374, %v1662
      %v1664 = vpop.f32.mrf.mxu0
      %1665 = vmatprep.mubr.bf16.mxu0 %v887
      %1666 = vmatmul.mubr.bf16.gmra.mxu0 %v886
      %v1667 = vpop.f32.mrf.mxu0
      %v1668 = vadd.f32 %v1379, %v1667
      %v1669 = vpop.f32.mrf.mxu0
      %v1670 = vpop.f32.mrf.mxu0
      %v1671 = vadd.f32 %v1382, %v1670
      %v1672 = vpop.f32.mrf.mxu0
      %1673 = vmatprep.mubr.bf16.mxu0 %v891
      %1674 = vmatmul.mubr.bf16.gmra.mxu0 %v890
      %v1675 = vpop.f32.mrf.mxu0
      %v1676 = vadd.f32 %v1387, %v1675
      %v1677 = vpop.f32.mrf.mxu0
      %v1678 = vpop.f32.mrf.mxu0
      %v1679 = vadd.f32 %v1390, %v1678
      %v1680 = vpop.f32.mrf.mxu0
      %1681 = vmatprep.mubr.bf16.mxu0 %v895
      %1682 = vmatmul.mubr.bf16.gmra.mxu0 %v894
      %v1683 = vpop.f32.mrf.mxu0
      %v1684 = vadd.f32 %v1395, %v1683
      %v1685 = vpop.f32.mrf.mxu0
      %v1686 = vpop.f32.mrf.mxu0
      %v1687 = vadd.f32 %v1398, %v1686
      %v1688 = vpop.f32.mrf.mxu0
      %1689 = vmatprep.mubr.bf16.mxu0 %v899
      %1690 = vmatmul.mubr.bf16.gmra.mxu0 %v898
      %v1691 = vpop.f32.mrf.mxu0
      %v1692 = vadd.f32 %v1403, %v1691
      %v1693 = vpop.f32.mrf.mxu0
      %v1694 = vpop.f32.mrf.mxu0
      %v1695 = vadd.f32 %v1406, %v1694
      %v1696 = vpop.f32.mrf.mxu0
      %1697 = vmatprep.mubr.bf16.mxu0 %v903
      %1698 = vmatmul.mubr.bf16.gmra.mxu0 %v902
      %v1699 = vpop.f32.mrf.mxu0
      %v1700 = vadd.f32 %v1411, %v1699
      %v1701 = vpop.f32.mrf.mxu0
      %v1702 = vpop.f32.mrf.mxu0
      %v1703 = vadd.f32 %v1414, %v1702
      %v1704 = vpop.f32.mrf.mxu0
      %1705 = vmatprep.mubr.bf16.mxu0 %v907
      %1706 = vmatmul.mubr.bf16.gmra.mxu0 %v906
      %v1707 = vpop.f32.mrf.mxu0
      %v1708 = vadd.f32 %v1419, %v1707
      %v1709 = vpop.f32.mrf.mxu0
      %v1710 = vpop.f32.mrf.mxu0
      %v1711 = vadd.f32 %v1422, %v1710
      %v1712 = vpop.f32.mrf.mxu0
      %1713 = vmatprep.mubr.bf16.mxu0 %v911
      %1714 = vmatmul.mubr.bf16.gmra.mxu0 %v910
      %v1715 = vpop.f32.mrf.mxu0
      %v1716 = vadd.f32 %v1427, %v1715
      %v1717 = vpop.f32.mrf.mxu0
      %v1718 = vpop.f32.mrf.mxu0
      %v1719 = vadd.f32 %v1430, %v1718
      %v1720 = vpop.f32.mrf.mxu0
      %1721 = vmatprep.mubr.bf16.mxu0 %v915
      %1722 = vmatmul.mubr.bf16.gmra.mxu0 %v914
      %v1723 = vpop.f32.mrf.mxu0
      %v1724 = vadd.f32 %v1435, %v1723
      %v1725 = vpop.f32.mrf.mxu0
      %v1726 = vpop.f32.mrf.mxu0
      %v1727 = vadd.f32 %v1438, %v1726
      %v1728 = vpop.f32.mrf.mxu0
      %1729 = vmatprep.mubr.bf16.mxu0 %v919
      %1730 = vmatmul.mubr.bf16.gmra.mxu0 %v918
      %v1731 = vpop.f32.mrf.mxu0
      %v1732 = vadd.f32 %v1443, %v1731
      %v1733 = vpop.f32.mrf.mxu0
      %v1734 = vpop.f32.mrf.mxu0
      %v1735 = vadd.f32 %v1446, %v1734
      %v1736 = vpop.f32.mrf.mxu0
      %1737 = vmatprep.mubr.bf16.mxu0 %v923
      %1738 = vmatmul.mubr.bf16.gmra.mxu0 %v922
      %v1739 = vpop.f32.mrf.mxu0
      %v1740 = vadd.f32 %v1451, %v1739
      %v1741 = vpop.f32.mrf.mxu0
      %v1742 = vpop.f32.mrf.mxu0
      %v1743 = vadd.f32 %v1454, %v1742
      %v1744 = vpop.f32.mrf.mxu0
      %1745 = vmatprep.mubr.bf16.mxu0 %v927
      %1746 = vmatmul.mubr.bf16.gmra.mxu0 %v926
      %v1747 = vpop.f32.mrf.mxu0
      %v1748 = vadd.f32 %v1459, %v1747
      %v1749 = vpop.f32.mrf.mxu0
      %v1750 = vpop.f32.mrf.mxu0
      %v1751 = vadd.f32 %v1462, %v1750
      %v1752 = vpop.f32.mrf.mxu0
      %1753 = vmatprep.mubr.bf16.mxu0 %v931
      %1754 = vmatmul.mubr.bf16.gmra.mxu0 %v930
      %v1755 = vpop.f32.mrf.mxu0
      %v1756 = vadd.f32 %v1467, %v1755
      %v1757 = vpop.f32.mrf.mxu0
      %v1758 = vpop.f32.mrf.mxu0
      %v1759 = vadd.f32 %v1470, %v1758
      %v1760 = vpop.f32.mrf.mxu0
      %1761 = vmatprep.mubr.bf16.mxu0 %v935
      %1762 = vmatmul.mubr.bf16.gmra.mxu0 %v934
      %v1763 = vpop.f32.mrf.mxu0
      %v1764 = vadd.f32 %v1475, %v1763
      %v1765 = vpop.f32.mrf.mxu0
      %v1766 = vpop.f32.mrf.mxu0
      %v1767 = vadd.f32 %v1478, %v1766
      %v1768 = vpop.f32.mrf.mxu0
      %1769 = vmatprep.mubr.bf16.mxu0 %v939
      %1770 = vmatmul.mubr.bf16.gmra.mxu0 %v938
      %v1771 = vpop.f32.mrf.mxu0
      %v1772 = vadd.f32 %v1483, %v1771
      %v1773 = vpop.f32.mrf.mxu0
      %v1774 = vpop.f32.mrf.mxu0
      %v1775 = vadd.f32 %v1486, %v1774
      %v1776 = vpop.f32.mrf.mxu0
      %1777 = vmatprep.mubr.bf16.mxu0 %v943
      %1778 = vmatmul.mubr.bf16.gmra.mxu0 %v942
      %v1779 = vpop.f32.mrf.mxu0
      %v1780 = vadd.f32 %v1491, %v1779
      %v1781 = vpop.f32.mrf.mxu0
      %v1782 = vpop.f32.mrf.mxu0
      %v1783 = vadd.f32 %v1494, %v1782
      %v1784 = vpop.f32.mrf.mxu0
      %1785 = vmatprep.mubr.bf16.mxu0 %v947
      %1786 = vmatmul.mubr.bf16.gmra.mxu0 %v946
      %v1787 = vpop.f32.mrf.mxu0
      %v1788 = vadd.f32 %v1499, %v1787
      %v1789 = vpop.f32.mrf.mxu0
      %v1790 = vpop.f32.mrf.mxu0
      %v1791 = vadd.f32 %v1502, %v1790
      %v1792 = vpop.f32.mrf.mxu0
      %1793 = vmatprep.mubr.bf16.mxu0 %v951
      %1794 = vmatmul.mubr.bf16.gmra.mxu0 %v950
      %v1795 = vpop.f32.mrf.mxu0
      %v1796 = vadd.f32 %v1507, %v1795
      %v1797 = vpop.f32.mrf.mxu0
      %v1798 = vpop.f32.mrf.mxu0
      %v1799 = vadd.f32 %v1510, %v1798
      %v1800 = vpop.f32.mrf.mxu0
      %1801 = vmatprep.mubr.bf16.mxu0 %v955
      %1802 = vmatmul.mubr.bf16.gmra.mxu0 %v954
      %v1803 = vpop.f32.mrf.mxu0
      %v1804 = vadd.f32 %v1515, %v1803
      %v1805 = vpop.f32.mrf.mxu0
      %v1806 = vpop.f32.mrf.mxu0
      %v1807 = vadd.f32 %v1518, %v1806
      %v1808 = vpop.f32.mrf.mxu0
      %1809 = vmatprep.mubr.bf16.mxu0 %v959
      %1810 = vmatmul.mubr.bf16.gmra.mxu0 %v958
      %v1811 = vpop.f32.mrf.mxu0
      %v1812 = vadd.f32 %v1523, %v1811
      %v1813 = vpop.f32.mrf.mxu0
      %v1814 = vpop.f32.mrf.mxu0
      %v1815 = vadd.f32 %v1526, %v1814
      %v1816 = vpop.f32.mrf.mxu0
      %1817 = vmatprep.mubr.bf16.mxu0 %v963
      %1818 = vmatmul.mubr.bf16.gmra.mxu0 %v962
      %v1819 = vpop.f32.mrf.mxu0
      %v1820 = vadd.f32 %v1531, %v1819
      %v1821 = vpop.f32.mrf.mxu0
      %v1822 = vpop.f32.mrf.mxu0
      %v1823 = vadd.f32 %v1534, %v1822
      %v1824 = vpop.f32.mrf.mxu0
      %1825 = vmatprep.mubr.bf16.mxu0 %v967
      %1826 = vmatmul.mubr.bf16.gmra.mxu0 %v966
      %v1827 = vpop.f32.mrf.mxu0
      %v1828 = vadd.f32 %v1539, %v1827
      %v1829 = vpop.f32.mrf.mxu0
      %v1830 = vpop.f32.mrf.mxu0
      %v1831 = vadd.f32 %v1542, %v1830
      %v1832 = vpop.f32.mrf.mxu0
      %1833 = vmatprep.mubr.bf16.mxu0 %v971
      %1834 = vmatmul.mubr.bf16.gmra.mxu0 %v970
      %v1835 = vpop.f32.mrf.mxu0
      %v1836 = vadd.f32 %v1547, %v1835
      %v1837 = vpop.f32.mrf.mxu0
      %v1838 = vpop.f32.mrf.mxu0
      %v1839 = vadd.f32 %v1550, %v1838
      %v1840 = vpop.f32.mrf.mxu0
      %1841 = vmatprep.mubr.bf16.mxu0 %v975
      %1842 = vmatmul.mubr.bf16.gmra.mxu0 %v974
      %v1843 = vpop.f32.mrf.mxu0
      %v1844 = vadd.f32 %v1555, %v1843
      %v1845 = vpop.f32.mrf.mxu0
      %v1846 = vpop.f32.mrf.mxu0
      %v1847 = vadd.f32 %v1558, %v1846
      %v1848 = vpop.f32.mrf.mxu0
      %1849 = vmatprep.mubr.bf16.mxu0 %v979
      %1850 = vmatmul.mubr.bf16.gmra.mxu0 %v978
      %v1851 = vpop.f32.mrf.mxu0
      %v1852 = vadd.f32 %v1563, %v1851
      %v1853 = vpop.f32.mrf.mxu0
      %v1854 = vpop.f32.mrf.mxu0
      %v1855 = vadd.f32 %v1566, %v1854
      %v1856 = vpop.f32.mrf.mxu0
      %1857 = vmatprep.mubr.bf16.mxu0 %v983
      %1858 = vmatmul.mubr.bf16.gmra.mxu0 %v982
      %v1859 = vpop.f32.mrf.mxu0
      %v1860 = vadd.f32 %v1571, %v1859
      %v1861 = vpop.f32.mrf.mxu0
      %v1862 = vpop.f32.mrf.mxu0
      %v1863 = vadd.f32 %v1574, %v1862
      %v1864 = vpop.f32.mrf.mxu0
      %1865 = vmatprep.mubr.bf16.mxu0 %v987
      %1866 = vmatmul.mubr.bf16.gmra.mxu0 %v986
      %v1867 = vpop.f32.mrf.mxu0
      %v1868 = vadd.f32 %v1579, %v1867
      %v1869 = vpop.f32.mrf.mxu0
      %v1870 = vpop.f32.mrf.mxu0
      %v1871 = vadd.f32 %v1582, %v1870
      %v1872 = vpop.f32.mrf.mxu0
      %1873 = vmatprep.mubr.bf16.mxu0 %v991
      %1874 = vmatmul.mubr.bf16.gmra.mxu0 %v990
      %v1875 = vpop.f32.mrf.mxu0
      %v1876 = vadd.f32 %v1587, %v1875
      %v1877 = vpop.f32.mrf.mxu0
      %v1878 = vpop.f32.mrf.mxu0
      %v1879 = vadd.f32 %v1590, %v1878
      %v1880 = vpop.f32.mrf.mxu0
      %1881 = vmatprep.mubr.bf16.mxu0 %v995
      %1882 = vmatmul.mubr.bf16.gmra.mxu0 %v994
      %v1883 = vpop.f32.mrf.mxu0
      %v1884 = vadd.f32 %v1595, %v1883
      %v1885 = vpop.f32.mrf.mxu0
      %v1886 = vpop.f32.mrf.mxu0
      %v1887 = vadd.f32 %v1598, %v1886
      %v1888 = vpop.f32.mrf.mxu0
      %1889 = vmatprep.mubr.bf16.mxu0 %v999
      %1890 = vmatmul.mubr.bf16.gmra.mxu0 %v998
      %v1891 = vpop.f32.mrf.mxu0
      %v1892 = vadd.f32 %v1603, %v1891
      %v1893 = vpop.f32.mrf.mxu0
      %v1894 = vpop.f32.mrf.mxu0
      %v1895 = vadd.f32 %v1606, %v1894
      %v1896 = vpop.f32.mrf.mxu0
      %1897 = vdwg.mxu0
      %vm1898 = vcmp.ge.f32.partialorder %v1644, 0.0
      %vm1899 = vcmp.ge.f32.partialorder %v1647, 0.0
      %vm1900 = vcmp.ge.f32.partialorder %v1652, 0.0
      %vm1901 = vcmp.ge.f32.partialorder %v1655, 0.0
      %vm1902 = vcmp.ge.f32.partialorder %v1660, 0.0
      %vm1903 = vcmp.ge.f32.partialorder %v1663, 0.0
      %vm1904 = vcmp.ge.f32.partialorder %v1668, 0.0
      %vm1905 = vcmp.ge.f32.partialorder %v1671, 0.0
      %vm1906 = vcmp.ge.f32.partialorder %v1676, 0.0
      %vm1907 = vcmp.ge.f32.partialorder %v1679, 0.0
      %vm1908 = vcmp.ge.f32.partialorder %v1684, 0.0
      %vm1909 = vcmp.ge.f32.partialorder %v1687, 0.0
      %vm1910 = vcmp.ge.f32.partialorder %v1692, 0.0
      %vm1911 = vcmp.ge.f32.partialorder %v1695, 0.0
      %vm1912 = vcmp.ge.f32.partialorder %v1700, 0.0
      %vm1913 = vcmp.ge.f32.partialorder %v1703, 0.0
      %vm1914 = vcmp.ge.f32.partialorder %v1708, 0.0
      %vm1915 = vcmp.ge.f32.partialorder %v1711, 0.0
      %vm1916 = vcmp.ge.f32.partialorder %v1716, 0.0
      %vm1917 = vcmp.ge.f32.partialorder %v1719, 0.0
      %vm1918 = vcmp.ge.f32.partialorder %v1724, 0.0
      %vm1919 = vcmp.ge.f32.partialorder %v1727, 0.0
      %vm1920 = vcmp.ge.f32.partialorder %v1732, 0.0
      %vm1921 = vcmp.ge.f32.partialorder %v1735, 0.0
      %vm1922 = vcmp.ge.f32.partialorder %v1740, 0.0
      %vm1923 = vcmp.ge.f32.partialorder %v1743, 0.0
      %vm1924 = vcmp.ge.f32.partialorder %v1748, 0.0
      %vm1925 = vcmp.ge.f32.partialorder %v1751, 0.0
      %vm1926 = vcmp.ge.f32.partialorder %v1756, 0.0
      %vm1927 = vcmp.ge.f32.partialorder %v1759, 0.0
      %vm1928 = vcmp.ge.f32.partialorder %v1764, 0.0
      %vm1929 = vcmp.ge.f32.partialorder %v1767, 0.0
      %vm1930 = vcmp.ge.f32.partialorder %v1772, 0.0
      %vm1931 = vcmp.ge.f32.partialorder %v1775, 0.0
      %vm1932 = vcmp.ge.f32.partialorder %v1780, 0.0
      %vm1933 = vcmp.ge.f32.partialorder %v1783, 0.0
      %vm1934 = vcmp.ge.f32.partialorder %v1788, 0.0
      %vm1935 = vcmp.ge.f32.partialorder %v1791, 0.0
      %vm1936 = vcmp.ge.f32.partialorder %v1796, 0.0
      %vm1937 = vcmp.ge.f32.partialorder %v1799, 0.0
      %vm1938 = vcmp.ge.f32.partialorder %v1804, 0.0
      %vm1939 = vcmp.ge.f32.partialorder %v1807, 0.0
      %vm1940 = vcmp.ge.f32.partialorder %v1812, 0.0
      %vm1941 = vcmp.ge.f32.partialorder %v1815, 0.0
      %vm1942 = vcmp.ge.f32.partialorder %v1820, 0.0
      %vm1943 = vcmp.ge.f32.partialorder %v1823, 0.0
      %vm1944 = vcmp.ge.f32.partialorder %v1828, 0.0
      %vm1945 = vcmp.ge.f32.partialorder %v1831, 0.0
      %vm1946 = vcmp.ge.f32.partialorder %v1836, 0.0
      %vm1947 = vcmp.ge.f32.partialorder %v1839, 0.0
      %vm1948 = vcmp.ge.f32.partialorder %v1844, 0.0
      %vm1949 = vcmp.ge.f32.partialorder %v1847, 0.0
      %vm1950 = vcmp.ge.f32.partialorder %v1852, 0.0
      %vm1951 = vcmp.ge.f32.partialorder %v1855, 0.0
      %vm1952 = vcmp.ge.f32.partialorder %v1860, 0.0
      %vm1953 = vcmp.ge.f32.partialorder %v1863, 0.0
      %vm1954 = vcmp.ge.f32.partialorder %v1868, 0.0
      %vm1955 = vcmp.ge.f32.partialorder %v1871, 0.0
      %vm1956 = vcmp.ge.f32.partialorder %v1876, 0.0
      %vm1957 = vcmp.ge.f32.partialorder %v1879, 0.0
      %vm1958 = vcmp.ge.f32.partialorder %v1884, 0.0
      %vm1959 = vcmp.ge.f32.partialorder %v1887, 0.0
      %vm1960 = vcmp.ge.f32.partialorder %v1892, 0.0
      %vm1961 = vcmp.ge.f32.partialorder %v1895, 0.0
      %v1962 = vld [vmem:[%s277] sm:$0x1]
      %v1964 = vlaneseq
      %v1965 = vshrl.u32 %v1964, 7
      %v1966 = vsub.s32 0, %v1965
      %v1967 = vrot.slane %v1962, %v1966
      %v1969 = vmul.f32 %v1644, %v1967
      %v1970 = vmul.f32 %v1647, %v1967
      %v1971 = vmul.f32 %v1652, %v1967
      %v1972 = vmul.f32 %v1655, %v1967
      %v1973 = vmul.f32 %v1660, %v1967
      %v1974 = vmul.f32 %v1663, %v1967
      %v1975 = vmul.f32 %v1668, %v1967
      %v1976 = vmul.f32 %v1671, %v1967
      %v1977 = vmul.f32 %v1676, %v1967
      %v1978 = vmul.f32 %v1679, %v1967
      %v1979 = vmul.f32 %v1684, %v1967
      %v1980 = vmul.f32 %v1687, %v1967
      %v1981 = vmul.f32 %v1692, %v1967
      %v1982 = vmul.f32 %v1695, %v1967
      %v1983 = vmul.f32 %v1700, %v1967
      %v1984 = vmul.f32 %v1703, %v1967
      %v1985 = vmul.f32 %v1708, %v1967
      %v1986 = vmul.f32 %v1711, %v1967
      %v1987 = vmul.f32 %v1716, %v1967
      %v1988 = vmul.f32 %v1719, %v1967
      %v1989 = vmul.f32 %v1724, %v1967
      %v1990 = vmul.f32 %v1727, %v1967
      %v1991 = vmul.f32 %v1732, %v1967
      %v1992 = vmul.f32 %v1735, %v1967
      %v1993 = vmul.f32 %v1740, %v1967
      %v1994 = vmul.f32 %v1743, %v1967
      %v1995 = vmul.f32 %v1748, %v1967
      %v1996 = vmul.f32 %v1751, %v1967
      %v1997 = vmul.f32 %v1756, %v1967
      %v1998 = vmul.f32 %v1759, %v1967
      %v1999 = vmul.f32 %v1764, %v1967
      %v2000 = vmul.f32 %v1767, %v1967
      %v2001 = vmul.f32 %v1772, %v1967
      %v2002 = vmul.f32 %v1775, %v1967
      %v2003 = vmul.f32 %v1780, %v1967
      %v2004 = vmul.f32 %v1783, %v1967
      %v2005 = vmul.f32 %v1788, %v1967
      %v2006 = vmul.f32 %v1791, %v1967
      %v2007 = vmul.f32 %v1796, %v1967
      %v2008 = vmul.f32 %v1799, %v1967
      %v2009 = vmul.f32 %v1804, %v1967
      %v2010 = vmul.f32 %v1807, %v1967
      %v2011 = vmul.f32 %v1812, %v1967
      %v2012 = vmul.f32 %v1815, %v1967
      %v2013 = vmul.f32 %v1820, %v1967
      %v2014 = vmul.f32 %v1823, %v1967
      %v2015 = vmul.f32 %v1828, %v1967
      %v2016 = vmul.f32 %v1831, %v1967
      %v2017 = vmul.f32 %v1836, %v1967
      %v2018 = vmul.f32 %v1839, %v1967
      %v2019 = vmul.f32 %v1844, %v1967
      %v2020 = vmul.f32 %v1847, %v1967
      %v2021 = vmul.f32 %v1852, %v1967
      %v2022 = vmul.f32 %v1855, %v1967
      %v2023 = vmul.f32 %v1860, %v1967
      %v2024 = vmul.f32 %v1863, %v1967
      %v2025 = vmul.f32 %v1868, %v1967
      %v2026 = vmul.f32 %v1871, %v1967
      %v2027 = vmul.f32 %v1876, %v1967
      %v2028 = vmul.f32 %v1879, %v1967
      %v2029 = vmul.f32 %v1884, %v1967
      %v2030 = vmul.f32 %v1887, %v1967
      %v2031 = vmul.f32 %v1892, %v1967
      %v2032 = vmul.f32 %v1895, %v1967
      %v2033 = vsel %vm1898, %v1644, %v1969
      %v2034 = vsel %vm1899, %v1647, %v1970
      %v2035 = vsel %vm1900, %v1652, %v1971
      %v2036 = vsel %vm1901, %v1655, %v1972
      %v2037 = vsel %vm1902, %v1660, %v1973
      %v2038 = vsel %vm1903, %v1663, %v1974
      %v2039 = vsel %vm1904, %v1668, %v1975
      %v2040 = vsel %vm1905, %v1671, %v1976
      %v2041 = vsel %vm1906, %v1676, %v1977
      %v2042 = vsel %vm1907, %v1679, %v1978
      %v2043 = vsel %vm1908, %v1684, %v1979
      %v2044 = vsel %vm1909, %v1687, %v1980
      %v2045 = vsel %vm1910, %v1692, %v1981
      %v2046 = vsel %vm1911, %v1695, %v1982
      %v2047 = vsel %vm1912, %v1700, %v1983
      %v2048 = vsel %vm1913, %v1703, %v1984
      %v2049 = vsel %vm1914, %v1708, %v1985
      %v2050 = vsel %vm1915, %v1711, %v1986
      %v2051 = vsel %vm1916, %v1716, %v1987
      %v2052 = vsel %vm1917, %v1719, %v1988
      %v2053 = vsel %vm1918, %v1724, %v1989
      %v2054 = vsel %vm1919, %v1727, %v1990
      %v2055 = vsel %vm1920, %v1732, %v1991
      %v2056 = vsel %vm1921, %v1735, %v1992
      %v2057 = vsel %vm1922, %v1740, %v1993
      %v2058 = vsel %vm1923, %v1743, %v1994
      %v2059 = vsel %vm1924, %v1748, %v1995
      %v2060 = vsel %vm1925, %v1751, %v1996
      %v2061 = vsel %vm1926, %v1756, %v1997
      %v2062 = vsel %vm1927, %v1759, %v1998
      %v2063 = vsel %vm1928, %v1764, %v1999
      %v2064 = vsel %vm1929, %v1767, %v2000
      %v2065 = vsel %vm1930, %v1772, %v2001
      %v2066 = vsel %vm1931, %v1775, %v2002
      %v2067 = vsel %vm1932, %v1780, %v2003
      %v2068 = vsel %vm1933, %v1783, %v2004
      %v2069 = vsel %vm1934, %v1788, %v2005
      %v2070 = vsel %vm1935, %v1791, %v2006
      %v2071 = vsel %vm1936, %v1796, %v2007
      %v2072 = vsel %vm1937, %v1799, %v2008
      %v2073 = vsel %vm1938, %v1804, %v2009
      %v2074 = vsel %vm1939, %v1807, %v2010
      %v2075 = vsel %vm1940, %v1812, %v2011
      %v2076 = vsel %vm1941, %v1815, %v2012
      %v2077 = vsel %vm1942, %v1820, %v2013
      %v2078 = vsel %vm1943, %v1823, %v2014
      %v2079 = vsel %vm1944, %v1828, %v2015
      %v2080 = vsel %vm1945, %v1831, %v2016
      %v2081 = vsel %vm1946, %v1836, %v2017
      %v2082 = vsel %vm1947, %v1839, %v2018
      %v2083 = vsel %vm1948, %v1844, %v2019
      %v2084 = vsel %vm1949, %v1847, %v2020
      %v2085 = vsel %vm1950, %v1852, %v2021
      %v2086 = vsel %vm1951, %v1855, %v2022
      %v2087 = vsel %vm1952, %v1860, %v2023
      %v2088 = vsel %vm1953, %v1863, %v2024
      %v2089 = vsel %vm1954, %v1868, %v2025
      %v2090 = vsel %vm1955, %v1871, %v2026
      %v2091 = vsel %vm1956, %v1876, %v2027
      %v2092 = vsel %vm1957, %v1879, %v2028
      %v2093 = vsel %vm1958, %v1884, %v2029
      %v2094 = vsel %vm1959, %v1887, %v2030
      %v2095 = vsel %vm1960, %v1892, %v2031
      %v2096 = vsel %vm1961, %v1895, %v2032
      %2097 = vst [vmem:[%s286] sm:$0xff] %v2033
      %2098 = vst [vmem:[%s286 + $0x8] sm:$0xff] %v2034
      %2099 = vst [vmem:[%s286 + $0x10] sm:$0xff] %v2035
      %2100 = vst [vmem:[%s286 + $0x18] sm:$0xff] %v2036
      %2101 = vst [vmem:[%s286 + $0x20] sm:$0xff] %v2037
      %2102 = vst [vmem:[%s286 + $0x28] sm:$0xff] %v2038
      %2103 = vst [vmem:[%s286 + $0x30] sm:$0xff] %v2039
      %2104 = vst [vmem:[%s286 + $0x38] sm:$0xff] %v2040
      %2105 = vst [vmem:[%s286 + $0x40] sm:$0xff] %v2041
      %2106 = vst [vmem:[%s286 + $0x48] sm:$0xff] %v2042
      %2107 = vst [vmem:[%s286 + $0x50] sm:$0xff] %v2043
      %2108 = vst [vmem:[%s286 + $0x58] sm:$0xff] %v2044
      %2109 = vst [vmem:[%s286 + $0x60] sm:$0xff] %v2045
      %2110 = vst [vmem:[%s286 + $0x68] sm:$0xff] %v2046
      %2111 = vst [vmem:[%s286 + $0x70] sm:$0xff] %v2047
      %2112 = vst [vmem:[%s286 + $0x78] sm:$0xff] %v2048
      %2113 = vst [vmem:[%s286 + $0x80] sm:$0xff] %v2049
      %2114 = vst [vmem:[%s286 + $0x88] sm:$0xff] %v2050
      %2115 = vst [vmem:[%s286 + $0x90] sm:$0xff] %v2051
      %2116 = vst [vmem:[%s286 + $0x98] sm:$0xff] %v2052
      %2117 = vst [vmem:[%s286 + $0xa0] sm:$0xff] %v2053
      %2118 = vst [vmem:[%s286 + $0xa8] sm:$0xff] %v2054
      %2119 = vst [vmem:[%s286 + $0xb0] sm:$0xff] %v2055
      %2120 = vst [vmem:[%s286 + $0xb8] sm:$0xff] %v2056
      %2121 = vst [vmem:[%s286 + $0xc0] sm:$0xff] %v2057
      %2122 = vst [vmem:[%s286 + $0xc8] sm:$0xff] %v2058
      %2123 = vst [vmem:[%s286 + $0xd0] sm:$0xff] %v2059
      %2124 = vst [vmem:[%s286 + $0xd8] sm:$0xff] %v2060
      %2125 = vst [vmem:[%s286 + $0xe0] sm:$0xff] %v2061
      %2126 = vst [vmem:[%s286 + $0xe8] sm:$0xff] %v2062
      %2127 = vst [vmem:[%s286 + $0xf0] sm:$0xff] %v2063
      %2128 = vst [vmem:[%s286 + $0xf8] sm:$0xff] %v2064
      %2129 = vst [vmem:[%s286 + $0x100] sm:$0xff] %v2065
      %2130 = vst [vmem:[%s286 + $0x108] sm:$0xff] %v2066
      %2131 = vst [vmem:[%s286 + $0x110] sm:$0xff] %v2067
      %2132 = vst [vmem:[%s286 + $0x118] sm:$0xff] %v2068
      %2133 = vst [vmem:[%s286 + $0x120] sm:$0xff] %v2069
      %2134 = vst [vmem:[%s286 + $0x128] sm:$0xff] %v2070
      %2135 = vst [vmem:[%s286 + $0x130] sm:$0xff] %v2071
      %2136 = vst [vmem:[%s286 + $0x138] sm:$0xff] %v2072
      %2137 = vst [vmem:[%s286 + $0x140] sm:$0xff] %v2073
      %2138 = vst [vmem:[%s286 + $0x148] sm:$0xff] %v2074
      %2139 = vst [vmem:[%s286 + $0x150] sm:$0xff] %v2075
      %2140 = vst [vmem:[%s286 + $0x158] sm:$0xff] %v2076
      %2141 = vst [vmem:[%s286 + $0x160] sm:$0xff] %v2077
      %2142 = vst [vmem:[%s286 + $0x168] sm:$0xff] %v2078
      %2143 = vst [vmem:[%s286 + $0x170] sm:$0xff] %v2079
      %2144 = vst [vmem:[%s286 + $0x178] sm:$0xff] %v2080
      %2145 = vst [vmem:[%s286 + $0x180] sm:$0xff] %v2081
      %2146 = vst [vmem:[%s286 + $0x188] sm:$0xff] %v2082
      %2147 = vst [vmem:[%s286 + $0x190] sm:$0xff] %v2083
      %2148 = vst [vmem:[%s286 + $0x198] sm:$0xff] %v2084
      %2149 = vst [vmem:[%s286 + $0x1a0] sm:$0xff] %v2085
      %2150 = vst [vmem:[%s286 + $0x1a8] sm:$0xff] %v2086
      %2151 = vst [vmem:[%s286 + $0x1b0] sm:$0xff] %v2087
      %2152 = vst [vmem:[%s286 + $0x1b8] sm:$0xff] %v2088
      %2153 = vst [vmem:[%s286 + $0x1c0] sm:$0xff] %v2089
      %2154 = vst [vmem:[%s286 + $0x1c8] sm:$0xff] %v2090
      %2155 = vst [vmem:[%s286 + $0x1d0] sm:$0xff] %v2091
      %2156 = vst [vmem:[%s286 + $0x1d8] sm:$0xff] %v2092
      %2157 = vst [vmem:[%s286 + $0x1e0] sm:$0xff] %v2093
      %2158 = vst [vmem:[%s286 + $0x1e8] sm:$0xff] %v2094
      %2159 = vst [vmem:[%s286 + $0x1f0] sm:$0xff] %v2095
      %2160 = vst [vmem:[%s286 + $0x1f8] sm:$0xff] %v2096
      %s2161 = smul.u32 64, %s20
      %p2162 = scmp.lt.s32.totalorder %s19, 2
      %s2163 = scalar_select %p2162, %s19, 2
      %p2164 = scmp.lt.s32.totalorder %s2161, 255
      %s2165 = scalar_select %p2164, %s2161, 255
      %s2166 = smul.addr %s2163, 256
      %s2167 = sadd.s32 %s2165, %s2166
      %s2168 = smul.addr %s2167, 8
      %s2169 = scalar_lea.vmem %s4, %s2168
      // Predicated region
      $region37: #{classsr_forward.15} parent=35 // pred_check
        %p2170 = pneg %p153
      $region38: #{classsr_forward.15} parent=35 // pred_check_branch
        %2172 = sbr.rel (%p2170) target = $region40
      $region39: #{classsr_forward.15} parent=35 // pred_region
        %s2173 = smul.u32 64, %s20
      $region40: #{classsr_forward.15} parent=35 // pred_fallthru
        _
    $region36: #{classsr_forward.15} parent=5 // pred_fallthru
      _
    %p2174 = scmp.le.s32.totalorder 2, %s10
    // Predicated region
    $region41: #{classsr_forward.15} parent=5 // pred_check
      %p2175 = pneg %p2174
    $region42: #{classsr_forward.15} parent=5 // pred_check_branch
      %2177 = sbr.rel (%p2175) target = $region44
    $region43: #{classsr_forward.15} parent=5 // pred_region
      %s2178 = ssub.s32 %s10, 2
      // Predicated region
      $region45: #{classsr_forward.15} parent=43 // pred_check
        %p2179 = pneg %p159
      $region46: #{classsr_forward.15} parent=43 // pred_check_branch
        %2181 = sbr.rel (%p2179) target = $region48
      $region47: #{classsr_forward.15} parent=43 // pred_region
        %s2182 = smul.u32 64, %s22
        %p2183 = scmp.lt.s32.totalorder %s21, 2
        %s2184 = scalar_select %p2183, %s21, 2
        %p2185 = scmp.lt.s32.totalorder %s2182, 255
        %s2186 = scalar_select %p2185, %s2182, 255
        %s2187 = smul.addr %s2184, 256
        %s2188 = sadd.s32 %s2186, %s2187
        %s2189 = smul.addr %s2188, 8
        %s2190 = scalar_lea.vmem %s4, %s2189
      $region48: #{classsr_forward.15} parent=43 // pred_fallthru
        _
    $region44: #{classsr_forward.15} parent=5 // pred_fallthru
      _
  $region6: #{classsr_forward.15} parent=0 // loop_footer
    %s14 = sadd.s32 1, %s10
  $region7: #{classsr_forward.15} parent=0 // loop_footer_branch
    %9 = sbr.rel target = $region3
  $region8: #{classsr_forward.15} parent=0 // loop_exit
    _

</llo_original>
